<compile_context>
chip_gen: v5e
topology: v5e:2x2
jax: 0.10.0
libtpu: 0.0.40
codegen_flags: <defaults>
</compile_context>

<pallas_src>
import functools

import jax
import jax.numpy as jnp
from jax.experimental import pallas as pl
from jax.experimental.pallas import tpu as pltpu

# Safe on every generation (v5e/v6e: 128 MiB physical, v7x: 64 MiB physical / 32 MiB default scoped).
_VMEM_LIMIT_BYTES = 32 * 1024 * 1024


def _compiler_params(n_parallel_axes):
    return pltpu.CompilerParams(
        dimension_semantics=("parallel",) * n_parallel_axes,
        vmem_limit_bytes=_VMEM_LIMIT_BYTES,
    )


# --------------------------------------------------------------------------- #
# Stage 1: conv1 (3x3, stride s, pad 1) + downsample (1x1, stride s), fused.   #
# --------------------------------------------------------------------------- #

def _conv1_ds_kernel(*refs, stride, Ho, Wo, Cout, nphases):
    """Per-image fused conv1 + 1x1-downsample + BN partial stats.

    The 3x3 conv is a shift-and-accumulate over the 9 taps. The wrapper's phase
    (space-to-depth) split makes every tap a unit-stride static window of one
    phase ref — no strided loads, no im2col.
    """
    phase_refs = refs[:nphases]
    w1_ref, wd_ref = refs[nphases], refs[nphases + 1]
    z1_ref, zd_ref, st_ref = refs[nphases + 2], refs[nphases + 3], refs[nphases + 4]

    acc = jnp.zeros((Ho * Wo, Cout), jnp.float32)
    zd = None
    for dy in range(3):
        for dx in range(3):
            ph = phase_refs[(dy % stride) * stride + (dx % stride)]
            qy, qx = dy // stride, dx // stride
            patch = ph[qy:qy + Ho, qx:qx + Wo, :]                    # (Ho, Wo, Cin) f32
            a2d = patch.reshape(Ho * Wo, patch.shape[-1]).astype(jnp.bfloat16)
            acc = acc + jnp.dot(a2d, w1_ref[dy * 3 + dx],
                                preferred_element_type=jnp.float32)
            if dy == 1 and dx == 1:
                # The stride-s 1x1 downsample conv reads exactly the center-tap pixels,
                # so it rides on the same (already-loaded) A operand.
                zd = jnp.dot(a2d, wd_ref[...], preferred_element_type=jnp.float32)

    z1_ref[...] = acc
    zd_ref[...] = zd
    # Per-image BN partial stats (8-sublane-padded output); reduced across the grid in XLA.
    st_ref[0:1, :] = jnp.sum(acc, axis=0, keepdims=True)
    st_ref[1:2, :] = jnp.sum(acc * acc, axis=0, keepdims=True)
    st_ref[2:3, :] = jnp.sum(zd, axis=0, keepdims=True)
    st_ref[3:4, :] = jnp.sum(zd * zd, axis=0, keepdims=True)
    st_ref[4:8, :] = jnp.zeros((4, Cout), jnp.float32)


def conv1_downsample(x_nhwc, w1_taps, wd_mat, stride):
    N, H, W, _ = x_nhwc.shape
    Cout = w1_taps.shape[-1]
    Ho = (H - 1) // stride + 1
    Wo = (W - 1) // stride + 1

    xp = jnp.pad(x_nhwc, ((0, 0), (1, 1), (1, 1), (0, 0)))
    # Stride handled in XLA with zero data blowup (total bytes of all phases == |xp|):
    # the kernel then only ever needs unit-stride windows.
    phases = [xp[:, py::stride, px::stride, :]
              for py in range(stride) for px in range(stride)]

    in_specs = [pl.BlockSpec((None,) + tuple(ph.shape[1:]), lambda n: (n, 0, 0, 0))
                for ph in phases]
    in_specs += [pl.BlockSpec(tuple(w1_taps.shape), lambda n: (0, 0, 0)),
                 pl.BlockSpec(tuple(wd_mat.shape), lambda n: (0, 0))]
    out_specs = (pl.BlockSpec((None, Ho * Wo, Cout), lambda n: (n, 0, 0)),
                 pl.BlockSpec((None, Ho * Wo, Cout), lambda n: (n, 0, 0)),
                 pl.BlockSpec((None, 8, Cout), lambda n: (n, 0, 0)))
    out_shape = (jax.ShapeDtypeStruct((N, Ho * Wo, Cout), jnp.float32),
                 jax.ShapeDtypeStruct((N, Ho * Wo, Cout), jnp.float32),
                 jax.ShapeDtypeStruct((N, 8, Cout), jnp.float32))

    kern = functools.partial(_conv1_ds_kernel, stride=stride, Ho=Ho, Wo=Wo,
                             Cout=Cout, nphases=len(phases))
    z1, zd, st = pl.pallas_call(
        kern,
        grid=(N,),
        in_specs=in_specs,
        out_specs=out_specs,
        out_shape=out_shape,
        compiler_params=_compiler_params(1),
    )(*phases, w1_taps, wd_mat)
    return z1, zd, jnp.sum(st, axis=0)          # (8, Cout) global sums


# --------------------------------------------------------------------------- #
# Stage 2: bn1 + ReLU fused into conv2 (3x3, stride 1, pad 1).                 #
# --------------------------------------------------------------------------- #

def _conv2_fused_kernel(z1_ref, s1_ref, b1_ref, w2_ref, z2_ref, st_ref, a1p_ref,
                        *, Ho, Wo, Cout):
    """bn1-affine + ReLU applied on the fly, padded activation staged in VMEM,
    then a 9-tap shift-and-accumulate conv2 — the bn1 output never touches HBM."""
    s1 = s1_ref[...].reshape(1, 1, Cout)
    b1 = b1_ref[...].reshape(1, 1, Cout)
    a1 = jnp.maximum(z1_ref[...] * s1 + b1, 0.0)                     # (Ho, Wo, Cout) f32

    # Zero border every step (do NOT gate on program_id: the grid axis is parallel,
    # each core has its own scratch instance).
    a1p_ref[...] = jnp.zeros((Ho + 2, Wo + 2, Cout), jnp.float32)
    a1p_ref[1:Ho + 1, 1:Wo + 1, :] = a1

    acc = jnp.zeros((Ho * Wo, Cout), jnp.float32)
    for dy in range(3):
        for dx in range(3):
            patch = a1p_ref[dy:dy + Ho, dx:dx + Wo, :]
            a2d = patch.reshape(Ho * Wo, Cout).astype(jnp.bfloat16)
            acc = acc + jnp.dot(a2d, w2_ref[dy * 3 + dx],
                                preferred_element_type=jnp.float32)

    z2_ref[...] = acc
    st_ref[0:1, :] = jnp.sum(acc, axis=0, keepdims=True)
    st_ref[1:2, :] = jnp.sum(acc * acc, axis=0, keepdims=True)
    st_ref[2:8, :] = jnp.zeros((6, Cout), jnp.float32)


def conv2_bn1_fused(z1_sp, s1, b1, w2_taps):
    N, Ho, Wo, Cout = z1_sp.shape
    in_specs = [pl.BlockSpec((None, Ho, Wo, Cout), lambda n: (n, 0, 0, 0)),
                pl.BlockSpec((1, Cout), lambda n: (0, 0)),
                pl.BlockSpec((1, Cout), lambda n: (0, 0)),
                pl.BlockSpec(tuple(w2_taps.shape), lambda n: (0, 0, 0))]
    out_specs = (pl.BlockSpec((None, Ho * Wo, Cout), lambda n: (n, 0, 0)),
                 pl.BlockSpec((None, 8, Cout), lambda n: (n, 0, 0)))
    out_shape = (jax.ShapeDtypeStruct((N, Ho * Wo, Cout), jnp.float32),
                 jax.ShapeDtypeStruct((N, 8, Cout), jnp.float32))

    kern = functools.partial(_conv2_fused_kernel, Ho=Ho, Wo=Wo, Cout=Cout)
    z2, st = pl.pallas_call(
        kern,
        grid=(N,),
        in_specs=in_specs,
        out_specs=out_specs,
        out_shape=out_shape,
        scratch_shapes=[pltpu.VMEM((Ho + 2, Wo + 2, Cout), jnp.float32)],
        compiler_params=_compiler_params(1),
    )(z1_sp, s1, b1, w2_taps)
    return z2, jnp.sum(st, axis=0)


# --------------------------------------------------------------------------- #
# Stage 3: bn2 + ReLU, downsample-BN, residual add, final ReLU — one pass.     #
# --------------------------------------------------------------------------- #

def _residual_kernel(z2_ref, zd_ref, s2_ref, b2_ref, sd_ref, bd_ref, o_ref):
    out = jnp.maximum(z2_ref[...] * s2_ref[...] + b2_ref[...], 0.0)
    ident = zd_ref[...] * sd_ref[...] + bd_ref[...]
    o_ref[...] = jnp.maximum(out + ident, 0.0)


def _pick_row_tile(m):
    for t in (1024, 512, 256, 128, 64, 32, 16, 8):
        if m % t == 0:
            return t
    return m


def residual_fused(z2, zd, s2, b2, sd, bd):
    M, C = z2.shape
    tm = _pick_row_tile(M)
    row = pl.BlockSpec((tm, C), lambda i: (i, 0))
    vec = pl.BlockSpec((1, C), lambda i: (0, 0))
    return pl.pallas_call(
        _residual_kernel,
        grid=(M // tm,),
        in_specs=[row, row, vec, vec, vec, vec],
        out_specs=row,
        out_shape=jax.ShapeDtypeStruct((M, C), jnp.float32),
        compiler_params=_compiler_params(1),
    )(z2, zd, s2, b2, sd, bd)


# ------------------------------- JAX glue ---------------------------------- #

def _fold_bn(ssum, ssq, gamma, beta, count, eps=1e-5):
    # Training-mode BatchNorm: batch mean, biased variance, folded into per-channel scale/bias.
    mean = ssum / count
    var = ssq / count - mean * mean
    scale = gamma * jax.lax.rsqrt(var + eps)
    bias = beta - mean * scale
    return scale.reshape(1, -1), bias.reshape(1, -1)


def res_block_forward(x_nchw, p, stride):
    x = jnp.transpose(x_nchw, (0, 2, 3, 1))          # NHWC: channels sit on TPU lanes
    N, H, W, Cin = x.shape
    Cout = p["w1"].shape[0]
    Ho = (H - 1) // stride + 1
    Wo = (W - 1) // stride + 1
    M = N * Ho * Wo

    # Per-tap weight matrices, bf16 for the MXU (f32 accumulation in-kernel).
    w1_taps = jnp.transpose(p["w1"], (2, 3, 1, 0)).reshape(9, Cin, Cout).astype(jnp.bfloat16)
    w2_taps = jnp.transpose(p["w2"], (2, 3, 1, 0)).reshape(9, Cout, Cout).astype(jnp.bfloat16)
    wd_mat = jnp.transpose(p["wd"], (2, 3, 1, 0)).reshape(Cin, Cout).astype(jnp.bfloat16)
    # Conv biases are intentionally dropped: training-mode BN right after each conv cancels a
    # per-channel constant shift exactly.

    # Stage 1: conv1(3x3/s) fused with downsample(1x1/s), per-image grid, partial BN stats.
    z1, zd, st1 = conv1_downsample(x, w1_taps, wd_mat, stride)
    s1, b1 = _fold_bn(st1[0], st1[1], p["g1"], p["be1"], M)
    s_d, b_d = _fold_bn(st1[2], st1[3], p["gd"], p["bed"], M)

    # Stage 2: bn1+ReLU fused into conv2(3x3/1), partial BN stats.
    z2, st2 = conv2_bn1_fused(z1.reshape(N, Ho, Wo, Cout), s1, b1, w2_taps)
    s2, b2 = _fold_bn(st2[0], st2[1], p["g2"], p["be2"], M)

    # Stage 3: bn2+ReLU + downsample-BN + residual add + ReLU, row-tiled.
    out = residual_fused(z2.reshape(M, Cout), zd.reshape(M, Cout), s2, b2, s_d, b_d)
    return jnp.transpose(out.reshape(N, Ho, Wo, Cout), (0, 3, 1, 2))   # back to NCHW


# ------------------------ deterministic parameters -------------------------- #

def init_params(key, cin, cout):
    ks = jax.random.split(key, 12)
    return {
        "w1": 0.1 * jax.random.normal(ks[0], (cout, cin, 3, 3), jnp.float32),
        "b1": 0.1 * jax.random.normal(ks[1], (cout,), jnp.float32),
        "w2": 0.1 * jax.random.normal(ks[2], (cout, cout, 3, 3), jnp.float32),
        "b2": 0.1 * jax.random.normal(ks[3], (cout,), jnp.float32),
        "wd": 0.1 * jax.random.normal(ks[4], (cout, cin, 1, 1), jnp.float32),
        "bd": 0.1 * jax.random.normal(ks[5], (cout,), jnp.float32),
        "g1": 1.0 + 0.1 * jax.random.normal(ks[6], (cout,), jnp.float32),
        "be1": 0.1 * jax.random.normal(ks[7], (cout,), jnp.float32),
        "g2": 1.0 + 0.1 * jax.random.normal(ks[8], (cout,), jnp.float32),
        "be2": 0.1 * jax.random.normal(ks[9], (cout,), jnp.float32),
        "gd": 1.0 + 0.1 * jax.random.normal(ks[10], (cout,), jnp.float32),
        "bed": 0.1 * jax.random.normal(ks[11], (cout,), jnp.float32),
    }


# ------------------------------ reference ----------------------------------- #

def reference_forward(x, p, stride, eps=1e-5):
    # Same matmul precision as the kernels: bf16 conv inputs, f32 accumulation; BN/elementwise in f32.
    def conv(x, w, b, s, pad):
        y = jax.lax.conv_general_dilated(
            x.astype(jnp.bfloat16), w.astype(jnp.bfloat16), (s, s),
            [(pad, pad), (pad, pad)],
            dimension_numbers=("NCHW", "OIHW", "NCHW"),
            preferred_element_type=jnp.float32)
        return y + b.reshape(1, -1, 1, 1)

    def bn(z, g, be):
        mean = jnp.mean(z, axis=(0, 2, 3), keepdims=True)
        var = jnp.var(z, axis=(0, 2, 3), keepdims=True)   # biased, training mode
        return (z - mean) * jax.lax.rsqrt(var + eps) * g.reshape(1, -1, 1, 1) \
            + be.reshape(1, -1, 1, 1)

    out = jnp.maximum(bn(conv(x, p["w1"], p["b1"], stride, 1), p["g1"], p["be1"]), 0.0)
    out = jnp.maximum(bn(conv(out, p["w2"], p["b2"], 1, 1), p["g2"], p["be2"]), 0.0)
    ident = bn(conv(x, p["wd"], p["bd"], stride, 0), p["gd"], p["bed"])
    return jnp.maximum(out + ident, 0.0)


if __name__ == "__main__":
    key = jax.random.PRNGKey(0)
    kx, kp = jax.random.split(key)

    N, Cin, H, W = 2, 4, 16, 16
    Cout, stride = 8, 2

    x = jax.random.normal(kx, (N, Cin, H, W), jnp.float32)
    params = init_params(kp, Cin, Cout)

    fwd = jax.jit(res_block_forward, static_argnums=(2,))
    y = jax.block_until_ready(fwd(x, params, stride))

    ref = reference_forward(x, params, stride)
    assert y.shape == (N, Cout, H // stride, W // stride), y.shape
    max_err = float(jnp.max(jnp.abs(y - ref)))
    # Tolerance accounts for bf16 MXU inputs + summation-order differences vs the XLA conv.
    if max_err < 2e-2:
        print("KERNEL_OK")
    else:
        print(f"MISMATCH max_abs_err={max_err}")
</pallas_src>

<mosaic_0001>
module attributes {stable_mosaic.version = 11 : i64} {
  func.func @_conv1_ds_kernel(%arg0: i32, %arg1: memref<1x9x9x4xf32, #tpu.memory_space<vmem>>, %arg2: memref<1x9x9x4xf32, #tpu.memory_space<vmem>>, %arg3: memref<1x9x9x4xf32, #tpu.memory_space<vmem>>, %arg4: memref<1x9x9x4xf32, #tpu.memory_space<vmem>>, %arg5: memref<9x4x8xbf16, #tpu.memory_space<vmem>>, %arg6: memref<4x8xbf16, #tpu.memory_space<vmem>>, %arg7: memref<1x64x8xf32, #tpu.memory_space<vmem>>, %arg8: memref<1x64x8xf32, #tpu.memory_space<vmem>>, %arg9: memref<1x8x8xf32, #tpu.memory_space<vmem>>) attributes {dimension_semantics = [#tpu.dimension_semantics<parallel>], iteration_bounds = array<i64: 2>, scalar_prefetch = 0 : i64, scratch_operands = 0 : i64, tpu.core_type = #tpu.core_type<tc>, window_params = [{transform_indices = @transform_0, window_bounds = array<i64: 1, 9, 9, 4>}, {transform_indices = @transform_1, window_bounds = array<i64: 1, 9, 9, 4>}, {transform_indices = @transform_2, window_bounds = array<i64: 1, 9, 9, 4>}, {transform_indices = @transform_3, window_bounds = array<i64: 1, 9, 9, 4>}, {pipeline_mode = #tpu.pipeline_mode<synchronous>, transform_indices = @transform_4, window_bounds = array<i64: 9, 4, 8>}, {pipeline_mode = #tpu.pipeline_mode<synchronous>, transform_indices = @transform_5, window_bounds = array<i64: 4, 8>}, {transform_indices = @transform_6, window_bounds = array<i64: 1, 64, 8>}, {transform_indices = @transform_7, window_bounds = array<i64: 1, 64, 8>}, {transform_indices = @transform_8, window_bounds = array<i64: 1, 8, 8>}]} {
    %cst = arith.constant 0.000000e+00 : f32
    %0 = vector.broadcast %cst : f32 to vector<64x8xf32>
    %c0 = arith.constant 0 : index
    %c0_0 = arith.constant 0 : index
    %c0_1 = arith.constant 0 : index
    %c0_2 = arith.constant 0 : index
    %1 = vector.load %arg1[%c0, %c0_0, %c0_1, %c0_2] : memref<1x9x9x4xf32, #tpu.memory_space<vmem>>, vector<1x8x8x4xf32>
    %2 = vector.shape_cast %1 : vector<1x8x8x4xf32> to vector<8x8x4xf32>
    %3 = vector.shape_cast %2 : vector<8x8x4xf32> to vector<64x4xf32>
    %4 = arith.truncf %3 : vector<64x4xf32> to vector<64x4xbf16>
    %c0_3 = arith.constant 0 : index
    %c0_4 = arith.constant 0 : index
    %c0_5 = arith.constant 0 : index
    %5 = vector.load %arg5[%c0_3, %c0_4, %c0_5] : memref<9x4x8xbf16, #tpu.memory_space<vmem>>, vector<1x4x8xbf16>
    %6 = vector.shape_cast %5 : vector<1x4x8xbf16> to vector<4x8xbf16>
    %cst_6 = arith.constant dense<0.000000e+00> : vector<64x8xf32>
    %7 = tpu.matmul %4, %6, %cst_6 {dimension_numbers = #tpu.dot_dimension_numbers<[1], [0], [0], [1], [0, 0, 1, 1], [], []>} : vector<64x4xbf16>, vector<4x8xbf16>, vector<64x8xf32> -> vector<64x8xf32>
    %8 = arith.addf %0, %7 : vector<64x8xf32>
    %c0_7 = arith.constant 0 : index
    %c0_8 = arith.constant 0 : index
    %c0_9 = arith.constant 0 : index
    %c0_10 = arith.constant 0 : index
    %9 = vector.load %arg2[%c0_7, %c0_8, %c0_9, %c0_10] : memref<1x9x9x4xf32, #tpu.memory_space<vmem>>, vector<1x8x8x4xf32>
    %10 = vector.shape_cast %9 : vector<1x8x8x4xf32> to vector<8x8x4xf32>
    %11 = vector.shape_cast %10 : vector<8x8x4xf32> to vector<64x4xf32>
    %12 = arith.truncf %11 : vector<64x4xf32> to vector<64x4xbf16>
    %c1 = arith.constant 1 : index
    %c0_11 = arith.constant 0 : index
    %c0_12 = arith.constant 0 : index
    %13 = vector.load %arg5[%c1, %c0_11, %c0_12] : memref<9x4x8xbf16, #tpu.memory_space<vmem>>, vector<1x4x8xbf16>
    %14 = vector.shape_cast %13 : vector<1x4x8xbf16> to vector<4x8xbf16>
    %cst_13 = arith.constant dense<0.000000e+00> : vector<64x8xf32>
    %15 = tpu.matmul %12, %14, %cst_13 {dimension_numbers = #tpu.dot_dimension_numbers<[1], [0], [0], [1], [0, 0, 1, 1], [], []>} : vector<64x4xbf16>, vector<4x8xbf16>, vector<64x8xf32> -> vector<64x8xf32>
    %16 = arith.addf %8, %15 : vector<64x8xf32>
    %c0_14 = arith.constant 0 : index
    %c0_15 = arith.constant 0 : index
    %c1_16 = arith.constant 1 : index
    %c0_17 = arith.constant 0 : index
    %17 = vector.load %arg1[%c0_14, %c0_15, %c1_16, %c0_17] : memref<1x9x9x4xf32, #tpu.memory_space<vmem>>, vector<1x8x8x4xf32>
    %18 = vector.shape_cast %17 : vector<1x8x8x4xf32> to vector<8x8x4xf32>
    %19 = vector.shape_cast %18 : vector<8x8x4xf32> to vector<64x4xf32>
    %20 = arith.truncf %19 : vector<64x4xf32> to vector<64x4xbf16>
    %c2 = arith.constant 2 : index
    %c0_18 = arith.constant 0 : index
    %c0_19 = arith.constant 0 : index
    %21 = vector.load %arg5[%c2, %c0_18, %c0_19] : memref<9x4x8xbf16, #tpu.memory_space<vmem>>, vector<1x4x8xbf16>
    %22 = vector.shape_cast %21 : vector<1x4x8xbf16> to vector<4x8xbf16>
    %cst_20 = arith.constant dense<0.000000e+00> : vector<64x8xf32>
    %23 = tpu.matmul %20, %22, %cst_20 {dimension_numbers = #tpu.dot_dimension_numbers<[1], [0], [0], [1], [0, 0, 1, 1], [], []>} : vector<64x4xbf16>, vector<4x8xbf16>, vector<64x8xf32> -> vector<64x8xf32>
    %24 = arith.addf %16, %23 : vector<64x8xf32>
    %c0_21 = arith.constant 0 : index
    %c0_22 = arith.constant 0 : index
    %c0_23 = arith.constant 0 : index
    %c0_24 = arith.constant 0 : index
    %25 = vector.load %arg3[%c0_21, %c0_22, %c0_23, %c0_24] : memref<1x9x9x4xf32, #tpu.memory_space<vmem>>, vector<1x8x8x4xf32>
    %26 = vector.shape_cast %25 : vector<1x8x8x4xf32> to vector<8x8x4xf32>
    %27 = vector.shape_cast %26 : vector<8x8x4xf32> to vector<64x4xf32>
    %28 = arith.truncf %27 : vector<64x4xf32> to vector<64x4xbf16>
    %c3 = arith.constant 3 : index
    %c0_25 = arith.constant 0 : index
    %c0_26 = arith.constant 0 : index
    %29 = vector.load %arg5[%c3, %c0_25, %c0_26] : memref<9x4x8xbf16, #tpu.memory_space<vmem>>, vector<1x4x8xbf16>
    %30 = vector.shape_cast %29 : vector<1x4x8xbf16> to vector<4x8xbf16>
    %cst_27 = arith.constant dense<0.000000e+00> : vector<64x8xf32>
    %31 = tpu.matmul %28, %30, %cst_27 {dimension_numbers = #tpu.dot_dimension_numbers<[1], [0], [0], [1], [0, 0, 1, 1], [], []>} : vector<64x4xbf16>, vector<4x8xbf16>, vector<64x8xf32> -> vector<64x8xf32>
    %32 = arith.addf %24, %31 : vector<64x8xf32>
    %c0_28 = arith.constant 0 : index
    %c0_29 = arith.constant 0 : index
    %c0_30 = arith.constant 0 : index
    %c0_31 = arith.constant 0 : index
    %33 = vector.load %arg4[%c0_28, %c0_29, %c0_30, %c0_31] : memref<1x9x9x4xf32, #tpu.memory_space<vmem>>, vector<1x8x8x4xf32>
    %34 = vector.shape_cast %33 : vector<1x8x8x4xf32> to vector<8x8x4xf32>
    %35 = vector.shape_cast %34 : vector<8x8x4xf32> to vector<64x4xf32>
    %36 = arith.truncf %35 : vector<64x4xf32> to vector<64x4xbf16>
    %c4 = arith.constant 4 : index
    %c0_32 = arith.constant 0 : index
    %c0_33 = arith.constant 0 : index
    %37 = vector.load %arg5[%c4, %c0_32, %c0_33] : memref<9x4x8xbf16, #tpu.memory_space<vmem>>, vector<1x4x8xbf16>
    %38 = vector.shape_cast %37 : vector<1x4x8xbf16> to vector<4x8xbf16>
    %cst_34 = arith.constant dense<0.000000e+00> : vector<64x8xf32>
    %39 = tpu.matmul %36, %38, %cst_34 {dimension_numbers = #tpu.dot_dimension_numbers<[1], [0], [0], [1], [0, 0, 1, 1], [], []>} : vector<64x4xbf16>, vector<4x8xbf16>, vector<64x8xf32> -> vector<64x8xf32>
    %40 = arith.addf %32, %39 : vector<64x8xf32>
    %c0_35 = arith.constant 0 : index
    %c0_36 = arith.constant 0 : index
    %41 = vector.load %arg6[%c0_35, %c0_36] : memref<4x8xbf16, #tpu.memory_space<vmem>>, vector<4x8xbf16>
    %cst_37 = arith.constant dense<0.000000e+00> : vector<64x8xf32>
    %42 = tpu.matmul %36, %41, %cst_37 {dimension_numbers = #tpu.dot_dimension_numbers<[1], [0], [0], [1], [0, 0, 1, 1], [], []>} : vector<64x4xbf16>, vector<4x8xbf16>, vector<64x8xf32> -> vector<64x8xf32>
    %c0_38 = arith.constant 0 : index
    %c0_39 = arith.constant 0 : index
    %c1_40 = arith.constant 1 : index
    %c0_41 = arith.constant 0 : index
    %43 = vector.load %arg3[%c0_38, %c0_39, %c1_40, %c0_41] : memref<1x9x9x4xf32, #tpu.memory_space<vmem>>, vector<1x8x8x4xf32>
    %44 = vector.shape_cast %43 : vector<1x8x8x4xf32> to vector<8x8x4xf32>
    %45 = vector.shape_cast %44 : vector<8x8x4xf32> to vector<64x4xf32>
    %46 = arith.truncf %45 : vector<64x4xf32> to vector<64x4xbf16>
    %c5 = arith.constant 5 : index
    %c0_42 = arith.constant 0 : index
    %c0_43 = arith.constant 0 : index
    %47 = vector.load %arg5[%c5, %c0_42, %c0_43] : memref<9x4x8xbf16, #tpu.memory_space<vmem>>, vector<1x4x8xbf16>
    %48 = vector.shape_cast %47 : vector<1x4x8xbf16> to vector<4x8xbf16>
    %cst_44 = arith.constant dense<0.000000e+00> : vector<64x8xf32>
    %49 = tpu.matmul %46, %48, %cst_44 {dimension_numbers = #tpu.dot_dimension_numbers<[1], [0], [0], [1], [0, 0, 1, 1], [], []>} : vector<64x4xbf16>, vector<4x8xbf16>, vector<64x8xf32> -> vector<64x8xf32>
    %50 = arith.addf %40, %49 : vector<64x8xf32>
    %c0_45 = arith.constant 0 : index
    %c1_46 = arith.constant 1 : index
    %c0_47 = arith.constant 0 : index
    %c0_48 = arith.constant 0 : index
    %51 = vector.load %arg1[%c0_45, %c1_46, %c0_47, %c0_48] : memref<1x9x9x4xf32, #tpu.memory_space<vmem>>, vector<1x8x8x4xf32>
    %52 = vector.shape_cast %51 : vector<1x8x8x4xf32> to vector<8x8x4xf32>
    %53 = vector.shape_cast %52 : vector<8x8x4xf32> to vector<64x4xf32>
    %54 = arith.truncf %53 : vector<64x4xf32> to vector<64x4xbf16>
    %c6 = arith.constant 6 : index
    %c0_49 = arith.constant 0 : index
    %c0_50 = arith.constant 0 : index
    %55 = vector.load %arg5[%c6, %c0_49, %c0_50] : memref<9x4x8xbf16, #tpu.memory_space<vmem>>, vector<1x4x8xbf16>
    %56 = vector.shape_cast %55 : vector<1x4x8xbf16> to vector<4x8xbf16>
    %cst_51 = arith.constant dense<0.000000e+00> : vector<64x8xf32>
    %57 = tpu.matmul %54, %56, %cst_51 {dimension_numbers = #tpu.dot_dimension_numbers<[1], [0], [0], [1], [0, 0, 1, 1], [], []>} : vector<64x4xbf16>, vector<4x8xbf16>, vector<64x8xf32> -> vector<64x8xf32>
    %58 = arith.addf %50, %57 : vector<64x8xf32>
    %c0_52 = arith.constant 0 : index
    %c1_53 = arith.constant 1 : index
    %c0_54 = arith.constant 0 : index
    %c0_55 = arith.constant 0 : index
    %59 = vector.load %arg2[%c0_52, %c1_53, %c0_54, %c0_55] : memref<1x9x9x4xf32, #tpu.memory_space<vmem>>, vector<1x8x8x4xf32>
    %60 = vector.shape_cast %59 : vector<1x8x8x4xf32> to vector<8x8x4xf32>
    %61 = vector.shape_cast %60 : vector<8x8x4xf32> to vector<64x4xf32>
    %62 = arith.truncf %61 : vector<64x4xf32> to vector<64x4xbf16>
    %c7 = arith.constant 7 : index
    %c0_56 = arith.constant 0 : index
    %c0_57 = arith.constant 0 : index
    %63 = vector.load %arg5[%c7, %c0_56, %c0_57] : memref<9x4x8xbf16, #tpu.memory_space<vmem>>, vector<1x4x8xbf16>
    %64 = vector.shape_cast %63 : vector<1x4x8xbf16> to vector<4x8xbf16>
    %cst_58 = arith.constant dense<0.000000e+00> : vector<64x8xf32>
    %65 = tpu.matmul %62, %64, %cst_58 {dimension_numbers = #tpu.dot_dimension_numbers<[1], [0], [0], [1], [0, 0, 1, 1], [], []>} : vector<64x4xbf16>, vector<4x8xbf16>, vector<64x8xf32> -> vector<64x8xf32>
    %66 = arith.addf %58, %65 : vector<64x8xf32>
    %c0_59 = arith.constant 0 : index
    %c1_60 = arith.constant 1 : index
    %c1_61 = arith.constant 1 : index
    %c0_62 = arith.constant 0 : index
    %67 = vector.load %arg1[%c0_59, %c1_60, %c1_61, %c0_62] : memref<1x9x9x4xf32, #tpu.memory_space<vmem>>, vector<1x8x8x4xf32>
    %68 = vector.shape_cast %67 : vector<1x8x8x4xf32> to vector<8x8x4xf32>
    %69 = vector.shape_cast %68 : vector<8x8x4xf32> to vector<64x4xf32>
    %70 = arith.truncf %69 : vector<64x4xf32> to vector<64x4xbf16>
    %c8 = arith.constant 8 : index
    %c0_63 = arith.constant 0 : index
    %c0_64 = arith.constant 0 : index
    %71 = vector.load %arg5[%c8, %c0_63, %c0_64] : memref<9x4x8xbf16, #tpu.memory_space<vmem>>, vector<1x4x8xbf16>
    %72 = vector.shape_cast %71 : vector<1x4x8xbf16> to vector<4x8xbf16>
    %cst_65 = arith.constant dense<0.000000e+00> : vector<64x8xf32>
    %73 = tpu.matmul %70, %72, %cst_65 {dimension_numbers = #tpu.dot_dimension_numbers<[1], [0], [0], [1], [0, 0, 1, 1], [], []>} : vector<64x4xbf16>, vector<4x8xbf16>, vector<64x8xf32> -> vector<64x8xf32>
    %74 = arith.addf %66, %73 : vector<64x8xf32>
    %c0_66 = arith.constant 0 : index
    %c0_67 = arith.constant 0 : index
    %c0_68 = arith.constant 0 : index
    %75 = vector.load %arg7[%c0_66, %c0_67, %c0_68] : memref<1x64x8xf32, #tpu.memory_space<vmem>>, vector<1x64x8xf32>
    %76 = vector.shape_cast %75 : vector<1x64x8xf32> to vector<64x8xf32>
    %77 = vector.shape_cast %74 : vector<64x8xf32> to vector<1x64x8xf32>
    tpu.vector_store %arg7[%c0_66, %c0_67, %c0_68], %77 {strides = array<i32>} : memref<1x64x8xf32, #tpu.memory_space<vmem>>, vector<1x64x8xf32>,
    %c0_69 = arith.constant 0 : index
    %c0_70 = arith.constant 0 : index
    %c0_71 = arith.constant 0 : index
    %78 = vector.load %arg8[%c0_69, %c0_70, %c0_71] : memref<1x64x8xf32, #tpu.memory_space<vmem>>, vector<1x64x8xf32>
    %79 = vector.shape_cast %78 : vector<1x64x8xf32> to vector<64x8xf32>
    %80 = vector.shape_cast %42 : vector<64x8xf32> to vector<1x64x8xf32>
    tpu.vector_store %arg8[%c0_69, %c0_70, %c0_71], %80 {strides = array<i32>} : memref<1x64x8xf32, #tpu.memory_space<vmem>>, vector<1x64x8xf32>,
    %cst_72 = arith.constant dense<0.000000e+00> : vector<8xf32>
    %81 = vector.multi_reduction <add>, %74, %cst_72 [0] : vector<64x8xf32> to vector<8xf32>
    %82 = vector.shape_cast %81 : vector<8xf32> to vector<1x8xf32>
    %c0_73 = arith.constant 0 : index
    %c0_74 = arith.constant 0 : index
    %c0_75 = arith.constant 0 : index
    %83 = vector.load %arg9[%c0_73, %c0_74, %c0_75] : memref<1x8x8xf32, #tpu.memory_space<vmem>>, vector<1x1x8xf32>
    %84 = vector.shape_cast %83 : vector<1x1x8xf32> to vector<1x8xf32>
    %85 = vector.shape_cast %82 : vector<1x8xf32> to vector<1x1x8xf32>
    tpu.vector_store %arg9[%c0_73, %c0_74, %c0_75], %85 {strides = array<i32>} : memref<1x8x8xf32, #tpu.memory_space<vmem>>, vector<1x1x8xf32>,
    %86 = arith.mulf %74, %74 : vector<64x8xf32>
    %cst_76 = arith.constant dense<0.000000e+00> : vector<8xf32>
    %87 = vector.multi_reduction <add>, %86, %cst_76 [0] : vector<64x8xf32> to vector<8xf32>
    %88 = vector.shape_cast %87 : vector<8xf32> to vector<1x8xf32>
    %c0_77 = arith.constant 0 : index
    %c1_78 = arith.constant 1 : index
    %c0_79 = arith.constant 0 : index
    %89 = vector.load %arg9[%c0_77, %c1_78, %c0_79] : memref<1x8x8xf32, #tpu.memory_space<vmem>>, vector<1x1x8xf32>
    %90 = vector.shape_cast %89 : vector<1x1x8xf32> to vector<1x8xf32>
    %91 = vector.shape_cast %88 : vector<1x8xf32> to vector<1x1x8xf32>
    tpu.vector_store %arg9[%c0_77, %c1_78, %c0_79], %91 {strides = array<i32>} : memref<1x8x8xf32, #tpu.memory_space<vmem>>, vector<1x1x8xf32>,
    %cst_80 = arith.constant dense<0.000000e+00> : vector<8xf32>
    %92 = vector.multi_reduction <add>, %42, %cst_80 [0] : vector<64x8xf32> to vector<8xf32>
    %93 = vector.shape_cast %92 : vector<8xf32> to vector<1x8xf32>
    %c0_81 = arith.constant 0 : index
    %c2_82 = arith.constant 2 : index
    %c0_83 = arith.constant 0 : index
    %94 = vector.load %arg9[%c0_81, %c2_82, %c0_83] : memref<1x8x8xf32, #tpu.memory_space<vmem>>, vector<1x1x8xf32>
    %95 = vector.shape_cast %94 : vector<1x1x8xf32> to vector<1x8xf32>
    %96 = vector.shape_cast %93 : vector<1x8xf32> to vector<1x1x8xf32>
    tpu.vector_store %arg9[%c0_81, %c2_82, %c0_83], %96 {strides = array<i32>} : memref<1x8x8xf32, #tpu.memory_space<vmem>>, vector<1x1x8xf32>,
    %97 = arith.mulf %42, %42 : vector<64x8xf32>
    %cst_84 = arith.constant dense<0.000000e+00> : vector<8xf32>
    %98 = vector.multi_reduction <add>, %97, %cst_84 [0] : vector<64x8xf32> to vector<8xf32>
    %99 = vector.shape_cast %98 : vector<8xf32> to vector<1x8xf32>
    %c0_85 = arith.constant 0 : index
    %c3_86 = arith.constant 3 : index
    %c0_87 = arith.constant 0 : index
    %100 = vector.load %arg9[%c0_85, %c3_86, %c0_87] : memref<1x8x8xf32, #tpu.memory_space<vmem>>, vector<1x1x8xf32>
    %101 = vector.shape_cast %100 : vector<1x1x8xf32> to vector<1x8xf32>
    %102 = vector.shape_cast %99 : vector<1x8xf32> to vector<1x1x8xf32>
    tpu.vector_store %arg9[%c0_85, %c3_86, %c0_87], %102 {strides = array<i32>} : memref<1x8x8xf32, #tpu.memory_space<vmem>>, vector<1x1x8xf32>,
    %cst_88 = arith.constant 0.000000e+00 : f32
    %103 = vector.broadcast %cst_88 : f32 to vector<4x8xf32>
    %c0_89 = arith.constant 0 : index
    %c4_90 = arith.constant 4 : index
    %c0_91 = arith.constant 0 : index
    %104 = vector.load %arg9[%c0_89, %c4_90, %c0_91] : memref<1x8x8xf32, #tpu.memory_space<vmem>>, vector<1x4x8xf32>
    %105 = vector.shape_cast %104 : vector<1x4x8xf32> to vector<4x8xf32>
    %106 = vector.shape_cast %103 : vector<4x8xf32> to vector<1x4x8xf32>
    tpu.vector_store %arg9[%c0_89, %c4_90, %c0_91], %106 {strides = array<i32>} : memref<1x8x8xf32, #tpu.memory_space<vmem>>, vector<1x4x8xf32>,
    return
  }
  func.func @transform_0(%arg0: i32) -> (i32, i32, i32, i32) {
    %c0_i32 = arith.constant 0 : i32
    %c0_i32_0 = arith.constant 0 : i32
    %c0_i32_1 = arith.constant 0 : i32
    %c0_i32_2 = arith.constant 0 : i32
    return %arg0, %c0_i32, %c0_i32_0, %c0_i32_1 : i32, i32, i32, i32
  }
  func.func @transform_1(%arg0: i32) -> (i32, i32, i32, i32) {
    %c0_i32 = arith.constant 0 : i32
    %c0_i32_0 = arith.constant 0 : i32
    %c0_i32_1 = arith.constant 0 : i32
    %c0_i32_2 = arith.constant 0 : i32
    return %arg0, %c0_i32, %c0_i32_0, %c0_i32_1 : i32, i32, i32, i32
  }
  func.func @transform_2(%arg0: i32) -> (i32, i32, i32, i32) {
    %c0_i32 = arith.constant 0 : i32
    %c0_i32_0 = arith.constant 0 : i32
    %c0_i32_1 = arith.constant 0 : i32
    %c0_i32_2 = arith.constant 0 : i32
    return %arg0, %c0_i32, %c0_i32_0, %c0_i32_1 : i32, i32, i32, i32
  }
  func.func @transform_3(%arg0: i32) -> (i32, i32, i32, i32) {
    %c0_i32 = arith.constant 0 : i32
    %c0_i32_0 = arith.constant 0 : i32
    %c0_i32_1 = arith.constant 0 : i32
    %c0_i32_2 = arith.constant 0 : i32
    return %arg0, %c0_i32, %c0_i32_0, %c0_i32_1 : i32, i32, i32, i32
  }
  func.func @transform_4(%arg0: i32) -> (i32, i32, i32) {
    %c0_i32 = arith.constant 0 : i32
    %c0_i32_0 = arith.constant 0 : i32
    %c0_i32_1 = arith.constant 0 : i32
    %c0_i32_2 = arith.constant 0 : i32
    return %c0_i32, %c0_i32_0, %c0_i32_1 : i32, i32, i32
  }
  func.func @transform_5(%arg0: i32) -> (i32, i32) {
    %c0_i32 = arith.constant 0 : i32
    %c0_i32_0 = arith.constant 0 : i32
    %c0_i32_1 = arith.constant 0 : i32
    return %c0_i32, %c0_i32_0 : i32, i32
  }
  func.func @transform_6(%arg0: i32) -> (i32, i32, i32) {
    %c0_i32 = arith.constant 0 : i32
    %c0_i32_0 = arith.constant 0 : i32
    %c0_i32_1 = arith.constant 0 : i32
    return %arg0, %c0_i32, %c0_i32_0 : i32, i32, i32
  }
  func.func @transform_7(%arg0: i32) -> (i32, i32, i32) {
    %c0_i32 = arith.constant 0 : i32
    %c0_i32_0 = arith.constant 0 : i32
    %c0_i32_1 = arith.constant 0 : i32
    return %arg0, %c0_i32, %c0_i32_0 : i32, i32, i32
  }
  func.func @transform_8(%arg0: i32) -> (i32, i32, i32) {
    %c0_i32 = arith.constant 0 : i32
    %c0_i32_0 = arith.constant 0 : i32
    %c0_i32_1 = arith.constant 0 : i32
    return %arg0, %c0_i32, %c0_i32_0 : i32, i32, i32
  }
}

module attributes {stable_mosaic.version = 11 : i64} {
  func.func @_conv2_fused_kernel(%arg0: i32, %arg1: memref<1x8x8x8xf32, #tpu.memory_space<vmem>>, %arg2: memref<1x8xf32, #tpu.memory_space<vmem>>, %arg3: memref<1x8xf32, #tpu.memory_space<vmem>>, %arg4: memref<9x8x8xbf16, #tpu.memory_space<vmem>>, %arg5: memref<1x64x8xf32, #tpu.memory_space<vmem>>, %arg6: memref<1x8x8xf32, #tpu.memory_space<vmem>>, %arg7: memref<10x10x8xf32, #tpu.memory_space<vmem>>) attributes {dimension_semantics = [#tpu.dimension_semantics<parallel>], iteration_bounds = array<i64: 2>, scalar_prefetch = 0 : i64, scratch_operands = 1 : i64, tpu.core_type = #tpu.core_type<tc>, window_params = [{transform_indices = @transform_0, window_bounds = array<i64: 1, 8, 8, 8>}, {pipeline_mode = #tpu.pipeline_mode<synchronous>, transform_indices = @transform_1, window_bounds = array<i64: 1, 8>}, {pipeline_mode = #tpu.pipeline_mode<synchronous>, transform_indices = @transform_2, window_bounds = array<i64: 1, 8>}, {pipeline_mode = #tpu.pipeline_mode<synchronous>, transform_indices = @transform_3, window_bounds = array<i64: 9, 8, 8>}, {transform_indices = @transform_4, window_bounds = array<i64: 1, 64, 8>}, {transform_indices = @transform_5, window_bounds = array<i64: 1, 8, 8>}]} {
    %c0 = arith.constant 0 : index
    %c0_0 = arith.constant 0 : index
    %0 = vector.load %arg2[%c0, %c0_0] : memref<1x8xf32, #tpu.memory_space<vmem>>, vector<1x8xf32>
    %1 = vector.shape_cast %0 : vector<1x8xf32> to vector<1x1x8xf32>
    %c0_1 = arith.constant 0 : index
    %c0_2 = arith.constant 0 : index
    %2 = vector.load %arg3[%c0_1, %c0_2] : memref<1x8xf32, #tpu.memory_space<vmem>>, vector<1x8xf32>
    %3 = vector.shape_cast %2 : vector<1x8xf32> to vector<1x1x8xf32>
    %c0_3 = arith.constant 0 : index
    %c0_4 = arith.constant 0 : index
    %c0_5 = arith.constant 0 : index
    %c0_6 = arith.constant 0 : index
    %4 = vector.load %arg1[%c0_3, %c0_4, %c0_5, %c0_6] : memref<1x8x8x8xf32, #tpu.memory_space<vmem>>, vector<1x8x8x8xf32>
    %5 = vector.shape_cast %4 : vector<1x8x8x8xf32> to vector<8x8x8xf32>
    %6 = vector.broadcast %1 : vector<1x1x8xf32> to vector<8x8x8xf32>
    %7 = arith.mulf %5, %6 : vector<8x8x8xf32>
    %8 = vector.broadcast %3 : vector<1x1x8xf32> to vector<8x8x8xf32>
    %9 = arith.addf %7, %8 : vector<8x8x8xf32>
    %cst = arith.constant 0.000000e+00 : f32
    %10 = vector.broadcast %cst : f32 to vector<8x8x8xf32>
    %11 = arith.maximumf %9, %10 : vector<8x8x8xf32>
    %cst_7 = arith.constant 0.000000e+00 : f32
    %12 = vector.broadcast %cst_7 : f32 to vector<10x10x8xf32>
    %c0_8 = arith.constant 0 : index
    %c0_9 = arith.constant 0 : index
    %c0_10 = arith.constant 0 : index
    %13 = vector.load %arg7[%c0_8, %c0_9, %c0_10] : memref<10x10x8xf32, #tpu.memory_space<vmem>>, vector<10x10x8xf32>
    tpu.vector_store %arg7[%c0_8, %c0_9, %c0_10], %12 {strides = array<i32>} : memref<10x10x8xf32, #tpu.memory_space<vmem>>, vector<10x10x8xf32>,
    %c1 = arith.constant 1 : index
    %c1_11 = arith.constant 1 : index
    %c0_12 = arith.constant 0 : index
    %14 = vector.load %arg7[%c1, %c1_11, %c0_12] : memref<10x10x8xf32, #tpu.memory_space<vmem>>, vector<8x8x8xf32>
    tpu.vector_store %arg7[%c1, %c1_11, %c0_12], %11 {strides = array<i32>} : memref<10x10x8xf32, #tpu.memory_space<vmem>>, vector<8x8x8xf32>,
    %cst_13 = arith.constant 0.000000e+00 : f32
    %15 = vector.broadcast %cst_13 : f32 to vector<64x8xf32>
    %c0_14 = arith.constant 0 : index
    %c0_15 = arith.constant 0 : index
    %c0_16 = arith.constant 0 : index
    %16 = vector.load %arg7[%c0_14, %c0_15, %c0_16] : memref<10x10x8xf32, #tpu.memory_space<vmem>>, vector<8x8x8xf32>
    %17 = vector.shape_cast %16 : vector<8x8x8xf32> to vector<64x8xf32>
    %18 = arith.truncf %17 : vector<64x8xf32> to vector<64x8xbf16>
    %c0_17 = arith.constant 0 : index
    %c0_18 = arith.constant 0 : index
    %c0_19 = arith.constant 0 : index
    %19 = vector.load %arg4[%c0_17, %c0_18, %c0_19] : memref<9x8x8xbf16, #tpu.memory_space<vmem>>, vector<1x8x8xbf16>
    %20 = vector.shape_cast %19 : vector<1x8x8xbf16> to vector<8x8xbf16>
    %cst_20 = arith.constant dense<0.000000e+00> : vector<64x8xf32>
    %21 = tpu.matmul %18, %20, %cst_20 {dimension_numbers = #tpu.dot_dimension_numbers<[1], [0], [0], [1], [0, 0, 1, 1], [], []>} : vector<64x8xbf16>, vector<8x8xbf16>, vector<64x8xf32> -> vector<64x8xf32>
    %22 = arith.addf %15, %21 : vector<64x8xf32>
    %c0_21 = arith.constant 0 : index
    %c1_22 = arith.constant 1 : index
    %c0_23 = arith.constant 0 : index
    %23 = vector.load %arg7[%c0_21, %c1_22, %c0_23] : memref<10x10x8xf32, #tpu.memory_space<vmem>>, vector<8x8x8xf32>
    %24 = vector.shape_cast %23 : vector<8x8x8xf32> to vector<64x8xf32>
    %25 = arith.truncf %24 : vector<64x8xf32> to vector<64x8xbf16>
    %c1_24 = arith.constant 1 : index
    %c0_25 = arith.constant 0 : index
    %c0_26 = arith.constant 0 : index
    %26 = vector.load %arg4[%c1_24, %c0_25, %c0_26] : memref<9x8x8xbf16, #tpu.memory_space<vmem>>, vector<1x8x8xbf16>
    %27 = vector.shape_cast %26 : vector<1x8x8xbf16> to vector<8x8xbf16>
    %cst_27 = arith.constant dense<0.000000e+00> : vector<64x8xf32>
    %28 = tpu.matmul %25, %27, %cst_27 {dimension_numbers = #tpu.dot_dimension_numbers<[1], [0], [0], [1], [0, 0, 1, 1], [], []>} : vector<64x8xbf16>, vector<8x8xbf16>, vector<64x8xf32> -> vector<64x8xf32>
    %29 = arith.addf %22, %28 : vector<64x8xf32>
    %c0_28 = arith.constant 0 : index
    %c2 = arith.constant 2 : index
    %c0_29 = arith.constant 0 : index
    %30 = vector.load %arg7[%c0_28, %c2, %c0_29] : memref<10x10x8xf32, #tpu.memory_space<vmem>>, vector<8x8x8xf32>
    %31 = vector.shape_cast %30 : vector<8x8x8xf32> to vector<64x8xf32>
    %32 = arith.truncf %31 : vector<64x8xf32> to vector<64x8xbf16>
    %c2_30 = arith.constant 2 : index
    %c0_31 = arith.constant 0 : index
    %c0_32 = arith.constant 0 : index
    %33 = vector.load %arg4[%c2_30, %c0_31, %c0_32] : memref<9x8x8xbf16, #tpu.memory_space<vmem>>, vector<1x8x8xbf16>
    %34 = vector.shape_cast %33 : vector<1x8x8xbf16> to vector<8x8xbf16>
    %cst_33 = arith.constant dense<0.000000e+00> : vector<64x8xf32>
    %35 = tpu.matmul %32, %34, %cst_33 {dimension_numbers = #tpu.dot_dimension_numbers<[1], [0], [0], [1], [0, 0, 1, 1], [], []>} : vector<64x8xbf16>, vector<8x8xbf16>, vector<64x8xf32> -> vector<64x8xf32>
    %36 = arith.addf %29, %35 : vector<64x8xf32>
    %c1_34 = arith.constant 1 : index
    %c0_35 = arith.constant 0 : index
    %c0_36 = arith.constant 0 : index
    %37 = vector.load %arg7[%c1_34, %c0_35, %c0_36] : memref<10x10x8xf32, #tpu.memory_space<vmem>>, vector<8x8x8xf32>
    %38 = vector.shape_cast %37 : vector<8x8x8xf32> to vector<64x8xf32>
    %39 = arith.truncf %38 : vector<64x8xf32> to vector<64x8xbf16>
    %c3 = arith.constant 3 : index
    %c0_37 = arith.constant 0 : index
    %c0_38 = arith.constant 0 : index
    %40 = vector.load %arg4[%c3, %c0_37, %c0_38] : memref<9x8x8xbf16, #tpu.memory_space<vmem>>, vector<1x8x8xbf16>
    %41 = vector.shape_cast %40 : vector<1x8x8xbf16> to vector<8x8xbf16>
    %cst_39 = arith.constant dense<0.000000e+00> : vector<64x8xf32>
    %42 = tpu.matmul %39, %41, %cst_39 {dimension_numbers = #tpu.dot_dimension_numbers<[1], [0], [0], [1], [0, 0, 1, 1], [], []>} : vector<64x8xbf16>, vector<8x8xbf16>, vector<64x8xf32> -> vector<64x8xf32>
    %43 = arith.addf %36, %42 : vector<64x8xf32>
    %c1_40 = arith.constant 1 : index
    %c1_41 = arith.constant 1 : index
    %c0_42 = arith.constant 0 : index
    %44 = vector.load %arg7[%c1_40, %c1_41, %c0_42] : memref<10x10x8xf32, #tpu.memory_space<vmem>>, vector<8x8x8xf32>
    %45 = vector.shape_cast %44 : vector<8x8x8xf32> to vector<64x8xf32>
    %46 = arith.truncf %45 : vector<64x8xf32> to vector<64x8xbf16>
    %c4 = arith.constant 4 : index
    %c0_43 = arith.constant 0 : index
    %c0_44 = arith.constant 0 : index
    %47 = vector.load %arg4[%c4, %c0_43, %c0_44] : memref<9x8x8xbf16, #tpu.memory_space<vmem>>, vector<1x8x8xbf16>
    %48 = vector.shape_cast %47 : vector<1x8x8xbf16> to vector<8x8xbf16>
    %cst_45 = arith.constant dense<0.000000e+00> : vector<64x8xf32>
    %49 = tpu.matmul %46, %48, %cst_45 {dimension_numbers = #tpu.dot_dimension_numbers<[1], [0], [0], [1], [0, 0, 1, 1], [], []>} : vector<64x8xbf16>, vector<8x8xbf16>, vector<64x8xf32> -> vector<64x8xf32>
    %50 = arith.addf %43, %49 : vector<64x8xf32>
    %c1_46 = arith.constant 1 : index
    %c2_47 = arith.constant 2 : index
    %c0_48 = arith.constant 0 : index
    %51 = vector.load %arg7[%c1_46, %c2_47, %c0_48] : memref<10x10x8xf32, #tpu.memory_space<vmem>>, vector<8x8x8xf32>
    %52 = vector.shape_cast %51 : vector<8x8x8xf32> to vector<64x8xf32>
    %53 = arith.truncf %52 : vector<64x8xf32> to vector<64x8xbf16>
    %c5 = arith.constant 5 : index
    %c0_49 = arith.constant 0 : index
    %c0_50 = arith.constant 0 : index
    %54 = vector.load %arg4[%c5, %c0_49, %c0_50] : memref<9x8x8xbf16, #tpu.memory_space<vmem>>, vector<1x8x8xbf16>
    %55 = vector.shape_cast %54 : vector<1x8x8xbf16> to vector<8x8xbf16>
    %cst_51 = arith.constant dense<0.000000e+00> : vector<64x8xf32>
    %56 = tpu.matmul %53, %55, %cst_51 {dimension_numbers = #tpu.dot_dimension_numbers<[1], [0], [0], [1], [0, 0, 1, 1], [], []>} : vector<64x8xbf16>, vector<8x8xbf16>, vector<64x8xf32> -> vector<64x8xf32>
    %57 = arith.addf %50, %56 : vector<64x8xf32>
    %c2_52 = arith.constant 2 : index
    %c0_53 = arith.constant 0 : index
    %c0_54 = arith.constant 0 : index
    %58 = vector.load %arg7[%c2_52, %c0_53, %c0_54] : memref<10x10x8xf32, #tpu.memory_space<vmem>>, vector<8x8x8xf32>
    %59 = vector.shape_cast %58 : vector<8x8x8xf32> to vector<64x8xf32>
    %60 = arith.truncf %59 : vector<64x8xf32> to vector<64x8xbf16>
    %c6 = arith.constant 6 : index
    %c0_55 = arith.constant 0 : index
    %c0_56 = arith.constant 0 : index
    %61 = vector.load %arg4[%c6, %c0_55, %c0_56] : memref<9x8x8xbf16, #tpu.memory_space<vmem>>, vector<1x8x8xbf16>
    %62 = vector.shape_cast %61 : vector<1x8x8xbf16> to vector<8x8xbf16>
    %cst_57 = arith.constant dense<0.000000e+00> : vector<64x8xf32>
    %63 = tpu.matmul %60, %62, %cst_57 {dimension_numbers = #tpu.dot_dimension_numbers<[1], [0], [0], [1], [0, 0, 1, 1], [], []>} : vector<64x8xbf16>, vector<8x8xbf16>, vector<64x8xf32> -> vector<64x8xf32>
    %64 = arith.addf %57, %63 : vector<64x8xf32>
    %c2_58 = arith.constant 2 : index
    %c1_59 = arith.constant 1 : index
    %c0_60 = arith.constant 0 : index
    %65 = vector.load %arg7[%c2_58, %c1_59, %c0_60] : memref<10x10x8xf32, #tpu.memory_space<vmem>>, vector<8x8x8xf32>
    %66 = vector.shape_cast %65 : vector<8x8x8xf32> to vector<64x8xf32>
    %67 = arith.truncf %66 : vector<64x8xf32> to vector<64x8xbf16>
    %c7 = arith.constant 7 : index
    %c0_61 = arith.constant 0 : index
    %c0_62 = arith.constant 0 : index
    %68 = vector.load %arg4[%c7, %c0_61, %c0_62] : memref<9x8x8xbf16, #tpu.memory_space<vmem>>, vector<1x8x8xbf16>
    %69 = vector.shape_cast %68 : vector<1x8x8xbf16> to vector<8x8xbf16>
    %cst_63 = arith.constant dense<0.000000e+00> : vector<64x8xf32>
    %70 = tpu.matmul %67, %69, %cst_63 {dimension_numbers = #tpu.dot_dimension_numbers<[1], [0], [0], [1], [0, 0, 1, 1], [], []>} : vector<64x8xbf16>, vector<8x8xbf16>, vector<64x8xf32> -> vector<64x8xf32>
    %71 = arith.addf %64, %70 : vector<64x8xf32>
    %c2_64 = arith.constant 2 : index
    %c2_65 = arith.constant 2 : index
    %c0_66 = arith.constant 0 : index
    %72 = vector.load %arg7[%c2_64, %c2_65, %c0_66] : memref<10x10x8xf32, #tpu.memory_space<vmem>>, vector<8x8x8xf32>
    %73 = vector.shape_cast %72 : vector<8x8x8xf32> to vector<64x8xf32>
    %74 = arith.truncf %73 : vector<64x8xf32> to vector<64x8xbf16>
    %c8 = arith.constant 8 : index
    %c0_67 = arith.constant 0 : index
    %c0_68 = arith.constant 0 : index
    %75 = vector.load %arg4[%c8, %c0_67, %c0_68] : memref<9x8x8xbf16, #tpu.memory_space<vmem>>, vector<1x8x8xbf16>
    %76 = vector.shape_cast %75 : vector<1x8x8xbf16> to vector<8x8xbf16>
    %cst_69 = arith.constant dense<0.000000e+00> : vector<64x8xf32>
    %77 = tpu.matmul %74, %76, %cst_69 {dimension_numbers = #tpu.dot_dimension_numbers<[1], [0], [0], [1], [0, 0, 1, 1], [], []>} : vector<64x8xbf16>, vector<8x8xbf16>, vector<64x8xf32> -> vector<64x8xf32>
    %78 = arith.addf %71, %77 : vector<64x8xf32>
    %c0_70 = arith.constant 0 : index
    %c0_71 = arith.constant 0 : index
    %c0_72 = arith.constant 0 : index
    %79 = vector.load %arg5[%c0_70, %c0_71, %c0_72] : memref<1x64x8xf32, #tpu.memory_space<vmem>>, vector<1x64x8xf32>
    %80 = vector.shape_cast %79 : vector<1x64x8xf32> to vector<64x8xf32>
    %81 = vector.shape_cast %78 : vector<64x8xf32> to vector<1x64x8xf32>
    tpu.vector_store %arg5[%c0_70, %c0_71, %c0_72], %81 {strides = array<i32>} : memref<1x64x8xf32, #tpu.memory_space<vmem>>, vector<1x64x8xf32>,
    %cst_73 = arith.constant dense<0.000000e+00> : vector<8xf32>
    %82 = vector.multi_reduction <add>, %78, %cst_73 [0] : vector<64x8xf32> to vector<8xf32>
    %83 = vector.shape_cast %82 : vector<8xf32> to vector<1x8xf32>
    %c0_74 = arith.constant 0 : index
    %c0_75 = arith.constant 0 : index
    %c0_76 = arith.constant 0 : index
    %84 = vector.load %arg6[%c0_74, %c0_75, %c0_76] : memref<1x8x8xf32, #tpu.memory_space<vmem>>, vector<1x1x8xf32>
    %85 = vector.shape_cast %84 : vector<1x1x8xf32> to vector<1x8xf32>
    %86 = vector.shape_cast %83 : vector<1x8xf32> to vector<1x1x8xf32>
    tpu.vector_store %arg6[%c0_74, %c0_75, %c0_76], %86 {strides = array<i32>} : memref<1x8x8xf32, #tpu.memory_space<vmem>>, vector<1x1x8xf32>,
    %87 = arith.mulf %78, %78 : vector<64x8xf32>
    %cst_77 = arith.constant dense<0.000000e+00> : vector<8xf32>
    %88 = vector.multi_reduction <add>, %87, %cst_77 [0] : vector<64x8xf32> to vector<8xf32>
    %89 = vector.shape_cast %88 : vector<8xf32> to vector<1x8xf32>
    %c0_78 = arith.constant 0 : index
    %c1_79 = arith.constant 1 : index
    %c0_80 = arith.constant 0 : index
    %90 = vector.load %arg6[%c0_78, %c1_79, %c0_80] : memref<1x8x8xf32, #tpu.memory_space<vmem>>, vector<1x1x8xf32>
    %91 = vector.shape_cast %90 : vector<1x1x8xf32> to vector<1x8xf32>
    %92 = vector.shape_cast %89 : vector<1x8xf32> to vector<1x1x8xf32>
    tpu.vector_store %arg6[%c0_78, %c1_79, %c0_80], %92 {strides = array<i32>} : memref<1x8x8xf32, #tpu.memory_space<vmem>>, vector<1x1x8xf32>,
    %cst_81 = arith.constant 0.000000e+00 : f32
    %93 = vector.broadcast %cst_81 : f32 to vector<6x8xf32>
    %c0_82 = arith.constant 0 : index
    %c2_83 = arith.constant 2 : index
    %c0_84 = arith.constant 0 : index
    %94 = vector.load %arg6[%c0_82, %c2_83, %c0_84] : memref<1x8x8xf32, #tpu.memory_space<vmem>>, vector<1x6x8xf32>
    %95 = vector.shape_cast %94 : vector<1x6x8xf32> to vector<6x8xf32>
    %96 = vector.shape_cast %93 : vector<6x8xf32> to vector<1x6x8xf32>
    tpu.vector_store %arg6[%c0_82, %c2_83, %c0_84], %96 {strides = array<i32>} : memref<1x8x8xf32, #tpu.memory_space<vmem>>, vector<1x6x8xf32>,
    return
  }
  func.func @transform_0(%arg0: i32) -> (i32, i32, i32, i32) {
    %c0_i32 = arith.constant 0 : i32
    %c0_i32_0 = arith.constant 0 : i32
    %c0_i32_1 = arith.constant 0 : i32
    %c0_i32_2 = arith.constant 0 : i32
    return %arg0, %c0_i32, %c0_i32_0, %c0_i32_1 : i32, i32, i32, i32
  }
  func.func @transform_1(%arg0: i32) -> (i32, i32) {
    %c0_i32 = arith.constant 0 : i32
    %c0_i32_0 = arith.constant 0 : i32
    %c0_i32_1 = arith.constant 0 : i32
    return %c0_i32, %c0_i32_0 : i32, i32
  }
  func.func @transform_2(%arg0: i32) -> (i32, i32) {
    %c0_i32 = arith.constant 0 : i32
    %c0_i32_0 = arith.constant 0 : i32
    %c0_i32_1 = arith.constant 0 : i32
    return %c0_i32, %c0_i32_0 : i32, i32
  }
  func.func @transform_3(%arg0: i32) -> (i32, i32, i32) {
    %c0_i32 = arith.constant 0 : i32
    %c0_i32_0 = arith.constant 0 : i32
    %c0_i32_1 = arith.constant 0 : i32
    %c0_i32_2 = arith.constant 0 : i32
    return %c0_i32, %c0_i32_0, %c0_i32_1 : i32, i32, i32
  }
  func.func @transform_4(%arg0: i32) -> (i32, i32, i32) {
    %c0_i32 = arith.constant 0 : i32
    %c0_i32_0 = arith.constant 0 : i32
    %c0_i32_1 = arith.constant 0 : i32
    return %arg0, %c0_i32, %c0_i32_0 : i32, i32, i32
  }
  func.func @transform_5(%arg0: i32) -> (i32, i32, i32) {
    %c0_i32 = arith.constant 0 : i32
    %c0_i32_0 = arith.constant 0 : i32
    %c0_i32_1 = arith.constant 0 : i32
    return %arg0, %c0_i32, %c0_i32_0 : i32, i32, i32
  }
}

module attributes {stable_mosaic.version = 11 : i64} {
  func.func @_residual_kernel(%arg0: i32, %arg1: memref<128x8xf32, #tpu.memory_space<vmem>>, %arg2: memref<128x8xf32, #tpu.memory_space<vmem>>, %arg3: memref<1x8xf32, #tpu.memory_space<vmem>>, %arg4: memref<1x8xf32, #tpu.memory_space<vmem>>, %arg5: memref<1x8xf32, #tpu.memory_space<vmem>>, %arg6: memref<1x8xf32, #tpu.memory_space<vmem>>, %arg7: memref<128x8xf32, #tpu.memory_space<vmem>>) attributes {dimension_semantics = [#tpu.dimension_semantics<parallel>], iteration_bounds = array<i64: 1>, scalar_prefetch = 0 : i64, scratch_operands = 0 : i64, tpu.core_type = #tpu.core_type<tc>, window_params = [{transform_indices = @transform_0, window_bounds = array<i64: 128, 8>}, {transform_indices = @transform_1, window_bounds = array<i64: 128, 8>}, {pipeline_mode = #tpu.pipeline_mode<synchronous>, transform_indices = @transform_2, window_bounds = array<i64: 1, 8>}, {pipeline_mode = #tpu.pipeline_mode<synchronous>, transform_indices = @transform_3, window_bounds = array<i64: 1, 8>}, {pipeline_mode = #tpu.pipeline_mode<synchronous>, transform_indices = @transform_4, window_bounds = array<i64: 1, 8>}, {pipeline_mode = #tpu.pipeline_mode<synchronous>, transform_indices = @transform_5, window_bounds = array<i64: 1, 8>}, {transform_indices = @transform_6, window_bounds = array<i64: 128, 8>}]} {
    %c0 = arith.constant 0 : index
    %c0_0 = arith.constant 0 : index
    %0 = vector.load %arg1[%c0, %c0_0] : memref<128x8xf32, #tpu.memory_space<vmem>>, vector<128x8xf32>
    %c0_1 = arith.constant 0 : index
    %c0_2 = arith.constant 0 : index
    %1 = vector.load %arg3[%c0_1, %c0_2] : memref<1x8xf32, #tpu.memory_space<vmem>>, vector<1x8xf32>
    %2 = vector.broadcast %1 : vector<1x8xf32> to vector<128x8xf32>
    %3 = arith.mulf %0, %2 : vector<128x8xf32>
    %c0_3 = arith.constant 0 : index
    %c0_4 = arith.constant 0 : index
    %4 = vector.load %arg4[%c0_3, %c0_4] : memref<1x8xf32, #tpu.memory_space<vmem>>, vector<1x8xf32>
    %5 = vector.broadcast %4 : vector<1x8xf32> to vector<128x8xf32>
    %6 = arith.addf %3, %5 : vector<128x8xf32>
    %cst = arith.constant 0.000000e+00 : f32
    %7 = vector.broadcast %cst : f32 to vector<128x8xf32>
    %8 = arith.maximumf %6, %7 : vector<128x8xf32>
    %c0_5 = arith.constant 0 : index
    %c0_6 = arith.constant 0 : index
    %9 = vector.load %arg2[%c0_5, %c0_6] : memref<128x8xf32, #tpu.memory_space<vmem>>, vector<128x8xf32>
    %c0_7 = arith.constant 0 : index
    %c0_8 = arith.constant 0 : index
    %10 = vector.load %arg5[%c0_7, %c0_8] : memref<1x8xf32, #tpu.memory_space<vmem>>, vector<1x8xf32>
    %11 = vector.broadcast %10 : vector<1x8xf32> to vector<128x8xf32>
    %12 = arith.mulf %9, %11 : vector<128x8xf32>
    %c0_9 = arith.constant 0 : index
    %c0_10 = arith.constant 0 : index
    %13 = vector.load %arg6[%c0_9, %c0_10] : memref<1x8xf32, #tpu.memory_space<vmem>>, vector<1x8xf32>
    %14 = vector.broadcast %13 : vector<1x8xf32> to vector<128x8xf32>
    %15 = arith.addf %12, %14 : vector<128x8xf32>
    %16 = arith.addf %8, %15 : vector<128x8xf32>
    %cst_11 = arith.constant 0.000000e+00 : f32
    %17 = vector.broadcast %cst_11 : f32 to vector<128x8xf32>
    %18 = arith.maximumf %16, %17 : vector<128x8xf32>
    %c0_12 = arith.constant 0 : index
    %c0_13 = arith.constant 0 : index
    %19 = vector.load %arg7[%c0_12, %c0_13] : memref<128x8xf32, #tpu.memory_space<vmem>>, vector<128x8xf32>
    tpu.vector_store %arg7[%c0_12, %c0_13], %18 {strides = array<i32>} : memref<128x8xf32, #tpu.memory_space<vmem>>, vector<128x8xf32>,
    return
  }
  func.func @transform_0(%arg0: i32) -> (i32, i32) {
    %c0_i32 = arith.constant 0 : i32
    %c0_i32_0 = arith.constant 0 : i32
    return %arg0, %c0_i32 : i32, i32
  }
  func.func @transform_1(%arg0: i32) -> (i32, i32) {
    %c0_i32 = arith.constant 0 : i32
    %c0_i32_0 = arith.constant 0 : i32
    return %arg0, %c0_i32 : i32, i32
  }
  func.func @transform_2(%arg0: i32) -> (i32, i32) {
    %c0_i32 = arith.constant 0 : i32
    %c0_i32_0 = arith.constant 0 : i32
    %c0_i32_1 = arith.constant 0 : i32
    return %c0_i32, %c0_i32_0 : i32, i32
  }
  func.func @transform_3(%arg0: i32) -> (i32, i32) {
    %c0_i32 = arith.constant 0 : i32
    %c0_i32_0 = arith.constant 0 : i32
    %c0_i32_1 = arith.constant 0 : i32
    return %c0_i32, %c0_i32_0 : i32, i32
  }
  func.func @transform_4(%arg0: i32) -> (i32, i32) {
    %c0_i32 = arith.constant 0 : i32
    %c0_i32_0 = arith.constant 0 : i32
    %c0_i32_1 = arith.constant 0 : i32
    return %c0_i32, %c0_i32_0 : i32, i32
  }
  func.func @transform_5(%arg0: i32) -> (i32, i32) {
    %c0_i32 = arith.constant 0 : i32
    %c0_i32_0 = arith.constant 0 : i32
    %c0_i32_1 = arith.constant 0 : i32
    return %c0_i32, %c0_i32_0 : i32, i32
  }
  func.func @transform_6(%arg0: i32) -> (i32, i32) {
    %c0_i32 = arith.constant 0 : i32
    %c0_i32_0 = arith.constant 0 : i32
    return %arg0, %c0_i32 : i32, i32
  }
}

</mosaic_0001>

<llo_original>
// kernel: res_block_forward.5
$region0: #{res_block_forward.5}
  #allocation0 [shape = 'u32[]', space=smem, size = 0x4, offset = 0x4, fixed_abs, tag = 'smem constant byte address 0x4 - core index']
  #allocation1 [shape = 'u32[72,128]{1,0:T(1,128)}', space=vmem, size = 0x9000, scoped, tag = 'internal scratch']
  %s0 = inlined_call_operand.vmem [shape: f32[128,8], index: 0, kind: input, shape index: {}]
  %s1 = inlined_call_operand.vmem [shape: f32[128,8], index: 1, kind: input, shape index: {}]
  %s2 = inlined_call_operand.vmem [shape: f32[1,8], index: 2, kind: input, shape index: {}]
  %s3 = inlined_call_operand.vmem [shape: f32[1,8], index: 3, kind: input, shape index: {}]
  %s4 = inlined_call_operand.vmem [shape: f32[1,8], index: 4, kind: input, shape index: {}]
  %s5 = inlined_call_operand.vmem [shape: f32[1,8], index: 5, kind: input, shape index: {}]
  %s6 = inlined_call_operand.vmem [shape: f32[128,8], index: 6, kind: output, shape index: {}]
  %s7 = sld [smem:[#allocation0]]
  $region34: #{res_block_forward.5} parent=0
    _
  %s9 = ssub.s32 1, %s7
  %s10 = scalar_select 0, %s9, %s7
  // Predicated region
  $region2: #{res_block_forward.5} parent=0 // pred_check
    _
  $region3: #{res_block_forward.5} parent=0 // pred_check_branch
    %12 = sbr.rel (0) target = $region5
  $region4: #{res_block_forward.5} parent=0 // pred_region
    _
  $region5: #{res_block_forward.5} parent=0 // pred_fallthru
    _
  // Predicated region
  $region6: #{res_block_forward.5} parent=0 // pred_check
    _
  $region7: #{res_block_forward.5} parent=0 // pred_check_branch
    %14 = sbr.rel (0) target = $region9
  $region8: #{res_block_forward.5} parent=0 // pred_region
    _
  $region9: #{res_block_forward.5} parent=0 // pred_fallthru
    _
  // Predicated region
  $region10: #{res_block_forward.5} parent=0 // pred_check
    _
  $region11: #{res_block_forward.5} parent=0 // pred_check_branch
    %16 = sbr.rel (0) target = $region13
  $region12: #{res_block_forward.5} parent=0 // pred_region
    _
  $region13: #{res_block_forward.5} parent=0 // pred_fallthru
    _
  // Predicated region
  $region14: #{res_block_forward.5} parent=0 // pred_check
    _
  $region15: #{res_block_forward.5} parent=0 // pred_check_branch
    %18 = sbr.rel (0) target = $region17
  $region16: #{res_block_forward.5} parent=0 // pred_region
    _
  $region17: #{res_block_forward.5} parent=0 // pred_fallthru
    _
  // Predicated region
  $region18: #{res_block_forward.5} parent=0 // pred_check
    _
  $region19: #{res_block_forward.5} parent=0 // pred_check_branch
    %20 = sbr.rel (0) target = $region21
  $region20: #{res_block_forward.5} parent=0 // pred_region
    _
  $region21: #{res_block_forward.5} parent=0 // pred_fallthru
    _
  // Predicated region
  $region22: #{res_block_forward.5} parent=0 // pred_check
    _
  $region23: #{res_block_forward.5} parent=0 // pred_check_branch
    %22 = sbr.rel (0) target = $region25
  $region24: #{res_block_forward.5} parent=0 // pred_region
    _
  $region25: #{res_block_forward.5} parent=0 // pred_fallthru
    _
  %v23 = vld [vmem:[%s0] sm:$0xff]
  %v24 = vld [vmem:[%s0 + $0x8] sm:$0xff]
  %v25 = vld [vmem:[%s0 + $0x10] sm:$0xff]
  %v26 = vld [vmem:[%s0 + $0x18] sm:$0xff]
  %v27 = vld [vmem:[%s0 + $0x20] sm:$0xff]
  %v28 = vld [vmem:[%s0 + $0x28] sm:$0xff]
  %v29 = vld [vmem:[%s0 + $0x30] sm:$0xff]
  %v30 = vld [vmem:[%s0 + $0x38] sm:$0xff]
  %v31 = vld [vmem:[%s0 + $0x40] sm:$0xff]
  %v32 = vld [vmem:[%s0 + $0x48] sm:$0xff]
  %v33 = vld [vmem:[%s0 + $0x50] sm:$0xff]
  %v34 = vld [vmem:[%s0 + $0x58] sm:$0xff]
  %v35 = vld [vmem:[%s0 + $0x60] sm:$0xff]
  %v36 = vld [vmem:[%s0 + $0x68] sm:$0xff]
  %v37 = vld [vmem:[%s0 + $0x70] sm:$0xff]
  %v38 = vld [vmem:[%s0 + $0x78] sm:$0xff]
  %v39 = vld [vmem:[%s2] sm:$0x1]
  %v41 = vperm.slane %v39, 0
  %v43 = vmul.f32 %v23, %v41
  %v44 = vmul.f32 %v24, %v41
  %v45 = vmul.f32 %v25, %v41
  %v46 = vmul.f32 %v26, %v41
  %v47 = vmul.f32 %v27, %v41
  %v48 = vmul.f32 %v28, %v41
  %v49 = vmul.f32 %v29, %v41
  %v50 = vmul.f32 %v30, %v41
  %v51 = vmul.f32 %v31, %v41
  %v52 = vmul.f32 %v32, %v41
  %v53 = vmul.f32 %v33, %v41
  %v54 = vmul.f32 %v34, %v41
  %v55 = vmul.f32 %v35, %v41
  %v56 = vmul.f32 %v36, %v41
  %v57 = vmul.f32 %v37, %v41
  %v58 = vmul.f32 %v38, %v41
  %v59 = vld [vmem:[%s3] sm:$0x1]
  %v61 = vperm.slane %v59, 0
  %v63 = vadd.f32 %v43, %v61
  %v64 = vadd.f32 %v44, %v61
  %v65 = vadd.f32 %v45, %v61
  %v66 = vadd.f32 %v46, %v61
  %v67 = vadd.f32 %v47, %v61
  %v68 = vadd.f32 %v48, %v61
  %v69 = vadd.f32 %v49, %v61
  %v70 = vadd.f32 %v50, %v61
  %v71 = vadd.f32 %v51, %v61
  %v72 = vadd.f32 %v52, %v61
  %v73 = vadd.f32 %v53, %v61
  %v74 = vadd.f32 %v54, %v61
  %v75 = vadd.f32 %v55, %v61
  %v76 = vadd.f32 %v56, %v61
  %v77 = vadd.f32 %v57, %v61
  %v78 = vadd.f32 %v58, %v61
  %v79 = vmax.f32 %v63, 0.0
  %v80 = vmax.f32 %v64, 0.0
  %v81 = vmax.f32 %v65, 0.0
  %v82 = vmax.f32 %v66, 0.0
  %v83 = vmax.f32 %v67, 0.0
  %v84 = vmax.f32 %v68, 0.0
  %v85 = vmax.f32 %v69, 0.0
  %v86 = vmax.f32 %v70, 0.0
  %v87 = vmax.f32 %v71, 0.0
  %v88 = vmax.f32 %v72, 0.0
  %v89 = vmax.f32 %v73, 0.0
  %v90 = vmax.f32 %v74, 0.0
  %v91 = vmax.f32 %v75, 0.0
  %v92 = vmax.f32 %v76, 0.0
  %v93 = vmax.f32 %v77, 0.0
  %v94 = vmax.f32 %v78, 0.0
  %v95 = vld [vmem:[%s1] sm:$0xff]
  %v96 = vld [vmem:[%s1 + $0x8] sm:$0xff]
  %v97 = vld [vmem:[%s1 + $0x10] sm:$0xff]
  %v98 = vld [vmem:[%s1 + $0x18] sm:$0xff]
  %v99 = vld [vmem:[%s1 + $0x20] sm:$0xff]
  %v100 = vld [vmem:[%s1 + $0x28] sm:$0xff]
  %v101 = vld [vmem:[%s1 + $0x30] sm:$0xff]
  %v102 = vld [vmem:[%s1 + $0x38] sm:$0xff]
  %v103 = vld [vmem:[%s1 + $0x40] sm:$0xff]
  %v104 = vld [vmem:[%s1 + $0x48] sm:$0xff]
  %v105 = vld [vmem:[%s1 + $0x50] sm:$0xff]
  %v106 = vld [vmem:[%s1 + $0x58] sm:$0xff]
  %v107 = vld [vmem:[%s1 + $0x60] sm:$0xff]
  %v108 = vld [vmem:[%s1 + $0x68] sm:$0xff]
  %v109 = vld [vmem:[%s1 + $0x70] sm:$0xff]
  %v110 = vld [vmem:[%s1 + $0x78] sm:$0xff]
  %v111 = vld [vmem:[%s4] sm:$0x1]
  %v113 = vperm.slane %v111, 0
  %v115 = vmul.f32 %v95, %v113
  %v116 = vmul.f32 %v96, %v113
  %v117 = vmul.f32 %v97, %v113
  %v118 = vmul.f32 %v98, %v113
  %v119 = vmul.f32 %v99, %v113
  %v120 = vmul.f32 %v100, %v113
  %v121 = vmul.f32 %v101, %v113
  %v122 = vmul.f32 %v102, %v113
  %v123 = vmul.f32 %v103, %v113
  %v124 = vmul.f32 %v104, %v113
  %v125 = vmul.f32 %v105, %v113
  %v126 = vmul.f32 %v106, %v113
  %v127 = vmul.f32 %v107, %v113
  %v128 = vmul.f32 %v108, %v113
  %v129 = vmul.f32 %v109, %v113
  %v130 = vmul.f32 %v110, %v113
  %v131 = vld [vmem:[%s5] sm:$0x1]
  %v133 = vperm.slane %v131, 0
  %v135 = vadd.f32 %v115, %v133
  %v136 = vadd.f32 %v116, %v133
  %v137 = vadd.f32 %v117, %v133
  %v138 = vadd.f32 %v118, %v133
  %v139 = vadd.f32 %v119, %v133
  %v140 = vadd.f32 %v120, %v133
  %v141 = vadd.f32 %v121, %v133
  %v142 = vadd.f32 %v122, %v133
  %v143 = vadd.f32 %v123, %v133
  %v144 = vadd.f32 %v124, %v133
  %v145 = vadd.f32 %v125, %v133
  %v146 = vadd.f32 %v126, %v133
  %v147 = vadd.f32 %v127, %v133
  %v148 = vadd.f32 %v128, %v133
  %v149 = vadd.f32 %v129, %v133
  %v150 = vadd.f32 %v130, %v133
  %v151 = vadd.f32 %v79, %v135
  %v152 = vadd.f32 %v80, %v136
  %v153 = vadd.f32 %v81, %v137
  %v154 = vadd.f32 %v82, %v138
  %v155 = vadd.f32 %v83, %v139
  %v156 = vadd.f32 %v84, %v140
  %v157 = vadd.f32 %v85, %v141
  %v158 = vadd.f32 %v86, %v142
  %v159 = vadd.f32 %v87, %v143
  %v160 = vadd.f32 %v88, %v144
  %v161 = vadd.f32 %v89, %v145
  %v162 = vadd.f32 %v90, %v146
  %v163 = vadd.f32 %v91, %v147
  %v164 = vadd.f32 %v92, %v148
  %v165 = vadd.f32 %v93, %v149
  %v166 = vadd.f32 %v94, %v150
  %v167 = vmax.f32 %v151, 0.0
  %v168 = vmax.f32 %v152, 0.0
  %v169 = vmax.f32 %v153, 0.0
  %v170 = vmax.f32 %v154, 0.0
  %v171 = vmax.f32 %v155, 0.0
  %v172 = vmax.f32 %v156, 0.0
  %v173 = vmax.f32 %v157, 0.0
  %v174 = vmax.f32 %v158, 0.0
  %v175 = vmax.f32 %v159, 0.0
  %v176 = vmax.f32 %v160, 0.0
  %v177 = vmax.f32 %v161, 0.0
  %v178 = vmax.f32 %v162, 0.0
  %v179 = vmax.f32 %v163, 0.0
  %v180 = vmax.f32 %v164, 0.0
  %v181 = vmax.f32 %v165, 0.0
  %v182 = vmax.f32 %v166, 0.0
  %vm183 = vcmask 64512
  %184 = vst.msk [vmem:[%s6] sm:$0xff] %vm183, %v167
  %185 = vst.msk [vmem:[%s6 + $0x8] sm:$0xff] %vm183, %v168
  %186 = vst.msk [vmem:[%s6 + $0x10] sm:$0xff] %vm183, %v169
  %187 = vst.msk [vmem:[%s6 + $0x18] sm:$0xff] %vm183, %v170
  %188 = vst.msk [vmem:[%s6 + $0x20] sm:$0xff] %vm183, %v171
  %189 = vst.msk [vmem:[%s6 + $0x28] sm:$0xff] %vm183, %v172
  %190 = vst.msk [vmem:[%s6 + $0x30] sm:$0xff] %vm183, %v173
  %191 = vst.msk [vmem:[%s6 + $0x38] sm:$0xff] %vm183, %v174
  %192 = vst.msk [vmem:[%s6 + $0x40] sm:$0xff] %vm183, %v175
  %193 = vst.msk [vmem:[%s6 + $0x48] sm:$0xff] %vm183, %v176
  %194 = vst.msk [vmem:[%s6 + $0x50] sm:$0xff] %vm183, %v177
  %195 = vst.msk [vmem:[%s6 + $0x58] sm:$0xff] %vm183, %v178
  %196 = vst.msk [vmem:[%s6 + $0x60] sm:$0xff] %vm183, %v179
  %197 = vst.msk [vmem:[%s6 + $0x68] sm:$0xff] %vm183, %v180
  %198 = vst.msk [vmem:[%s6 + $0x70] sm:$0xff] %vm183, %v181
  %199 = vst.msk [vmem:[%s6 + $0x78] sm:$0xff] %vm183, %v182
  // Predicated region
  $region26: #{res_block_forward.5} parent=0 // pred_check
    _
  $region27: #{res_block_forward.5} parent=0 // pred_check_branch
    %201 = sbr.rel (0) target = $region29
  $region28: #{res_block_forward.5} parent=0 // pred_region
    _
  $region29: #{res_block_forward.5} parent=0 // pred_fallthru
    _
  // Predicated region
  $region30: #{res_block_forward.5} parent=0 // pred_check
    _
  $region31: #{res_block_forward.5} parent=0 // pred_check_branch
    %203 = sbr.rel (0) target = $region33
  $region32: #{res_block_forward.5} parent=0 // pred_region
    _
  $region33: #{res_block_forward.5} parent=0 // pred_fallthru
    _

// kernel: res_block_forward.4
$region0: #{res_block_forward.4}
  #allocation0 [shape = 'u32[]', space=smem, size = 0x4, offset = 0x4, fixed_abs, tag = 'smem constant byte address 0x4 - core index']
  #allocation1 [shape = 'u32[72,128]{1,0:T(1,128)}', space=vmem, size = 0x9000, scoped, tag = 'internal scratch']
  #allocation2 [shape = 'f32[10,10,8]{2,1,0:T(8,128)}', space=vmem, size = 0x14000, scoped, tag = 'scratch operand']
  %s0 = inlined_call_operand.vmem [shape: f32[2,8,8,8], index: 0, kind: input, shape index: {}]
  %s1 = inlined_call_operand.vmem [shape: f32[1,8], index: 1, kind: input, shape index: {}]
  %s2 = inlined_call_operand.vmem [shape: f32[1,8], index: 2, kind: input, shape index: {}]
  %s3 = inlined_call_operand.vmem [shape: bf16[9,8,8], index: 3, kind: input, shape index: {}]
  %s4 = inlined_call_operand.vmem [shape: f32[2,64,8], index: 4, kind: output, shape index: {0}]
  %s5 = inlined_call_operand.vmem [shape: f32[2,8,8], index: 5, kind: output, shape index: {1}]
  %6 = xla_tuple %s4, %s5
  %s7 = sld [smem:[#allocation0]]
  $region57: #{res_block_forward.4} parent=0
    _
  %s9 = ssub.s32 1, %s7
  %s10 = scalar_select 0, %s9, %s7
  loop: start=0, step=1, limit=4
  $region2: #{res_block_forward.4} parent=0 // loop_pre_header
    _
  $region3: #{res_block_forward.4} parent=0 // loop_header
    %s12 = sphi 0, %s16
    %p13 = scmp.ge.s32.totalorder %s12, 4
    %s22 = sphi 0, %s24
    %s25 = sphi 0, %s22
    %s26 = sphi 0, %s25
    %s42 = sphi 0, %s26
    %s46 = sphi 0, %s46
    %s48 = sphi 0, %s46
    %s49 = sphi 0, %s48
    %s63 = sphi 0, %s49
    %s67 = sphi 0, %s67
    %s69 = sphi 0, %s67
    %s70 = sphi 0, %s69
    %s84 = sphi 0, %s70
    %s88 = sphi 0, %s88
    %s90 = sphi 0, %s88
    %s91 = sphi 0, %s90
    %s105 = sphi 0, %s91
    %s111 = sphi 0, %s113
    %s114 = sphi 0, %s111
    %s115 = sphi 0, %s114
    %s131 = sphi 0, %s115
    %s137 = sphi 0, %s139
    %s140 = sphi 0, %s137
    %s141 = sphi 0, %s140
    %s157 = sphi 0, %s141
  $region4: #{res_block_forward.4} parent=0 // loop_header_branch
    %15 = sbr.rel (%p13) target = $region8
  $region5: #{res_block_forward.4} parent=0 // loop_body
    %s17 = ssub.s32 %s12, 1
    %s18 = ssub.s32 %s12, 2
    %s19 = sadd.s32 %s12, 1
    %s20 = ssub.s32 %s12, %s19
    %p21 = scmp.eq.s32.totalorder %s20, 0
    %s23 = sadd.s32 %s22, 1
    %s24 = scalar_select %p21, %s22, %s23
    %p27 = pneg %p21
    %p28 = scmp.eq.s32.totalorder %s12, 1
    %p29 = por %p27, %p28
    %p30 = scmp.ne.s32.totalorder %s22, %s25
    %p31 = scmp.eq.s32.totalorder %s12, 0
    %p32 = por %p30, %p31
    %p33 = scmp.ne.s32.totalorder %s22, %s25
    %p34 = scmp.eq.s32.totalorder %s17, 1
    %p35 = por %p33, %p34
    %p36 = scmp.ne.s32.totalorder %s25, %s26
    %p37 = scmp.eq.s32.totalorder %s17, 0
    %p38 = por %p36, %p37
    %p39 = scmp.ne.s32.totalorder %s25, %s26
    %p40 = scmp.eq.s32.totalorder %s18, 1
    %p41 = por %p39, %p40
    %p43 = scmp.ne.s32.totalorder %s26, %s42
    %p44 = scmp.eq.s32.totalorder %s18, 0
    %p45 = por %p43, %p44
    %s47 = sadd.s32 %s46, 1
    %p50 = scmp.eq.s32.totalorder %s12, 1
    %p51 = scmp.ne.s32.totalorder %s46, %s48
    %p52 = scmp.eq.s32.totalorder %s12, 0
    %p53 = por %p51, %p52
    %p54 = scmp.ne.s32.totalorder %s46, %s48
    %p55 = scmp.eq.s32.totalorder %s17, 1
    %p56 = por %p54, %p55
    %p57 = scmp.ne.s32.totalorder %s48, %s49
    %p58 = scmp.eq.s32.totalorder %s17, 0
    %p59 = por %p57, %p58
    %p60 = scmp.ne.s32.totalorder %s48, %s49
    %p61 = scmp.eq.s32.totalorder %s18, 1
    %p62 = por %p60, %p61
    %p64 = scmp.ne.s32.totalorder %s49, %s63
    %p65 = scmp.eq.s32.totalorder %s18, 0
    %p66 = por %p64, %p65
    %s68 = sadd.s32 %s67, 1
    %p71 = scmp.eq.s32.totalorder %s12, 1
    %p72 = scmp.ne.s32.totalorder %s67, %s69
    %p73 = scmp.eq.s32.totalorder %s12, 0
    %p74 = por %p72, %p73
    %p75 = scmp.ne.s32.totalorder %s67, %s69
    %p76 = scmp.eq.s32.totalorder %s17, 1
    %p77 = por %p75, %p76
    %p78 = scmp.ne.s32.totalorder %s69, %s70
    %p79 = scmp.eq.s32.totalorder %s17, 0
    %p80 = por %p78, %p79
    %p81 = scmp.ne.s32.totalorder %s69, %s70
    %p82 = scmp.eq.s32.totalorder %s18, 1
    %p83 = por %p81, %p82
    %p85 = scmp.ne.s32.totalorder %s70, %s84
    %p86 = scmp.eq.s32.totalorder %s18, 0
    %p87 = por %p85, %p86
    %s89 = sadd.s32 %s88, 1
    %p92 = scmp.eq.s32.totalorder %s12, 1
    %p93 = scmp.ne.s32.totalorder %s88, %s90
    %p94 = scmp.eq.s32.totalorder %s12, 0
    %p95 = por %p93, %p94
    %p96 = scmp.ne.s32.totalorder %s88, %s90
    %p97 = scmp.eq.s32.totalorder %s17, 1
    %p98 = por %p96, %p97
    %p99 = scmp.ne.s32.totalorder %s90, %s91
    %p100 = scmp.eq.s32.totalorder %s17, 0
    %p101 = por %p99, %p100
    %p102 = scmp.ne.s32.totalorder %s90, %s91
    %p103 = scmp.eq.s32.totalorder %s18, 1
    %p104 = por %p102, %p103
    %p106 = scmp.ne.s32.totalorder %s91, %s105
    %p107 = scmp.eq.s32.totalorder %s18, 0
    %p108 = por %p106, %p107
    %s109 = ssub.s32 %s12, %s19
    %p110 = scmp.eq.s32.totalorder %s109, 0
    %s112 = sadd.s32 %s111, 1
    %s113 = scalar_select %p110, %s111, %s112
    %p116 = pneg %p110
    %p117 = scmp.eq.s32.totalorder %s12, 1
    %p118 = por %p116, %p117
    %p119 = scmp.ne.s32.totalorder %s111, %s114
    %p120 = scmp.eq.s32.totalorder %s12, 0
    %p121 = por %p119, %p120
    %p122 = scmp.ne.s32.totalorder %s111, %s114
    %p123 = scmp.eq.s32.totalorder %s17, 1
    %p124 = por %p122, %p123
    %p125 = scmp.ne.s32.totalorder %s114, %s115
    %p126 = scmp.eq.s32.totalorder %s17, 0
    %p127 = por %p125, %p126
    %p128 = scmp.ne.s32.totalorder %s114, %s115
    %p129 = scmp.eq.s32.totalorder %s18, 1
    %p130 = por %p128, %p129
    %p132 = scmp.ne.s32.totalorder %s115, %s131
    %p133 = scmp.eq.s32.totalorder %s18, 0
    %p134 = por %p132, %p133
    %s135 = ssub.s32 %s12, %s19
    %p136 = scmp.eq.s32.totalorder %s135, 0
    %s138 = sadd.s32 %s137, 1
    %s139 = scalar_select %p136, %s137, %s138
    %p142 = pneg %p136
    %p143 = scmp.eq.s32.totalorder %s12, 1
    %p144 = por %p142, %p143
    %p145 = scmp.ne.s32.totalorder %s137, %s140
    %p146 = scmp.eq.s32.totalorder %s12, 0
    %p147 = por %p145, %p146
    %p148 = scmp.ne.s32.totalorder %s137, %s140
    %p149 = scmp.eq.s32.totalorder %s17, 1
    %p150 = por %p148, %p149
    %p151 = scmp.ne.s32.totalorder %s140, %s141
    %p152 = scmp.eq.s32.totalorder %s17, 0
    %p153 = por %p151, %p152
    %p154 = scmp.ne.s32.totalorder %s140, %s141
    %p155 = scmp.eq.s32.totalorder %s18, 1
    %p156 = por %p154, %p155
    %p158 = scmp.ne.s32.totalorder %s141, %s157
    %p159 = scmp.eq.s32.totalorder %s18, 0
    %p160 = por %p158, %p159
    %p161 = scmp.le.s32.totalorder 1, %s12
    %p162 = scmp.lt.s32.totalorder %s12, 3
    %p163 = pnand %p161, %p162
    %p164 = pneg %p163
    // Predicated region
    $region9: #{res_block_forward.4} parent=5 // pred_check
      _
    $region10: #{res_block_forward.4} parent=5 // pred_check_branch
      %166 = sbr.rel (%p163) target = $region12
    $region11: #{res_block_forward.4} parent=5 // pred_region
      %s167 = ssub.s32 %s12, 1
      // Predicated region
      $region13: #{res_block_forward.4} parent=11 // pred_check
        %p168 = pneg %p59
      $region14: #{res_block_forward.4} parent=11 // pred_check_branch
        %170 = sbr.rel (%p168) target = $region16
      $region15: #{res_block_forward.4} parent=11 // pred_region
        _
      $region16: #{res_block_forward.4} parent=11 // pred_fallthru
        _
      // Predicated region
      $region17: #{res_block_forward.4} parent=11 // pred_check
        %p171 = pneg %p80
      $region18: #{res_block_forward.4} parent=11 // pred_check_branch
        %173 = sbr.rel (%p171) target = $region20
      $region19: #{res_block_forward.4} parent=11 // pred_region
        _
      $region20: #{res_block_forward.4} parent=11 // pred_fallthru
        _
      // Predicated region
      $region21: #{res_block_forward.4} parent=11 // pred_check
        %p174 = pneg %p101
      $region22: #{res_block_forward.4} parent=11 // pred_check_branch
        %176 = sbr.rel (%p174) target = $region24
      $region23: #{res_block_forward.4} parent=11 // pred_region
        _
      $region24: #{res_block_forward.4} parent=11 // pred_fallthru
        _
    $region12: #{res_block_forward.4} parent=5 // pred_fallthru
      _
    %p177 = scmp.lt.s32.totalorder %s12, 2
    // Predicated region
    $region25: #{res_block_forward.4} parent=5 // pred_check
      %p178 = pneg %p177
    $region26: #{res_block_forward.4} parent=5 // pred_check_branch
      %180 = sbr.rel (%p178) target = $region28
    $region27: #{res_block_forward.4} parent=5 // pred_region
      // Predicated region
      $region29: #{res_block_forward.4} parent=27 // pred_check
        %p181 = pneg %p32
      $region30: #{res_block_forward.4} parent=27 // pred_check_branch
        %183 = sbr.rel (%p181) target = $region32
      $region31: #{res_block_forward.4} parent=27 // pred_region
        %p184 = scmp.lt.s32.totalorder %s12, 1
        %s185 = scalar_select %p184, %s12, 1
        %s186 = smul.addr %s185, 8
        %s187 = smul.addr %s186, 8
        %s188 = scalar_lea.vmem %s0, %s187
      $region32: #{res_block_forward.4} parent=27 // pred_fallthru
        _
    $region28: #{res_block_forward.4} parent=5 // pred_fallthru
      _
    %p189 = scmp.le.s32.totalorder 1, %s12
    %p190 = scmp.lt.s32.totalorder %s12, 3
    %p191 = pnand %p189, %p190
    %p192 = pneg %p191
    // Predicated region
    $region33: #{res_block_forward.4} parent=5 // pred_check
      _
    $region34: #{res_block_forward.4} parent=5 // pred_check_branch
      %194 = sbr.rel (%p191) target = $region36
    $region35: #{res_block_forward.4} parent=5 // pred_region
      %s195 = ssub.s32 %s12, 1
      %p196 = scmp.lt.s32.totalorder %s17, 1
      %s197 = scalar_select %p196, %s17, 1
      %s198 = smul.addr %s197, 8
      %s199 = smul.addr %s198, 8
      %s200 = scalar_lea.vmem %s0, %s199
      %p201 = pneg %p38
      %p202 = pneg %p35
      %p203 = pneg %p59
      %p204 = pneg %p56
      %p205 = pneg %p80
      %p206 = pneg %p77
      %p207 = pneg %p101
      %p208 = pneg %p98
      %p209 = pneg %p127
      %p210 = pneg %p124
      %p211 = scmp.lt.s32.totalorder %s17, 1
      %s212 = scalar_select %p211, %s17, 1
      %s213 = smul.addr %s212, 8
      %s214 = smul.addr %s213, 8
      %s215 = scalar_lea.vmem %s4, %s214
      %p216 = pneg %p153
      %p217 = pneg %p150
      %p218 = scmp.lt.s32.totalorder %s17, 1
      %s219 = scalar_select %p218, %s17, 1
      %s220 = smul.addr %s219, 8
      %s221 = scalar_lea.vmem %s5, %s220
      %p222 = scmp.lt.s32.totalorder %s17, 1
      %s223 = scalar_select %p222, %s17, 1
      %s224 = smul.addr %s223, 8
      %s225 = smul.addr %s224, 8
      %s226 = scalar_lea.vmem %s0, %s225
      %p227 = scmp.lt.s32.totalorder %s17, 1
      %s228 = scalar_select %p227, %s17, 1
      %s229 = smul.addr %s228, 8
      %s230 = smul.addr %s229, 8
      %s231 = scalar_lea.vmem %s4, %s230
      %p232 = scmp.lt.s32.totalorder %s17, 1
      %s233 = scalar_select %p232, %s17, 1
      %s234 = smul.addr %s233, 8
      %s235 = scalar_lea.vmem %s5, %s234
      %v237 = vld [vmem:[%s1] sm:$0x1]
      %v238 = vld [vmem:[%s2] sm:$0x1]
      %v239 = vld [vmem:[%s226] sm:$0xff]
      %v240 = vld [vmem:[%s226 + $0x8] sm:$0xff]
      %v241 = vld [vmem:[%s226 + $0x10] sm:$0xff]
      %v242 = vld [vmem:[%s226 + $0x18] sm:$0xff]
      %v243 = vld [vmem:[%s226 + $0x20] sm:$0xff]
      %v244 = vld [vmem:[%s226 + $0x28] sm:$0xff]
      %v245 = vld [vmem:[%s226 + $0x30] sm:$0xff]
      %v246 = vld [vmem:[%s226 + $0x38] sm:$0xff]
      %v248 = vperm.slane %v237, 0
      %v250 = vmul.f32 %v239, %v248
      %v251 = vmul.f32 %v240, %v248
      %v252 = vmul.f32 %v241, %v248
      %v253 = vmul.f32 %v242, %v248
      %v254 = vmul.f32 %v243, %v248
      %v255 = vmul.f32 %v244, %v248
      %v256 = vmul.f32 %v245, %v248
      %v257 = vmul.f32 %v246, %v248
      %v259 = vperm.slane %v238, 0
      %v261 = vadd.f32 %v250, %v259
      %v262 = vadd.f32 %v251, %v259
      %v263 = vadd.f32 %v252, %v259
      %v264 = vadd.f32 %v253, %v259
      %v265 = vadd.f32 %v254, %v259
      %v266 = vadd.f32 %v255, %v259
      %v267 = vadd.f32 %v256, %v259
      %v268 = vadd.f32 %v257, %v259
      %v269 = vmax.f32 %v261, 0.0
      %v270 = vmax.f32 %v262, 0.0
      %v271 = vmax.f32 %v263, 0.0
      %v272 = vmax.f32 %v264, 0.0
      %v273 = vmax.f32 %v265, 0.0
      %v274 = vmax.f32 %v266, 0.0
      %v275 = vmax.f32 %v267, 0.0
      %v276 = vmax.f32 %v268, 0.0
      %vm277 = vcmask 64512
      %278 = vst.msk [vmem:[#allocation2] sm:$0xff] %vm277, 0.0
      %vm279 = vcmask 58368
      %280 = vst.msk [vmem:[#allocation2 + $0x8] sm:$0x3] %vm279, 0.0
      %281 = vst.msk [vmem:[#allocation2 + $0x10] sm:$0xff] %vm277, 0.0
      %282 = vst.msk [vmem:[#allocation2 + $0x18] sm:$0x3] %vm279, 0.0
      %283 = vst.msk [vmem:[#allocation2 + $0x20] sm:$0xff] %vm277, 0.0
      %284 = vst.msk [vmem:[#allocation2 + $0x28] sm:$0x3] %vm279, 0.0
      %285 = vst.msk [vmem:[#allocation2 + $0x30] sm:$0xff] %vm277, 0.0
      %286 = vst.msk [vmem:[#allocation2 + $0x38] sm:$0x3] %vm279, 0.0
      %287 = vst.msk [vmem:[#allocation2 + $0x40] sm:$0xff] %vm277, 0.0
      %288 = vst.msk [vmem:[#allocation2 + $0x48] sm:$0x3] %vm279, 0.0
      %289 = vst.msk [vmem:[#allocation2 + $0x50] sm:$0xff] %vm277, 0.0
      %290 = vst.msk [vmem:[#allocation2 + $0x58] sm:$0x3] %vm279, 0.0
      %291 = vst.msk [vmem:[#allocation2 + $0x60] sm:$0xff] %vm277, 0.0
      %292 = vst.msk [vmem:[#allocation2 + $0x68] sm:$0x3] %vm279, 0.0
      %293 = vst.msk [vmem:[#allocation2 + $0x70] sm:$0xff] %vm277, 0.0
      %294 = vst.msk [vmem:[#allocation2 + $0x78] sm:$0x3] %vm279, 0.0
      %295 = vst.msk [vmem:[#allocation2 + $0x80] sm:$0xff] %vm277, 0.0
      %296 = vst.msk [vmem:[#allocation2 + $0x88] sm:$0x3] %vm279, 0.0
      %297 = vst.msk [vmem:[#allocation2 + $0x90] sm:$0xff] %vm277, 0.0
      %298 = vst.msk [vmem:[#allocation2 + $0x98] sm:$0x3] %vm279, 0.0
      %s299 = scalar_lea.vmem [#allocation2], 16
      %300 = vst.msk [vmem:[%s299 + $0x1] sm:$0xff] %vm277, %v269
      %301 = vst.msk [vmem:[%s299 + $0x11] sm:$0xff] %vm277, %v270
      %302 = vst.msk [vmem:[%s299 + $0x21] sm:$0xff] %vm277, %v271
      %303 = vst.msk [vmem:[%s299 + $0x31] sm:$0xff] %vm277, %v272
      %304 = vst.msk [vmem:[%s299 + $0x41] sm:$0xff] %vm277, %v273
      %305 = vst.msk [vmem:[%s299 + $0x51] sm:$0xff] %vm277, %v274
      %306 = vst.msk [vmem:[%s299 + $0x61] sm:$0xff] %vm277, %v275
      %307 = vst.msk [vmem:[%s299 + $0x71] sm:$0xff] %vm277, %v276
      %v308 = vld [vmem:[#allocation2] sm:$0xff]
      %v309 = vld [vmem:[#allocation2 + $0x10] sm:$0xff]
      %v310 = vld [vmem:[#allocation2 + $0x20] sm:$0xff]
      %v311 = vld [vmem:[#allocation2 + $0x30] sm:$0xff]
      %v312 = vld [vmem:[#allocation2 + $0x40] sm:$0xff]
      %v313 = vld [vmem:[#allocation2 + $0x50] sm:$0xff]
      %v314 = vld [vmem:[#allocation2 + $0x60] sm:$0xff]
      %v315 = vld [vmem:[#allocation2 + $0x70] sm:$0xff]
      %v316 = vpack.c.bf16 %v309, %v308
      %v317 = vpack.c.bf16 %v311, %v310
      %v318 = vpack.c.bf16 %v313, %v312
      %v319 = vpack.c.bf16 %v315, %v314
      %v320 = vld [vmem:[%s3] sm:$0xf]
      %v321 = vld [vmem:[#allocation2 + $0x1] sm:$0xff]
      %v322 = vld [vmem:[#allocation2 + $0x11] sm:$0xff]
      %v323 = vld [vmem:[#allocation2 + $0x21] sm:$0xff]
      %v324 = vld [vmem:[#allocation2 + $0x31] sm:$0xff]
      %v325 = vld [vmem:[#allocation2 + $0x41] sm:$0xff]
      %v326 = vld [vmem:[#allocation2 + $0x51] sm:$0xff]
      %v327 = vld [vmem:[#allocation2 + $0x61] sm:$0xff]
      %v328 = vld [vmem:[#allocation2 + $0x71] sm:$0xff]
      %v329 = vpack.c.bf16 %v322, %v321
      %v330 = vpack.c.bf16 %v324, %v323
      %v331 = vpack.c.bf16 %v326, %v325
      %v332 = vpack.c.bf16 %v328, %v327
      %s333 = scalar_lea.vmem %s3, 4
      %v334 = vld [vmem:[%s333] sm:$0xf]
      %v336 = vsel %vm277, %v329, 0
      %v339 = vsel %vm277, %v330, 0
      %v342 = vsel %vm277, %v331, 0
      %v345 = vsel %vm277, %v332, 0
      %vm347 = vcmask 1043456
      %v349 = vsel %vm347, %v334, 0
      %351 = vmatpush.bf16.msra.mxu0 0
      %352 = vmatpush.bf16.msra.mxu0 0
      %353 = vmatpush.bf16.msra.mxu0 0
      %354 = vmatpush.bf16.msra.mxu0 0
      %355 = vmatpush.bf16.msra.mxu0 0
      %356 = vmatpush.bf16.msra.mxu0 0
      %357 = vmatpush.bf16.msra.mxu0 0
      %358 = vmatpush.bf16.msra.mxu0 %v349
      %359 = vmatmul.bf16.gmra.mxu0 %v336
      %v360 = vpop.f32.mrf.mxu0
      %v361 = vadd.f32 0.0, %v360
      %v362 = vpop.f32.mrf.mxu0
      %v363 = vadd.f32 0.0, %v362
      %364 = vmatmul.bf16.gmra.mxu0 %v339
      %v365 = vpop.f32.mrf.mxu0
      %v366 = vadd.f32 0.0, %v365
      %v367 = vpop.f32.mrf.mxu0
      %v368 = vadd.f32 0.0, %v367
      %369 = vmatmul.bf16.gmra.mxu0 %v342
      %v370 = vpop.f32.mrf.mxu0
      %v371 = vadd.f32 0.0, %v370
      %v372 = vpop.f32.mrf.mxu0
      %v373 = vadd.f32 0.0, %v372
      %374 = vmatmul.bf16.gmra.mxu0 %v345
      %v375 = vpop.f32.mrf.mxu0
      %v376 = vadd.f32 0.0, %v375
      %v377 = vpop.f32.mrf.mxu0
      %v378 = vadd.f32 0.0, %v377
      %379 = vdwg.mxu0
      %v381 = vsel %vm277, %v316, 0
      %v384 = vsel %vm277, %v317, 0
      %v387 = vsel %vm277, %v318, 0
      %v390 = vsel %vm277, %v319, 0
      %v393 = vsel %vm347, %v320, 0
      %395 = vmatpush.bf16.msra.mxu0 0
      %396 = vmatpush.bf16.msra.mxu0 0
      %397 = vmatpush.bf16.msra.mxu0 0
      %398 = vmatpush.bf16.msra.mxu0 0
      %399 = vmatpush.bf16.msra.mxu0 0
      %400 = vmatpush.bf16.msra.mxu0 0
      %401 = vmatpush.bf16.msra.mxu0 0
      %402 = vmatpush.bf16.msra.mxu0 %v393
      %403 = vmatmul.bf16.gmra.mxu0 %v381
      %v404 = vpop.f32.mrf.mxu0
      %v405 = vadd.f32 %v361, %v404
      %v406 = vpop.f32.mrf.mxu0
      %v407 = vadd.f32 %v363, %v406
      %408 = vmatmul.bf16.gmra.mxu0 %v384
      %v409 = vpop.f32.mrf.mxu0
      %v410 = vadd.f32 %v366, %v409
      %v411 = vpop.f32.mrf.mxu0
      %v412 = vadd.f32 %v368, %v411
      %413 = vmatmul.bf16.gmra.mxu0 %v387
      %v414 = vpop.f32.mrf.mxu0
      %v415 = vadd.f32 %v371, %v414
      %v416 = vpop.f32.mrf.mxu0
      %v417 = vadd.f32 %v373, %v416
      %418 = vmatmul.bf16.gmra.mxu0 %v390
      %v419 = vpop.f32.mrf.mxu0
      %v420 = vadd.f32 %v376, %v419
      %v421 = vpop.f32.mrf.mxu0
      %v422 = vadd.f32 %v378, %v421
      %423 = vdwg.mxu0
      %v424 = vld [vmem:[#allocation2 + $0x2] sm:$0xff]
      %v425 = vld [vmem:[#allocation2 + $0x12] sm:$0xff]
      %v426 = vld [vmem:[#allocation2 + $0x22] sm:$0xff]
      %v427 = vld [vmem:[#allocation2 + $0x32] sm:$0xff]
      %v428 = vld [vmem:[#allocation2 + $0x42] sm:$0xff]
      %v429 = vld [vmem:[#allocation2 + $0x52] sm:$0xff]
      %v430 = vld [vmem:[#allocation2 + $0x62] sm:$0xff]
      %v431 = vld [vmem:[#allocation2 + $0x72] sm:$0xff]
      %v432 = vpack.c.bf16 %v425, %v424
      %v433 = vpack.c.bf16 %v427, %v426
      %v434 = vpack.c.bf16 %v429, %v428
      %v435 = vpack.c.bf16 %v431, %v430
      %s436 = scalar_lea.vmem %s3, 8
      %v437 = vld [vmem:[%s436] sm:$0xf]
      %v439 = vsel %vm277, %v432, 0
      %v442 = vsel %vm277, %v433, 0
      %v445 = vsel %vm277, %v434, 0
      %v448 = vsel %vm277, %v435, 0
      %v451 = vsel %vm347, %v437, 0
      %453 = vmatpush.bf16.msra.mxu0 0
      %454 = vmatpush.bf16.msra.mxu0 0
      %455 = vmatpush.bf16.msra.mxu0 0
      %456 = vmatpush.bf16.msra.mxu0 0
      %457 = vmatpush.bf16.msra.mxu0 0
      %458 = vmatpush.bf16.msra.mxu0 0
      %459 = vmatpush.bf16.msra.mxu0 0
      %460 = vmatpush.bf16.msra.mxu0 %v451
      %461 = vmatmul.bf16.gmra.mxu0 %v439
      %v462 = vpop.f32.mrf.mxu0
      %v463 = vadd.f32 0.0, %v462
      %v464 = vpop.f32.mrf.mxu0
      %v465 = vadd.f32 0.0, %v464
      %466 = vmatmul.bf16.gmra.mxu0 %v442
      %v467 = vpop.f32.mrf.mxu0
      %v468 = vadd.f32 0.0, %v467
      %v469 = vpop.f32.mrf.mxu0
      %v470 = vadd.f32 0.0, %v469
      %471 = vmatmul.bf16.gmra.mxu0 %v445
      %v472 = vpop.f32.mrf.mxu0
      %v473 = vadd.f32 0.0, %v472
      %v474 = vpop.f32.mrf.mxu0
      %v475 = vadd.f32 0.0, %v474
      %476 = vmatmul.bf16.gmra.mxu0 %v448
      %v477 = vpop.f32.mrf.mxu0
      %v478 = vadd.f32 0.0, %v477
      %v479 = vpop.f32.mrf.mxu0
      %v480 = vadd.f32 0.0, %v479
      %481 = vdwg.mxu0
      %v482 = vadd.f32 %v405, %v463
      %v483 = vadd.f32 %v407, %v465
      %v484 = vadd.f32 %v410, %v468
      %v485 = vadd.f32 %v412, %v470
      %v486 = vadd.f32 %v415, %v473
      %v487 = vadd.f32 %v417, %v475
      %v488 = vadd.f32 %v420, %v478
      %v489 = vadd.f32 %v422, %v480
      %v490 = vld [vmem:[%s299] sm:$0xff]
      %v491 = vld [vmem:[%s299 + $0x10] sm:$0xff]
      %v492 = vld [vmem:[%s299 + $0x20] sm:$0xff]
      %v493 = vld [vmem:[%s299 + $0x30] sm:$0xff]
      %v494 = vld [vmem:[%s299 + $0x40] sm:$0xff]
      %v495 = vld [vmem:[%s299 + $0x50] sm:$0xff]
      %v496 = vld [vmem:[%s299 + $0x60] sm:$0xff]
      %v497 = vld [vmem:[%s299 + $0x70] sm:$0xff]
      %v498 = vpack.c.bf16 %v491, %v490
      %v499 = vpack.c.bf16 %v493, %v492
      %v500 = vpack.c.bf16 %v495, %v494
      %v501 = vpack.c.bf16 %v497, %v496
      %s502 = scalar_lea.vmem %s3, 12
      %v503 = vld [vmem:[%s502] sm:$0xf]
      %v505 = vsel %vm277, %v498, 0
      %v508 = vsel %vm277, %v499, 0
      %v511 = vsel %vm277, %v500, 0
      %v514 = vsel %vm277, %v501, 0
      %v517 = vsel %vm347, %v503, 0
      %519 = vmatpush.bf16.msra.mxu0 0
      %520 = vmatpush.bf16.msra.mxu0 0
      %521 = vmatpush.bf16.msra.mxu0 0
      %522 = vmatpush.bf16.msra.mxu0 0
      %523 = vmatpush.bf16.msra.mxu0 0
      %524 = vmatpush.bf16.msra.mxu0 0
      %525 = vmatpush.bf16.msra.mxu0 0
      %526 = vmatpush.bf16.msra.mxu0 %v517
      %527 = vmatmul.bf16.gmra.mxu0 %v505
      %v528 = vpop.f32.mrf.mxu0
      %v529 = vadd.f32 0.0, %v528
      %v530 = vpop.f32.mrf.mxu0
      %v531 = vadd.f32 0.0, %v530
      %532 = vmatmul.bf16.gmra.mxu0 %v508
      %v533 = vpop.f32.mrf.mxu0
      %v534 = vadd.f32 0.0, %v533
      %v535 = vpop.f32.mrf.mxu0
      %v536 = vadd.f32 0.0, %v535
      %537 = vmatmul.bf16.gmra.mxu0 %v511
      %v538 = vpop.f32.mrf.mxu0
      %v539 = vadd.f32 0.0, %v538
      %v540 = vpop.f32.mrf.mxu0
      %v541 = vadd.f32 0.0, %v540
      %542 = vmatmul.bf16.gmra.mxu0 %v514
      %v543 = vpop.f32.mrf.mxu0
      %v544 = vadd.f32 0.0, %v543
      %v545 = vpop.f32.mrf.mxu0
      %v546 = vadd.f32 0.0, %v545
      %547 = vdwg.mxu0
      %v548 = vadd.f32 %v482, %v529
      %v549 = vadd.f32 %v483, %v531
      %v550 = vadd.f32 %v484, %v534
      %v551 = vadd.f32 %v485, %v536
      %v552 = vadd.f32 %v486, %v539
      %v553 = vadd.f32 %v487, %v541
      %v554 = vadd.f32 %v488, %v544
      %v555 = vadd.f32 %v489, %v546
      %v556 = vld [vmem:[%s299 + $0x1] sm:$0xff]
      %v557 = vld [vmem:[%s299 + $0x11] sm:$0xff]
      %v558 = vld [vmem:[%s299 + $0x21] sm:$0xff]
      %v559 = vld [vmem:[%s299 + $0x31] sm:$0xff]
      %v560 = vld [vmem:[%s299 + $0x41] sm:$0xff]
      %v561 = vld [vmem:[%s299 + $0x51] sm:$0xff]
      %v562 = vld [vmem:[%s299 + $0x61] sm:$0xff]
      %v563 = vld [vmem:[%s299 + $0x71] sm:$0xff]
      %v564 = vpack.c.bf16 %v557, %v556
      %v565 = vpack.c.bf16 %v559, %v558
      %v566 = vpack.c.bf16 %v561, %v560
      %v567 = vpack.c.bf16 %v563, %v562
      %s568 = scalar_lea.vmem %s3, 16
      %v569 = vld [vmem:[%s568] sm:$0xf]
      %v571 = vsel %vm277, %v564, 0
      %v574 = vsel %vm277, %v565, 0
      %v577 = vsel %vm277, %v566, 0
      %v580 = vsel %vm277, %v567, 0
      %v583 = vsel %vm347, %v569, 0
      %585 = vmatpush.bf16.msra.mxu0 0
      %586 = vmatpush.bf16.msra.mxu0 0
      %587 = vmatpush.bf16.msra.mxu0 0
      %588 = vmatpush.bf16.msra.mxu0 0
      %589 = vmatpush.bf16.msra.mxu0 0
      %590 = vmatpush.bf16.msra.mxu0 0
      %591 = vmatpush.bf16.msra.mxu0 0
      %592 = vmatpush.bf16.msra.mxu0 %v583
      %593 = vmatmul.bf16.gmra.mxu0 %v571
      %v594 = vpop.f32.mrf.mxu0
      %v595 = vadd.f32 0.0, %v594
      %v596 = vpop.f32.mrf.mxu0
      %v597 = vadd.f32 0.0, %v596
      %598 = vmatmul.bf16.gmra.mxu0 %v574
      %v599 = vpop.f32.mrf.mxu0
      %v600 = vadd.f32 0.0, %v599
      %v601 = vpop.f32.mrf.mxu0
      %v602 = vadd.f32 0.0, %v601
      %603 = vmatmul.bf16.gmra.mxu0 %v577
      %v604 = vpop.f32.mrf.mxu0
      %v605 = vadd.f32 0.0, %v604
      %v606 = vpop.f32.mrf.mxu0
      %v607 = vadd.f32 0.0, %v606
      %608 = vmatmul.bf16.gmra.mxu0 %v580
      %v609 = vpop.f32.mrf.mxu0
      %v610 = vadd.f32 0.0, %v609
      %v611 = vpop.f32.mrf.mxu0
      %v612 = vadd.f32 0.0, %v611
      %613 = vdwg.mxu0
      %v614 = vadd.f32 %v548, %v595
      %v615 = vadd.f32 %v549, %v597
      %v616 = vadd.f32 %v550, %v600
      %v617 = vadd.f32 %v551, %v602
      %v618 = vadd.f32 %v552, %v605
      %v619 = vadd.f32 %v553, %v607
      %v620 = vadd.f32 %v554, %v610
      %v621 = vadd.f32 %v555, %v612
      %v622 = vld [vmem:[%s299 + $0x2] sm:$0xff]
      %v623 = vld [vmem:[%s299 + $0x12] sm:$0xff]
      %v624 = vld [vmem:[%s299 + $0x22] sm:$0xff]
      %v625 = vld [vmem:[%s299 + $0x32] sm:$0xff]
      %v626 = vld [vmem:[%s299 + $0x42] sm:$0xff]
      %v627 = vld [vmem:[%s299 + $0x52] sm:$0xff]
      %v628 = vld [vmem:[%s299 + $0x62] sm:$0xff]
      %v629 = vld [vmem:[%s299 + $0x72] sm:$0xff]
      %v630 = vpack.c.bf16 %v623, %v622
      %v631 = vpack.c.bf16 %v625, %v624
      %v632 = vpack.c.bf16 %v627, %v626
      %v633 = vpack.c.bf16 %v629, %v628
      %s634 = scalar_lea.vmem %s3, 20
      %v635 = vld [vmem:[%s634] sm:$0xf]
      %v637 = vsel %vm277, %v630, 0
      %v640 = vsel %vm277, %v631, 0
      %v643 = vsel %vm277, %v632, 0
      %v646 = vsel %vm277, %v633, 0
      %v649 = vsel %vm347, %v635, 0
      %651 = vmatpush.bf16.msra.mxu0 0
      %652 = vmatpush.bf16.msra.mxu0 0
      %653 = vmatpush.bf16.msra.mxu0 0
      %654 = vmatpush.bf16.msra.mxu0 0
      %655 = vmatpush.bf16.msra.mxu0 0
      %656 = vmatpush.bf16.msra.mxu0 0
      %657 = vmatpush.bf16.msra.mxu0 0
      %658 = vmatpush.bf16.msra.mxu0 %v649
      %659 = vmatmul.bf16.gmra.mxu0 %v637
      %v660 = vpop.f32.mrf.mxu0
      %v661 = vadd.f32 0.0, %v660
      %v662 = vpop.f32.mrf.mxu0
      %v663 = vadd.f32 0.0, %v662
      %664 = vmatmul.bf16.gmra.mxu0 %v640
      %v665 = vpop.f32.mrf.mxu0
      %v666 = vadd.f32 0.0, %v665
      %v667 = vpop.f32.mrf.mxu0
      %v668 = vadd.f32 0.0, %v667
      %669 = vmatmul.bf16.gmra.mxu0 %v643
      %v670 = vpop.f32.mrf.mxu0
      %v671 = vadd.f32 0.0, %v670
      %v672 = vpop.f32.mrf.mxu0
      %v673 = vadd.f32 0.0, %v672
      %674 = vmatmul.bf16.gmra.mxu0 %v646
      %v675 = vpop.f32.mrf.mxu0
      %v676 = vadd.f32 0.0, %v675
      %v677 = vpop.f32.mrf.mxu0
      %v678 = vadd.f32 0.0, %v677
      %679 = vdwg.mxu0
      %v680 = vadd.f32 %v614, %v661
      %v681 = vadd.f32 %v615, %v663
      %v682 = vadd.f32 %v616, %v666
      %v683 = vadd.f32 %v617, %v668
      %v684 = vadd.f32 %v618, %v671
      %v685 = vadd.f32 %v619, %v673
      %v686 = vadd.f32 %v620, %v676
      %v687 = vadd.f32 %v621, %v678
      %s688 = scalar_lea.vmem [#allocation2], 32
      %v689 = vld [vmem:[%s688] sm:$0xff]
      %v690 = vld [vmem:[%s688 + $0x10] sm:$0xff]
      %v691 = vld [vmem:[%s688 + $0x20] sm:$0xff]
      %v692 = vld [vmem:[%s688 + $0x30] sm:$0xff]
      %v693 = vld [vmem:[%s688 + $0x40] sm:$0xff]
      %v694 = vld [vmem:[%s688 + $0x50] sm:$0xff]
      %v695 = vld [vmem:[%s688 + $0x60] sm:$0xff]
      %v696 = vld [vmem:[%s688 + $0x70] sm:$0xff]
      %v697 = vpack.c.bf16 %v690, %v689
      %v698 = vpack.c.bf16 %v692, %v691
      %v699 = vpack.c.bf16 %v694, %v693
      %v700 = vpack.c.bf16 %v696, %v695
      %s701 = scalar_lea.vmem %s3, 24
      %v702 = vld [vmem:[%s701] sm:$0xf]
      %v704 = vsel %vm277, %v697, 0
      %v707 = vsel %vm277, %v698, 0
      %v710 = vsel %vm277, %v699, 0
      %v713 = vsel %vm277, %v700, 0
      %v716 = vsel %vm347, %v702, 0
      %718 = vmatpush.bf16.msra.mxu0 0
      %719 = vmatpush.bf16.msra.mxu0 0
      %720 = vmatpush.bf16.msra.mxu0 0
      %721 = vmatpush.bf16.msra.mxu0 0
      %722 = vmatpush.bf16.msra.mxu0 0
      %723 = vmatpush.bf16.msra.mxu0 0
      %724 = vmatpush.bf16.msra.mxu0 0
      %725 = vmatpush.bf16.msra.mxu0 %v716
      %726 = vmatmul.bf16.gmra.mxu0 %v704
      %v727 = vpop.f32.mrf.mxu0
      %v728 = vadd.f32 0.0, %v727
      %v729 = vpop.f32.mrf.mxu0
      %v730 = vadd.f32 0.0, %v729
      %731 = vmatmul.bf16.gmra.mxu0 %v707
      %v732 = vpop.f32.mrf.mxu0
      %v733 = vadd.f32 0.0, %v732
      %v734 = vpop.f32.mrf.mxu0
      %v735 = vadd.f32 0.0, %v734
      %736 = vmatmul.bf16.gmra.mxu0 %v710
      %v737 = vpop.f32.mrf.mxu0
      %v738 = vadd.f32 0.0, %v737
      %v739 = vpop.f32.mrf.mxu0
      %v740 = vadd.f32 0.0, %v739
      %741 = vmatmul.bf16.gmra.mxu0 %v713
      %v742 = vpop.f32.mrf.mxu0
      %v743 = vadd.f32 0.0, %v742
      %v744 = vpop.f32.mrf.mxu0
      %v745 = vadd.f32 0.0, %v744
      %746 = vdwg.mxu0
      %v747 = vadd.f32 %v680, %v728
      %v748 = vadd.f32 %v681, %v730
      %v749 = vadd.f32 %v682, %v733
      %v750 = vadd.f32 %v683, %v735
      %v751 = vadd.f32 %v684, %v738
      %v752 = vadd.f32 %v685, %v740
      %v753 = vadd.f32 %v686, %v743
      %v754 = vadd.f32 %v687, %v745
      %v755 = vld [vmem:[%s688 + $0x1] sm:$0xff]
      %v756 = vld [vmem:[%s688 + $0x11] sm:$0xff]
      %v757 = vld [vmem:[%s688 + $0x21] sm:$0xff]
      %v758 = vld [vmem:[%s688 + $0x31] sm:$0xff]
      %v759 = vld [vmem:[%s688 + $0x41] sm:$0xff]
      %v760 = vld [vmem:[%s688 + $0x51] sm:$0xff]
      %v761 = vld [vmem:[%s688 + $0x61] sm:$0xff]
      %v762 = vld [vmem:[%s688 + $0x71] sm:$0xff]
      %v763 = vpack.c.bf16 %v756, %v755
      %v764 = vpack.c.bf16 %v758, %v757
      %v765 = vpack.c.bf16 %v760, %v759
      %v766 = vpack.c.bf16 %v762, %v761
      %s767 = scalar_lea.vmem %s3, 28
      %v768 = vld [vmem:[%s767] sm:$0xf]
      %v770 = vsel %vm277, %v763, 0
      %v773 = vsel %vm277, %v764, 0
      %v776 = vsel %vm277, %v765, 0
      %v779 = vsel %vm277, %v766, 0
      %v782 = vsel %vm347, %v768, 0
      %784 = vmatpush.bf16.msra.mxu0 0
      %785 = vmatpush.bf16.msra.mxu0 0
      %786 = vmatpush.bf16.msra.mxu0 0
      %787 = vmatpush.bf16.msra.mxu0 0
      %788 = vmatpush.bf16.msra.mxu0 0
      %789 = vmatpush.bf16.msra.mxu0 0
      %790 = vmatpush.bf16.msra.mxu0 0
      %791 = vmatpush.bf16.msra.mxu0 %v782
      %792 = vmatmul.bf16.gmra.mxu0 %v770
      %v793 = vpop.f32.mrf.mxu0
      %v794 = vadd.f32 0.0, %v793
      %v795 = vpop.f32.mrf.mxu0
      %v796 = vadd.f32 0.0, %v795
      %797 = vmatmul.bf16.gmra.mxu0 %v773
      %v798 = vpop.f32.mrf.mxu0
      %v799 = vadd.f32 0.0, %v798
      %v800 = vpop.f32.mrf.mxu0
      %v801 = vadd.f32 0.0, %v800
      %802 = vmatmul.bf16.gmra.mxu0 %v776
      %v803 = vpop.f32.mrf.mxu0
      %v804 = vadd.f32 0.0, %v803
      %v805 = vpop.f32.mrf.mxu0
      %v806 = vadd.f32 0.0, %v805
      %807 = vmatmul.bf16.gmra.mxu0 %v779
      %v808 = vpop.f32.mrf.mxu0
      %v809 = vadd.f32 0.0, %v808
      %v810 = vpop.f32.mrf.mxu0
      %v811 = vadd.f32 0.0, %v810
      %812 = vdwg.mxu0
      %v813 = vadd.f32 %v747, %v794
      %v814 = vadd.f32 %v748, %v796
      %v815 = vadd.f32 %v749, %v799
      %v816 = vadd.f32 %v750, %v801
      %v817 = vadd.f32 %v751, %v804
      %v818 = vadd.f32 %v752, %v806
      %v819 = vadd.f32 %v753, %v809
      %v820 = vadd.f32 %v754, %v811
      %v821 = vld [vmem:[%s688 + $0x2] sm:$0xff]
      %v822 = vld [vmem:[%s688 + $0x12] sm:$0xff]
      %v823 = vld [vmem:[%s688 + $0x22] sm:$0xff]
      %v824 = vld [vmem:[%s688 + $0x32] sm:$0xff]
      %v825 = vld [vmem:[%s688 + $0x42] sm:$0xff]
      %v826 = vld [vmem:[%s688 + $0x52] sm:$0xff]
      %v827 = vld [vmem:[%s688 + $0x62] sm:$0xff]
      %v828 = vld [vmem:[%s688 + $0x72] sm:$0xff]
      %v829 = vpack.c.bf16 %v822, %v821
      %v830 = vpack.c.bf16 %v824, %v823
      %v831 = vpack.c.bf16 %v826, %v825
      %v832 = vpack.c.bf16 %v828, %v827
      %s833 = scalar_lea.vmem %s3, 32
      %v834 = vld [vmem:[%s833] sm:$0xf]
      %v836 = vsel %vm277, %v829, 0
      %v839 = vsel %vm277, %v830, 0
      %v842 = vsel %vm277, %v831, 0
      %v845 = vsel %vm277, %v832, 0
      %v848 = vsel %vm347, %v834, 0
      %850 = vmatpush.bf16.msra.mxu0 0
      %851 = vmatpush.bf16.msra.mxu0 0
      %852 = vmatpush.bf16.msra.mxu0 0
      %853 = vmatpush.bf16.msra.mxu0 0
      %854 = vmatpush.bf16.msra.mxu0 0
      %855 = vmatpush.bf16.msra.mxu0 0
      %856 = vmatpush.bf16.msra.mxu0 0
      %857 = vmatpush.bf16.msra.mxu0 %v848
      %858 = vmatmul.bf16.gmra.mxu0 %v836
      %v859 = vpop.f32.mrf.mxu0
      %v860 = vadd.f32 0.0, %v859
      %v861 = vpop.f32.mrf.mxu0
      %v862 = vadd.f32 0.0, %v861
      %863 = vmatmul.bf16.gmra.mxu0 %v839
      %v864 = vpop.f32.mrf.mxu0
      %v865 = vadd.f32 0.0, %v864
      %v866 = vpop.f32.mrf.mxu0
      %v867 = vadd.f32 0.0, %v866
      %868 = vmatmul.bf16.gmra.mxu0 %v842
      %v869 = vpop.f32.mrf.mxu0
      %v870 = vadd.f32 0.0, %v869
      %v871 = vpop.f32.mrf.mxu0
      %v872 = vadd.f32 0.0, %v871
      %873 = vmatmul.bf16.gmra.mxu0 %v845
      %v874 = vpop.f32.mrf.mxu0
      %v875 = vadd.f32 0.0, %v874
      %v876 = vpop.f32.mrf.mxu0
      %v877 = vadd.f32 0.0, %v876
      %878 = vdwg.mxu0
      %v879 = vadd.f32 %v813, %v860
      %v880 = vadd.f32 %v814, %v862
      %v881 = vadd.f32 %v815, %v865
      %v882 = vadd.f32 %v816, %v867
      %v883 = vadd.f32 %v817, %v870
      %v884 = vadd.f32 %v818, %v872
      %v885 = vadd.f32 %v819, %v875
      %v886 = vadd.f32 %v820, %v877
      %887 = vst.msk [vmem:[%s231] sm:$0xff] %vm277, %v879
      %888 = vst.msk [vmem:[%s231 + $0x8] sm:$0xff] %vm277, %v880
      %889 = vst.msk [vmem:[%s231 + $0x10] sm:$0xff] %vm277, %v881
      %890 = vst.msk [vmem:[%s231 + $0x18] sm:$0xff] %vm277, %v882
      %891 = vst.msk [vmem:[%s231 + $0x20] sm:$0xff] %vm277, %v883
      %892 = vst.msk [vmem:[%s231 + $0x28] sm:$0xff] %vm277, %v884
      %893 = vst.msk [vmem:[%s231 + $0x30] sm:$0xff] %vm277, %v885
      %894 = vst.msk [vmem:[%s231 + $0x38] sm:$0xff] %vm277, %v886
      %v895 = vsel %vm277, %v879, 0.0
      %v896 = vsel %vm277, %v880, 0.0
      %v897 = vadd.f32 %v895, %v896
      %v898 = vsel %vm277, %v881, 0.0
      %v899 = vadd.f32 %v897, %v898
      %v900 = vsel %vm277, %v882, 0.0
      %v901 = vadd.f32 %v899, %v900
      %v902 = vsel %vm277, %v883, 0.0
      %v903 = vadd.f32 %v901, %v902
      %v904 = vsel %vm277, %v884, 0.0
      %v905 = vadd.f32 %v903, %v904
      %v906 = vsel %vm277, %v885, 0.0
      %v907 = vadd.f32 %v905, %v906
      %v908 = vsel %vm277, %v886, 0.0
      %v909 = vadd.f32 %v907, %v908
      %v910 = vrot.slane %v909, 4
      %v911 = vadd.f32 %v909, %v910
      %v912 = vrot.slane %v911, 2
      %v913 = vadd.f32 %v911, %v912
      %v914 = vrot.slane %v913, 1
      %v915 = vadd.f32 %v913, %v914
      %vm916 = vcmask 57344
      %917 = vst.msk [vmem:[%s235] sm:$0x1] %vm916, %v915
      %v918 = vmul.f32 %v879, %v879
      %v919 = vmul.f32 %v880, %v880
      %v920 = vmul.f32 %v881, %v881
      %v921 = vmul.f32 %v882, %v882
      %v922 = vmul.f32 %v883, %v883
      %v923 = vmul.f32 %v884, %v884
      %v924 = vmul.f32 %v885, %v885
      %v925 = vmul.f32 %v886, %v886
      %v926 = vsel %vm277, %v918, 0.0
      %v927 = vsel %vm277, %v919, 0.0
      %v928 = vadd.f32 %v926, %v927
      %v929 = vsel %vm277, %v920, 0.0
      %v930 = vadd.f32 %v928, %v929
      %v931 = vsel %vm277, %v921, 0.0
      %v932 = vadd.f32 %v930, %v931
      %v933 = vsel %vm277, %v922, 0.0
      %v934 = vadd.f32 %v932, %v933
      %v935 = vsel %vm277, %v923, 0.0
      %v936 = vadd.f32 %v934, %v935
      %v937 = vsel %vm277, %v924, 0.0
      %v938 = vadd.f32 %v936, %v937
      %v939 = vsel %vm277, %v925, 0.0
      %v940 = vadd.f32 %v938, %v939
      %v941 = vrot.slane %v940, 4
      %v942 = vadd.f32 %v940, %v941
      %v943 = vrot.slane %v942, 2
      %v944 = vadd.f32 %v942, %v943
      %v945 = vrot.slane %v944, 1
      %v946 = vadd.f32 %v944, %v945
      %947 = vst.msk [vmem:[%s235 + $0x1] sm:$0x1] %vm916, %v946
      %vm948 = vcmask 62464
      %949 = vst.msk [vmem:[%s235 + $0x2] sm:$0x3f] %vm948, 0.0
      %p950 = scmp.lt.s32.totalorder %s17, 1
      %s951 = scalar_select %p950, %s17, 1
      %s952 = smul.addr %s951, 8
      %s953 = smul.addr %s952, 8
      %s954 = scalar_lea.vmem %s4, %s953
      %p955 = scmp.lt.s32.totalorder %s17, 1
      %s956 = scalar_select %p955, %s17, 1
      %s957 = smul.addr %s956, 8
      %s958 = scalar_lea.vmem %s5, %s957
      // Predicated region
      $region37: #{res_block_forward.4} parent=35 // pred_check
        %p959 = pneg %p124
      $region38: #{res_block_forward.4} parent=35 // pred_check_branch
        %961 = sbr.rel (%p959) target = $region40
      $region39: #{res_block_forward.4} parent=35 // pred_region
        _
      $region40: #{res_block_forward.4} parent=35 // pred_fallthru
        _
      // Predicated region
      $region41: #{res_block_forward.4} parent=35 // pred_check
        %p962 = pneg %p150
      $region42: #{res_block_forward.4} parent=35 // pred_check_branch
        %964 = sbr.rel (%p962) target = $region44
      $region43: #{res_block_forward.4} parent=35 // pred_region
        _
      $region44: #{res_block_forward.4} parent=35 // pred_fallthru
        _
    $region36: #{res_block_forward.4} parent=5 // pred_fallthru
      _
    %p965 = scmp.le.s32.totalorder 2, %s12
    // Predicated region
    $region45: #{res_block_forward.4} parent=5 // pred_check
      %p966 = pneg %p965
    $region46: #{res_block_forward.4} parent=5 // pred_check_branch
      %968 = sbr.rel (%p966) target = $region48
    $region47: #{res_block_forward.4} parent=5 // pred_region
      %s969 = ssub.s32 %s12, 2
      // Predicated region
      $region49: #{res_block_forward.4} parent=47 // pred_check
        %p970 = pneg %p130
      $region50: #{res_block_forward.4} parent=47 // pred_check_branch
        %972 = sbr.rel (%p970) target = $region52
      $region51: #{res_block_forward.4} parent=47 // pred_region
        %p973 = scmp.lt.s32.totalorder %s18, 1
        %s974 = scalar_select %p973, %s18, 1
        %s975 = smul.addr %s974, 8
        %s976 = smul.addr %s975, 8
        %s977 = scalar_lea.vmem %s4, %s976
      $region52: #{res_block_forward.4} parent=47 // pred_fallthru
        _
      // Predicated region
      $region53: #{res_block_forward.4} parent=47 // pred_check
        %p978 = pneg %p156
      $region54: #{res_block_forward.4} parent=47 // pred_check_branch
        %980 = sbr.rel (%p978) target = $region56
      $region55: #{res_block_forward.4} parent=47 // pred_region
        %p981 = scmp.lt.s32.totalorder %s18, 1
        %s982 = scalar_select %p981, %s18, 1
        %s983 = smul.addr %s982, 8
        %s984 = scalar_lea.vmem %s5, %s983
      $region56: #{res_block_forward.4} parent=47 // pred_fallthru
        _
    $region48: #{res_block_forward.4} parent=5 // pred_fallthru
      _
  $region6: #{res_block_forward.4} parent=0 // loop_footer
    %s16 = sadd.s32 1, %s12
  $region7: #{res_block_forward.4} parent=0 // loop_footer_branch
    %11 = sbr.rel target = $region3
  $region8: #{res_block_forward.4} parent=0 // loop_exit
    _

// kernel: res_block_forward.3
$region0: #{res_block_forward.3}
  #allocation0 [shape = 'u32[]', space=smem, size = 0x4, offset = 0x4, fixed_abs, tag = 'smem constant byte address 0x4 - core index']
  #allocation1 [shape = 'u32[72,128]{1,0:T(1,128)}', space=vmem, size = 0x9000, scoped, tag = 'internal scratch']
  %s0 = inlined_call_operand.vmem [shape: f32[2,9,9,4], index: 0, kind: input, shape index: {}]
  %s1 = inlined_call_operand.vmem [shape: f32[2,9,9,4], index: 1, kind: input, shape index: {}]
  %s2 = inlined_call_operand.vmem [shape: f32[2,9,9,4], index: 2, kind: input, shape index: {}]
  %s3 = inlined_call_operand.vmem [shape: f32[2,9,9,4], index: 3, kind: input, shape index: {}]
  %s4 = inlined_call_operand.vmem [shape: bf16[9,4,8], index: 4, kind: input, shape index: {}]
  %s5 = inlined_call_operand.vmem [shape: bf16[4,8], index: 5, kind: input, shape index: {}]
  %s6 = inlined_call_operand.vmem [shape: f32[2,64,8], index: 6, kind: output, shape index: {0}]
  %s7 = inlined_call_operand.vmem [shape: f32[2,64,8], index: 7, kind: output, shape index: {1}]
  %s8 = inlined_call_operand.vmem [shape: f32[2,8,8], index: 8, kind: output, shape index: {2}]
  %9 = xla_tuple %s6, %s7, %s8
  %s10 = sld [smem:[#allocation0]]
  $region73: #{res_block_forward.3} parent=0
    _
  %s12 = ssub.s32 1, %s10
  %s13 = scalar_select 0, %s12, %s10
  loop: start=0, step=1, limit=4
  $region2: #{res_block_forward.3} parent=0 // loop_pre_header
    _
  $region3: #{res_block_forward.3} parent=0 // loop_header
    %s15 = sphi 0, %s19
    %p16 = scmp.ge.s32.totalorder %s15, 4
    %s25 = sphi 0, %s27
    %s28 = sphi 0, %s25
    %s29 = sphi 0, %s28
    %s45 = sphi 0, %s29
    %s51 = sphi 0, %s53
    %s54 = sphi 0, %s51
    %s55 = sphi 0, %s54
    %s71 = sphi 0, %s55
    %s77 = sphi 0, %s79
    %s80 = sphi 0, %s77
    %s81 = sphi 0, %s80
    %s97 = sphi 0, %s81
    %s103 = sphi 0, %s105
    %s106 = sphi 0, %s103
    %s107 = sphi 0, %s106
    %s123 = sphi 0, %s107
    %s127 = sphi 0, %s127
    %s129 = sphi 0, %s127
    %s130 = sphi 0, %s129
    %s144 = sphi 0, %s130
    %s148 = sphi 0, %s148
    %s150 = sphi 0, %s148
    %s151 = sphi 0, %s150
    %s165 = sphi 0, %s151
    %s171 = sphi 0, %s173
    %s174 = sphi 0, %s171
    %s175 = sphi 0, %s174
    %s191 = sphi 0, %s175
    %s197 = sphi 0, %s199
    %s200 = sphi 0, %s197
    %s201 = sphi 0, %s200
    %s217 = sphi 0, %s201
    %s223 = sphi 0, %s225
    %s226 = sphi 0, %s223
    %s227 = sphi 0, %s226
    %s243 = sphi 0, %s227
  $region4: #{res_block_forward.3} parent=0 // loop_header_branch
    %18 = sbr.rel (%p16) target = $region8
  $region5: #{res_block_forward.3} parent=0 // loop_body
    %s20 = ssub.s32 %s15, 1
    %s21 = ssub.s32 %s15, 2
    %s22 = sadd.s32 %s15, 1
    %s23 = ssub.s32 %s15, %s22
    %p24 = scmp.eq.s32.totalorder %s23, 0
    %s26 = sadd.s32 %s25, 1
    %s27 = scalar_select %p24, %s25, %s26
    %p30 = pneg %p24
    %p31 = scmp.eq.s32.totalorder %s15, 1
    %p32 = por %p30, %p31
    %p33 = scmp.ne.s32.totalorder %s25, %s28
    %p34 = scmp.eq.s32.totalorder %s15, 0
    %p35 = por %p33, %p34
    %p36 = scmp.ne.s32.totalorder %s25, %s28
    %p37 = scmp.eq.s32.totalorder %s20, 1
    %p38 = por %p36, %p37
    %p39 = scmp.ne.s32.totalorder %s28, %s29
    %p40 = scmp.eq.s32.totalorder %s20, 0
    %p41 = por %p39, %p40
    %p42 = scmp.ne.s32.totalorder %s28, %s29
    %p43 = scmp.eq.s32.totalorder %s21, 1
    %p44 = por %p42, %p43
    %p46 = scmp.ne.s32.totalorder %s29, %s45
    %p47 = scmp.eq.s32.totalorder %s21, 0
    %p48 = por %p46, %p47
    %s49 = ssub.s32 %s15, %s22
    %p50 = scmp.eq.s32.totalorder %s49, 0
    %s52 = sadd.s32 %s51, 1
    %s53 = scalar_select %p50, %s51, %s52
    %p56 = pneg %p50
    %p57 = scmp.eq.s32.totalorder %s15, 1
    %p58 = por %p56, %p57
    %p59 = scmp.ne.s32.totalorder %s51, %s54
    %p60 = scmp.eq.s32.totalorder %s15, 0
    %p61 = por %p59, %p60
    %p62 = scmp.ne.s32.totalorder %s51, %s54
    %p63 = scmp.eq.s32.totalorder %s20, 1
    %p64 = por %p62, %p63
    %p65 = scmp.ne.s32.totalorder %s54, %s55
    %p66 = scmp.eq.s32.totalorder %s20, 0
    %p67 = por %p65, %p66
    %p68 = scmp.ne.s32.totalorder %s54, %s55
    %p69 = scmp.eq.s32.totalorder %s21, 1
    %p70 = por %p68, %p69
    %p72 = scmp.ne.s32.totalorder %s55, %s71
    %p73 = scmp.eq.s32.totalorder %s21, 0
    %p74 = por %p72, %p73
    %s75 = ssub.s32 %s15, %s22
    %p76 = scmp.eq.s32.totalorder %s75, 0
    %s78 = sadd.s32 %s77, 1
    %s79 = scalar_select %p76, %s77, %s78
    %p82 = pneg %p76
    %p83 = scmp.eq.s32.totalorder %s15, 1
    %p84 = por %p82, %p83
    %p85 = scmp.ne.s32.totalorder %s77, %s80
    %p86 = scmp.eq.s32.totalorder %s15, 0
    %p87 = por %p85, %p86
    %p88 = scmp.ne.s32.totalorder %s77, %s80
    %p89 = scmp.eq.s32.totalorder %s20, 1
    %p90 = por %p88, %p89
    %p91 = scmp.ne.s32.totalorder %s80, %s81
    %p92 = scmp.eq.s32.totalorder %s20, 0
    %p93 = por %p91, %p92
    %p94 = scmp.ne.s32.totalorder %s80, %s81
    %p95 = scmp.eq.s32.totalorder %s21, 1
    %p96 = por %p94, %p95
    %p98 = scmp.ne.s32.totalorder %s81, %s97
    %p99 = scmp.eq.s32.totalorder %s21, 0
    %p100 = por %p98, %p99
    %s101 = ssub.s32 %s15, %s22
    %p102 = scmp.eq.s32.totalorder %s101, 0
    %s104 = sadd.s32 %s103, 1
    %s105 = scalar_select %p102, %s103, %s104
    %p108 = pneg %p102
    %p109 = scmp.eq.s32.totalorder %s15, 1
    %p110 = por %p108, %p109
    %p111 = scmp.ne.s32.totalorder %s103, %s106
    %p112 = scmp.eq.s32.totalorder %s15, 0
    %p113 = por %p111, %p112
    %p114 = scmp.ne.s32.totalorder %s103, %s106
    %p115 = scmp.eq.s32.totalorder %s20, 1
    %p116 = por %p114, %p115
    %p117 = scmp.ne.s32.totalorder %s106, %s107
    %p118 = scmp.eq.s32.totalorder %s20, 0
    %p119 = por %p117, %p118
    %p120 = scmp.ne.s32.totalorder %s106, %s107
    %p121 = scmp.eq.s32.totalorder %s21, 1
    %p122 = por %p120, %p121
    %p124 = scmp.ne.s32.totalorder %s107, %s123
    %p125 = scmp.eq.s32.totalorder %s21, 0
    %p126 = por %p124, %p125
    %s128 = sadd.s32 %s127, 1
    %p131 = scmp.eq.s32.totalorder %s15, 1
    %p132 = scmp.ne.s32.totalorder %s127, %s129
    %p133 = scmp.eq.s32.totalorder %s15, 0
    %p134 = por %p132, %p133
    %p135 = scmp.ne.s32.totalorder %s127, %s129
    %p136 = scmp.eq.s32.totalorder %s20, 1
    %p137 = por %p135, %p136
    %p138 = scmp.ne.s32.totalorder %s129, %s130
    %p139 = scmp.eq.s32.totalorder %s20, 0
    %p140 = por %p138, %p139
    %p141 = scmp.ne.s32.totalorder %s129, %s130
    %p142 = scmp.eq.s32.totalorder %s21, 1
    %p143 = por %p141, %p142
    %p145 = scmp.ne.s32.totalorder %s130, %s144
    %p146 = scmp.eq.s32.totalorder %s21, 0
    %p147 = por %p145, %p146
    %s149 = sadd.s32 %s148, 1
    %p152 = scmp.eq.s32.totalorder %s15, 1
    %p153 = scmp.ne.s32.totalorder %s148, %s150
    %p154 = scmp.eq.s32.totalorder %s15, 0
    %p155 = por %p153, %p154
    %p156 = scmp.ne.s32.totalorder %s148, %s150
    %p157 = scmp.eq.s32.totalorder %s20, 1
    %p158 = por %p156, %p157
    %p159 = scmp.ne.s32.totalorder %s150, %s151
    %p160 = scmp.eq.s32.totalorder %s20, 0
    %p161 = por %p159, %p160
    %p162 = scmp.ne.s32.totalorder %s150, %s151
    %p163 = scmp.eq.s32.totalorder %s21, 1
    %p164 = por %p162, %p163
    %p166 = scmp.ne.s32.totalorder %s151, %s165
    %p167 = scmp.eq.s32.totalorder %s21, 0
    %p168 = por %p166, %p167
    %s169 = ssub.s32 %s15, %s22
    %p170 = scmp.eq.s32.totalorder %s169, 0
    %s172 = sadd.s32 %s171, 1
    %s173 = scalar_select %p170, %s171, %s172
    %p176 = pneg %p170
    %p177 = scmp.eq.s32.totalorder %s15, 1
    %p178 = por %p176, %p177
    %p179 = scmp.ne.s32.totalorder %s171, %s174
    %p180 = scmp.eq.s32.totalorder %s15, 0
    %p181 = por %p179, %p180
    %p182 = scmp.ne.s32.totalorder %s171, %s174
    %p183 = scmp.eq.s32.totalorder %s20, 1
    %p184 = por %p182, %p183
    %p185 = scmp.ne.s32.totalorder %s174, %s175
    %p186 = scmp.eq.s32.totalorder %s20, 0
    %p187 = por %p185, %p186
    %p188 = scmp.ne.s32.totalorder %s174, %s175
    %p189 = scmp.eq.s32.totalorder %s21, 1
    %p190 = por %p188, %p189
    %p192 = scmp.ne.s32.totalorder %s175, %s191
    %p193 = scmp.eq.s32.totalorder %s21, 0
    %p194 = por %p192, %p193
    %s195 = ssub.s32 %s15, %s22
    %p196 = scmp.eq.s32.totalorder %s195, 0
    %s198 = sadd.s32 %s197, 1
    %s199 = scalar_select %p196, %s197, %s198
    %p202 = pneg %p196
    %p203 = scmp.eq.s32.totalorder %s15, 1
    %p204 = por %p202, %p203
    %p205 = scmp.ne.s32.totalorder %s197, %s200
    %p206 = scmp.eq.s32.totalorder %s15, 0
    %p207 = por %p205, %p206
    %p208 = scmp.ne.s32.totalorder %s197, %s200
    %p209 = scmp.eq.s32.totalorder %s20, 1
    %p210 = por %p208, %p209
    %p211 = scmp.ne.s32.totalorder %s200, %s201
    %p212 = scmp.eq.s32.totalorder %s20, 0
    %p213 = por %p211, %p212
    %p214 = scmp.ne.s32.totalorder %s200, %s201
    %p215 = scmp.eq.s32.totalorder %s21, 1
    %p216 = por %p214, %p215
    %p218 = scmp.ne.s32.totalorder %s201, %s217
    %p219 = scmp.eq.s32.totalorder %s21, 0
    %p220 = por %p218, %p219
    %s221 = ssub.s32 %s15, %s22
    %p222 = scmp.eq.s32.totalorder %s221, 0
    %s224 = sadd.s32 %s223, 1
    %s225 = scalar_select %p222, %s223, %s224
    %p228 = pneg %p222
    %p229 = scmp.eq.s32.totalorder %s15, 1
    %p230 = por %p228, %p229
    %p231 = scmp.ne.s32.totalorder %s223, %s226
    %p232 = scmp.eq.s32.totalorder %s15, 0
    %p233 = por %p231, %p232
    %p234 = scmp.ne.s32.totalorder %s223, %s226
    %p235 = scmp.eq.s32.totalorder %s20, 1
    %p236 = por %p234, %p235
    %p237 = scmp.ne.s32.totalorder %s226, %s227
    %p238 = scmp.eq.s32.totalorder %s20, 0
    %p239 = por %p237, %p238
    %p240 = scmp.ne.s32.totalorder %s226, %s227
    %p241 = scmp.eq.s32.totalorder %s21, 1
    %p242 = por %p240, %p241
    %p244 = scmp.ne.s32.totalorder %s227, %s243
    %p245 = scmp.eq.s32.totalorder %s21, 0
    %p246 = por %p244, %p245
    %p247 = scmp.le.s32.totalorder 1, %s15
    %p248 = scmp.lt.s32.totalorder %s15, 3
    %p249 = pnand %p247, %p248
    %p250 = pneg %p249
    // Predicated region
    $region9: #{res_block_forward.3} parent=5 // pred_check
      _
    $region10: #{res_block_forward.3} parent=5 // pred_check_branch
      %252 = sbr.rel (%p249) target = $region12
    $region11: #{res_block_forward.3} parent=5 // pred_region
      %s253 = ssub.s32 %s15, 1
      // Predicated region
      $region13: #{res_block_forward.3} parent=11 // pred_check
        %p254 = pneg %p140
      $region14: #{res_block_forward.3} parent=11 // pred_check_branch
        %256 = sbr.rel (%p254) target = $region16
      $region15: #{res_block_forward.3} parent=11 // pred_region
        _
      $region16: #{res_block_forward.3} parent=11 // pred_fallthru
        _
      // Predicated region
      $region17: #{res_block_forward.3} parent=11 // pred_check
        %p257 = pneg %p161
      $region18: #{res_block_forward.3} parent=11 // pred_check_branch
        %259 = sbr.rel (%p257) target = $region20
      $region19: #{res_block_forward.3} parent=11 // pred_region
        _
      $region20: #{res_block_forward.3} parent=11 // pred_fallthru
        _
    $region12: #{res_block_forward.3} parent=5 // pred_fallthru
      _
    %p260 = scmp.lt.s32.totalorder %s15, 2
    // Predicated region
    $region21: #{res_block_forward.3} parent=5 // pred_check
      %p261 = pneg %p260
    $region22: #{res_block_forward.3} parent=5 // pred_check_branch
      %263 = sbr.rel (%p261) target = $region24
    $region23: #{res_block_forward.3} parent=5 // pred_region
      // Predicated region
      $region25: #{res_block_forward.3} parent=23 // pred_check
        %p264 = pneg %p35
      $region26: #{res_block_forward.3} parent=23 // pred_check_branch
        %266 = sbr.rel (%p264) target = $region28
      $region27: #{res_block_forward.3} parent=23 // pred_region
        %p267 = scmp.lt.s32.totalorder %s15, 1
        %s268 = scalar_select %p267, %s15, 1
        %s269 = smul.addr %s268, 18
        %s270 = smul.addr %s269, 8
        %s271 = scalar_lea.vmem %s0, %s270
      $region28: #{res_block_forward.3} parent=23 // pred_fallthru
        _
      // Predicated region
      $region29: #{res_block_forward.3} parent=23 // pred_check
        %p272 = pneg %p61
      $region30: #{res_block_forward.3} parent=23 // pred_check_branch
        %274 = sbr.rel (%p272) target = $region32
      $region31: #{res_block_forward.3} parent=23 // pred_region
        %p275 = scmp.lt.s32.totalorder %s15, 1
        %s276 = scalar_select %p275, %s15, 1
        %s277 = smul.addr %s276, 18
        %s278 = smul.addr %s277, 8
        %s279 = scalar_lea.vmem %s1, %s278
      $region32: #{res_block_forward.3} parent=23 // pred_fallthru
        _
      // Predicated region
      $region33: #{res_block_forward.3} parent=23 // pred_check
        %p280 = pneg %p87
      $region34: #{res_block_forward.3} parent=23 // pred_check_branch
        %282 = sbr.rel (%p280) target = $region36
      $region35: #{res_block_forward.3} parent=23 // pred_region
        %p283 = scmp.lt.s32.totalorder %s15, 1
        %s284 = scalar_select %p283, %s15, 1
        %s285 = smul.addr %s284, 18
        %s286 = smul.addr %s285, 8
        %s287 = scalar_lea.vmem %s2, %s286
      $region36: #{res_block_forward.3} parent=23 // pred_fallthru
        _
      // Predicated region
      $region37: #{res_block_forward.3} parent=23 // pred_check
        %p288 = pneg %p113
      $region38: #{res_block_forward.3} parent=23 // pred_check_branch
        %290 = sbr.rel (%p288) target = $region40
      $region39: #{res_block_forward.3} parent=23 // pred_region
        %p291 = scmp.lt.s32.totalorder %s15, 1
        %s292 = scalar_select %p291, %s15, 1
        %s293 = smul.addr %s292, 18
        %s294 = smul.addr %s293, 8
        %s295 = scalar_lea.vmem %s3, %s294
      $region40: #{res_block_forward.3} parent=23 // pred_fallthru
        _
    $region24: #{res_block_forward.3} parent=5 // pred_fallthru
      _
    %p296 = scmp.le.s32.totalorder 1, %s15
    %p297 = scmp.lt.s32.totalorder %s15, 3
    %p298 = pnand %p296, %p297
    %p299 = pneg %p298
    // Predicated region
    $region41: #{res_block_forward.3} parent=5 // pred_check
      _
    $region42: #{res_block_forward.3} parent=5 // pred_check_branch
      %301 = sbr.rel (%p298) target = $region44
    $region43: #{res_block_forward.3} parent=5 // pred_region
      %s302 = ssub.s32 %s15, 1
      %p303 = scmp.lt.s32.totalorder %s20, 1
      %s304 = scalar_select %p303, %s20, 1
      %s305 = smul.addr %s304, 18
      %s306 = smul.addr %s305, 8
      %s307 = scalar_lea.vmem %s0, %s306
      %p308 = pneg %p41
      %p309 = pneg %p38
      %p310 = scmp.lt.s32.totalorder %s20, 1
      %s311 = scalar_select %p310, %s20, 1
      %s312 = smul.addr %s311, 18
      %s313 = smul.addr %s312, 8
      %s314 = scalar_lea.vmem %s1, %s313
      %p315 = pneg %p67
      %p316 = pneg %p64
      %p317 = scmp.lt.s32.totalorder %s20, 1
      %s318 = scalar_select %p317, %s20, 1
      %s319 = smul.addr %s318, 18
      %s320 = smul.addr %s319, 8
      %s321 = scalar_lea.vmem %s2, %s320
      %p322 = pneg %p93
      %p323 = pneg %p90
      %p324 = scmp.lt.s32.totalorder %s20, 1
      %s325 = scalar_select %p324, %s20, 1
      %s326 = smul.addr %s325, 18
      %s327 = smul.addr %s326, 8
      %s328 = scalar_lea.vmem %s3, %s327
      %p329 = pneg %p119
      %p330 = pneg %p116
      %p331 = pneg %p140
      %p332 = pneg %p137
      %p333 = pneg %p161
      %p334 = pneg %p158
      %p335 = pneg %p187
      %p336 = pneg %p184
      %p337 = scmp.lt.s32.totalorder %s20, 1
      %s338 = scalar_select %p337, %s20, 1
      %s339 = smul.addr %s338, 8
      %s340 = smul.addr %s339, 8
      %s341 = scalar_lea.vmem %s6, %s340
      %p342 = pneg %p213
      %p343 = pneg %p210
      %p344 = scmp.lt.s32.totalorder %s20, 1
      %s345 = scalar_select %p344, %s20, 1
      %s346 = smul.addr %s345, 8
      %s347 = smul.addr %s346, 8
      %s348 = scalar_lea.vmem %s7, %s347
      %p349 = pneg %p239
      %p350 = pneg %p236
      %p351 = scmp.lt.s32.totalorder %s20, 1
      %s352 = scalar_select %p351, %s20, 1
      %s353 = smul.addr %s352, 8
      %s354 = scalar_lea.vmem %s8, %s353
      %p355 = scmp.lt.s32.totalorder %s20, 1
      %s356 = scalar_select %p355, %s20, 1
      %s357 = smul.addr %s356, 18
      %s358 = smul.addr %s357, 8
      %s359 = scalar_lea.vmem %s0, %s358
      %p360 = scmp.lt.s32.totalorder %s20, 1
      %s361 = scalar_select %p360, %s20, 1
      %s362 = smul.addr %s361, 18
      %s363 = smul.addr %s362, 8
      %s364 = scalar_lea.vmem %s1, %s363
      %p365 = scmp.lt.s32.totalorder %s20, 1
      %s366 = scalar_select %p365, %s20, 1
      %s367 = smul.addr %s366, 18
      %s368 = smul.addr %s367, 8
      %s369 = scalar_lea.vmem %s2, %s368
      %p370 = scmp.lt.s32.totalorder %s20, 1
      %s371 = scalar_select %p370, %s20, 1
      %s372 = smul.addr %s371, 18
      %s373 = smul.addr %s372, 8
      %s374 = scalar_lea.vmem %s3, %s373
      %p375 = scmp.lt.s32.totalorder %s20, 1
      %s376 = scalar_select %p375, %s20, 1
      %s377 = smul.addr %s376, 8
      %s378 = smul.addr %s377, 8
      %s379 = scalar_lea.vmem %s6, %s378
      %p380 = scmp.lt.s32.totalorder %s20, 1
      %s381 = scalar_select %p380, %s20, 1
      %s382 = smul.addr %s381, 8
      %s383 = smul.addr %s382, 8
      %s384 = scalar_lea.vmem %s7, %s383
      %p385 = scmp.lt.s32.totalorder %s20, 1
      %s386 = scalar_select %p385, %s20, 1
      %s387 = smul.addr %s386, 8
      %s388 = scalar_lea.vmem %s8, %s387
      %v390 = vld [vmem:[%s359] sm:$0xff]
      %v391 = vld [vmem:[%s359 + $0x10] sm:$0xff]
      %v392 = vld [vmem:[%s359 + $0x20] sm:$0xff]
      %v393 = vld [vmem:[%s359 + $0x30] sm:$0xff]
      %v394 = vld [vmem:[%s359 + $0x40] sm:$0xff]
      %v395 = vld [vmem:[%s359 + $0x50] sm:$0xff]
      %v396 = vld [vmem:[%s359 + $0x60] sm:$0xff]
      %v397 = vld [vmem:[%s359 + $0x70] sm:$0xff]
      %v398 = vpack.c.bf16 %v391, %v390
      %v399 = vpack.c.bf16 %v393, %v392
      %v400 = vpack.c.bf16 %v395, %v394
      %v401 = vpack.c.bf16 %v397, %v396
      %v402 = vld [vmem:[%s4] sm:$0x3]
      %v403 = vld [vmem:[%s364] sm:$0xff]
      %v404 = vld [vmem:[%s364 + $0x10] sm:$0xff]
      %v405 = vld [vmem:[%s364 + $0x20] sm:$0xff]
      %v406 = vld [vmem:[%s364 + $0x30] sm:$0xff]
      %v407 = vld [vmem:[%s364 + $0x40] sm:$0xff]
      %v408 = vld [vmem:[%s364 + $0x50] sm:$0xff]
      %v409 = vld [vmem:[%s364 + $0x60] sm:$0xff]
      %v410 = vld [vmem:[%s364 + $0x70] sm:$0xff]
      %v411 = vpack.c.bf16 %v404, %v403
      %v412 = vpack.c.bf16 %v406, %v405
      %v413 = vpack.c.bf16 %v408, %v407
      %v414 = vpack.c.bf16 %v410, %v409
      %s415 = scalar_lea.vmem %s4, 2
      %v416 = vld [vmem:[%s415] sm:$0x3]
      %vm417 = vcmask 31744
      %v419 = vsel %vm417, %v411, 0
      %v422 = vsel %vm417, %v412, 0
      %v425 = vsel %vm417, %v413, 0
      %v428 = vsel %vm417, %v414, 0
      %vm430 = vcmask 1041408
      %v432 = vsel %vm430, %v416, 0
      %434 = vmatpush.bf16.msra.mxu0 0
      %435 = vmatpush.bf16.msra.mxu0 0
      %436 = vmatpush.bf16.msra.mxu0 0
      %437 = vmatpush.bf16.msra.mxu0 0
      %438 = vmatpush.bf16.msra.mxu0 0
      %439 = vmatpush.bf16.msra.mxu0 0
      %440 = vmatpush.bf16.msra.mxu0 0
      %441 = vmatpush.bf16.msra.mxu0 %v432
      %442 = vmatmul.bf16.gmra.mxu0 %v419
      %v443 = vpop.f32.mrf.mxu0
      %v444 = vadd.f32 0.0, %v443
      %v445 = vpop.f32.mrf.mxu0
      %v446 = vadd.f32 0.0, %v445
      %447 = vmatmul.bf16.gmra.mxu0 %v422
      %v448 = vpop.f32.mrf.mxu0
      %v449 = vadd.f32 0.0, %v448
      %v450 = vpop.f32.mrf.mxu0
      %v451 = vadd.f32 0.0, %v450
      %452 = vmatmul.bf16.gmra.mxu0 %v425
      %v453 = vpop.f32.mrf.mxu0
      %v454 = vadd.f32 0.0, %v453
      %v455 = vpop.f32.mrf.mxu0
      %v456 = vadd.f32 0.0, %v455
      %457 = vmatmul.bf16.gmra.mxu0 %v428
      %v458 = vpop.f32.mrf.mxu0
      %v459 = vadd.f32 0.0, %v458
      %v460 = vpop.f32.mrf.mxu0
      %v461 = vadd.f32 0.0, %v460
      %462 = vdwg.mxu0
      %v464 = vsel %vm417, %v398, 0
      %v467 = vsel %vm417, %v399, 0
      %v470 = vsel %vm417, %v400, 0
      %v473 = vsel %vm417, %v401, 0
      %v476 = vsel %vm430, %v402, 0
      %478 = vmatpush.bf16.msra.mxu0 0
      %479 = vmatpush.bf16.msra.mxu0 0
      %480 = vmatpush.bf16.msra.mxu0 0
      %481 = vmatpush.bf16.msra.mxu0 0
      %482 = vmatpush.bf16.msra.mxu0 0
      %483 = vmatpush.bf16.msra.mxu0 0
      %484 = vmatpush.bf16.msra.mxu0 0
      %485 = vmatpush.bf16.msra.mxu0 %v476
      %486 = vmatmul.bf16.gmra.mxu0 %v464
      %v487 = vpop.f32.mrf.mxu0
      %v488 = vadd.f32 %v444, %v487
      %v489 = vpop.f32.mrf.mxu0
      %v490 = vadd.f32 %v446, %v489
      %491 = vmatmul.bf16.gmra.mxu0 %v467
      %v492 = vpop.f32.mrf.mxu0
      %v493 = vadd.f32 %v449, %v492
      %v494 = vpop.f32.mrf.mxu0
      %v495 = vadd.f32 %v451, %v494
      %496 = vmatmul.bf16.gmra.mxu0 %v470
      %v497 = vpop.f32.mrf.mxu0
      %v498 = vadd.f32 %v454, %v497
      %v499 = vpop.f32.mrf.mxu0
      %v500 = vadd.f32 %v456, %v499
      %501 = vmatmul.bf16.gmra.mxu0 %v473
      %v502 = vpop.f32.mrf.mxu0
      %v503 = vadd.f32 %v459, %v502
      %v504 = vpop.f32.mrf.mxu0
      %v505 = vadd.f32 %v461, %v504
      %506 = vdwg.mxu0
      %v507 = vld [vmem:[%s359 + $0x1] sm:$0xff]
      %v508 = vld [vmem:[%s359 + $0x11] sm:$0xff]
      %v509 = vld [vmem:[%s359 + $0x21] sm:$0xff]
      %v510 = vld [vmem:[%s359 + $0x31] sm:$0xff]
      %v511 = vld [vmem:[%s359 + $0x41] sm:$0xff]
      %v512 = vld [vmem:[%s359 + $0x51] sm:$0xff]
      %v513 = vld [vmem:[%s359 + $0x61] sm:$0xff]
      %v514 = vld [vmem:[%s359 + $0x71] sm:$0xff]
      %v515 = vpack.c.bf16 %v508, %v507
      %v516 = vpack.c.bf16 %v510, %v509
      %v517 = vpack.c.bf16 %v512, %v511
      %v518 = vpack.c.bf16 %v514, %v513
      %s519 = scalar_lea.vmem %s4, 4
      %v520 = vld [vmem:[%s519] sm:$0x3]
      %v522 = vsel %vm417, %v515, 0
      %v525 = vsel %vm417, %v516, 0
      %v528 = vsel %vm417, %v517, 0
      %v531 = vsel %vm417, %v518, 0
      %v534 = vsel %vm430, %v520, 0
      %536 = vmatpush.bf16.msra.mxu0 0
      %537 = vmatpush.bf16.msra.mxu0 0
      %538 = vmatpush.bf16.msra.mxu0 0
      %539 = vmatpush.bf16.msra.mxu0 0
      %540 = vmatpush.bf16.msra.mxu0 0
      %541 = vmatpush.bf16.msra.mxu0 0
      %542 = vmatpush.bf16.msra.mxu0 0
      %543 = vmatpush.bf16.msra.mxu0 %v534
      %544 = vmatmul.bf16.gmra.mxu0 %v522
      %v545 = vpop.f32.mrf.mxu0
      %v546 = vadd.f32 0.0, %v545
      %v547 = vpop.f32.mrf.mxu0
      %v548 = vadd.f32 0.0, %v547
      %549 = vmatmul.bf16.gmra.mxu0 %v525
      %v550 = vpop.f32.mrf.mxu0
      %v551 = vadd.f32 0.0, %v550
      %v552 = vpop.f32.mrf.mxu0
      %v553 = vadd.f32 0.0, %v552
      %554 = vmatmul.bf16.gmra.mxu0 %v528
      %v555 = vpop.f32.mrf.mxu0
      %v556 = vadd.f32 0.0, %v555
      %v557 = vpop.f32.mrf.mxu0
      %v558 = vadd.f32 0.0, %v557
      %559 = vmatmul.bf16.gmra.mxu0 %v531
      %v560 = vpop.f32.mrf.mxu0
      %v561 = vadd.f32 0.0, %v560
      %v562 = vpop.f32.mrf.mxu0
      %v563 = vadd.f32 0.0, %v562
      %564 = vdwg.mxu0
      %v565 = vadd.f32 %v488, %v546
      %v566 = vadd.f32 %v490, %v548
      %v567 = vadd.f32 %v493, %v551
      %v568 = vadd.f32 %v495, %v553
      %v569 = vadd.f32 %v498, %v556
      %v570 = vadd.f32 %v500, %v558
      %v571 = vadd.f32 %v503, %v561
      %v572 = vadd.f32 %v505, %v563
      %v573 = vld [vmem:[%s369] sm:$0xff]
      %v574 = vld [vmem:[%s369 + $0x10] sm:$0xff]
      %v575 = vld [vmem:[%s369 + $0x20] sm:$0xff]
      %v576 = vld [vmem:[%s369 + $0x30] sm:$0xff]
      %v577 = vld [vmem:[%s369 + $0x40] sm:$0xff]
      %v578 = vld [vmem:[%s369 + $0x50] sm:$0xff]
      %v579 = vld [vmem:[%s369 + $0x60] sm:$0xff]
      %v580 = vld [vmem:[%s369 + $0x70] sm:$0xff]
      %v581 = vpack.c.bf16 %v574, %v573
      %v582 = vpack.c.bf16 %v576, %v575
      %v583 = vpack.c.bf16 %v578, %v577
      %v584 = vpack.c.bf16 %v580, %v579
      %s585 = scalar_lea.vmem %s4, 6
      %v586 = vld [vmem:[%s585] sm:$0x3]
      %v588 = vsel %vm417, %v581, 0
      %v591 = vsel %vm417, %v582, 0
      %v594 = vsel %vm417, %v583, 0
      %v597 = vsel %vm417, %v584, 0
      %v600 = vsel %vm430, %v586, 0
      %602 = vmatpush.bf16.msra.mxu0 0
      %603 = vmatpush.bf16.msra.mxu0 0
      %604 = vmatpush.bf16.msra.mxu0 0
      %605 = vmatpush.bf16.msra.mxu0 0
      %606 = vmatpush.bf16.msra.mxu0 0
      %607 = vmatpush.bf16.msra.mxu0 0
      %608 = vmatpush.bf16.msra.mxu0 0
      %609 = vmatpush.bf16.msra.mxu0 %v600
      %610 = vmatmul.bf16.gmra.mxu0 %v588
      %v611 = vpop.f32.mrf.mxu0
      %v612 = vadd.f32 0.0, %v611
      %v613 = vpop.f32.mrf.mxu0
      %v614 = vadd.f32 0.0, %v613
      %615 = vmatmul.bf16.gmra.mxu0 %v591
      %v616 = vpop.f32.mrf.mxu0
      %v617 = vadd.f32 0.0, %v616
      %v618 = vpop.f32.mrf.mxu0
      %v619 = vadd.f32 0.0, %v618
      %620 = vmatmul.bf16.gmra.mxu0 %v594
      %v621 = vpop.f32.mrf.mxu0
      %v622 = vadd.f32 0.0, %v621
      %v623 = vpop.f32.mrf.mxu0
      %v624 = vadd.f32 0.0, %v623
      %625 = vmatmul.bf16.gmra.mxu0 %v597
      %v626 = vpop.f32.mrf.mxu0
      %v627 = vadd.f32 0.0, %v626
      %v628 = vpop.f32.mrf.mxu0
      %v629 = vadd.f32 0.0, %v628
      %630 = vdwg.mxu0
      %v631 = vadd.f32 %v565, %v612
      %v632 = vadd.f32 %v566, %v614
      %v633 = vadd.f32 %v567, %v617
      %v634 = vadd.f32 %v568, %v619
      %v635 = vadd.f32 %v569, %v622
      %v636 = vadd.f32 %v570, %v624
      %v637 = vadd.f32 %v571, %v627
      %v638 = vadd.f32 %v572, %v629
      %v639 = vld [vmem:[%s374] sm:$0xff]
      %v640 = vld [vmem:[%s374 + $0x10] sm:$0xff]
      %v641 = vld [vmem:[%s374 + $0x20] sm:$0xff]
      %v642 = vld [vmem:[%s374 + $0x30] sm:$0xff]
      %v643 = vld [vmem:[%s374 + $0x40] sm:$0xff]
      %v644 = vld [vmem:[%s374 + $0x50] sm:$0xff]
      %v645 = vld [vmem:[%s374 + $0x60] sm:$0xff]
      %v646 = vld [vmem:[%s374 + $0x70] sm:$0xff]
      %v647 = vpack.c.bf16 %v640, %v639
      %v648 = vpack.c.bf16 %v642, %v641
      %v649 = vpack.c.bf16 %v644, %v643
      %v650 = vpack.c.bf16 %v646, %v645
      %s651 = scalar_lea.vmem %s4, 8
      %v652 = vld [vmem:[%s651] sm:$0x3]
      %v654 = vsel %vm417, %v647, 0
      %v657 = vsel %vm417, %v648, 0
      %v660 = vsel %vm417, %v649, 0
      %v663 = vsel %vm417, %v650, 0
      %v666 = vsel %vm430, %v652, 0
      %668 = vmatpush.bf16.msra.mxu0 0
      %669 = vmatpush.bf16.msra.mxu0 0
      %670 = vmatpush.bf16.msra.mxu0 0
      %671 = vmatpush.bf16.msra.mxu0 0
      %672 = vmatpush.bf16.msra.mxu0 0
      %673 = vmatpush.bf16.msra.mxu0 0
      %674 = vmatpush.bf16.msra.mxu0 0
      %675 = vmatpush.bf16.msra.mxu0 %v666
      %676 = vmatmul.bf16.gmra.mxu0 %v654
      %v677 = vpop.f32.mrf.mxu0
      %v678 = vadd.f32 0.0, %v677
      %v679 = vpop.f32.mrf.mxu0
      %v680 = vadd.f32 0.0, %v679
      %681 = vmatmul.bf16.gmra.mxu0 %v657
      %v682 = vpop.f32.mrf.mxu0
      %v683 = vadd.f32 0.0, %v682
      %v684 = vpop.f32.mrf.mxu0
      %v685 = vadd.f32 0.0, %v684
      %686 = vmatmul.bf16.gmra.mxu0 %v660
      %v687 = vpop.f32.mrf.mxu0
      %v688 = vadd.f32 0.0, %v687
      %v689 = vpop.f32.mrf.mxu0
      %v690 = vadd.f32 0.0, %v689
      %691 = vmatmul.bf16.gmra.mxu0 %v663
      %v692 = vpop.f32.mrf.mxu0
      %v693 = vadd.f32 0.0, %v692
      %v694 = vpop.f32.mrf.mxu0
      %v695 = vadd.f32 0.0, %v694
      %696 = vdwg.mxu0
      %v697 = vadd.f32 %v631, %v678
      %v698 = vadd.f32 %v632, %v680
      %v699 = vadd.f32 %v633, %v683
      %v700 = vadd.f32 %v634, %v685
      %v701 = vadd.f32 %v635, %v688
      %v702 = vadd.f32 %v636, %v690
      %v703 = vadd.f32 %v637, %v693
      %v704 = vadd.f32 %v638, %v695
      %v705 = vld [vmem:[%s5] sm:$0x3]
      %v707 = vsel %vm430, %v705, 0
      %709 = vmatpush.bf16.msra.mxu0 0
      %710 = vmatpush.bf16.msra.mxu0 0
      %711 = vmatpush.bf16.msra.mxu0 0
      %712 = vmatpush.bf16.msra.mxu0 0
      %713 = vmatpush.bf16.msra.mxu0 0
      %714 = vmatpush.bf16.msra.mxu0 0
      %715 = vmatpush.bf16.msra.mxu0 0
      %716 = vmatpush.bf16.msra.mxu0 %v707
      %717 = vmatmul.bf16.gmra.mxu0 %v654
      %v718 = vpop.f32.mrf.mxu0
      %v719 = vadd.f32 0.0, %v718
      %v720 = vpop.f32.mrf.mxu0
      %v721 = vadd.f32 0.0, %v720
      %722 = vmatmul.bf16.gmra.mxu0 %v657
      %v723 = vpop.f32.mrf.mxu0
      %v724 = vadd.f32 0.0, %v723
      %v725 = vpop.f32.mrf.mxu0
      %v726 = vadd.f32 0.0, %v725
      %727 = vmatmul.bf16.gmra.mxu0 %v660
      %v728 = vpop.f32.mrf.mxu0
      %v729 = vadd.f32 0.0, %v728
      %v730 = vpop.f32.mrf.mxu0
      %v731 = vadd.f32 0.0, %v730
      %732 = vmatmul.bf16.gmra.mxu0 %v663
      %v733 = vpop.f32.mrf.mxu0
      %v734 = vadd.f32 0.0, %v733
      %v735 = vpop.f32.mrf.mxu0
      %v736 = vadd.f32 0.0, %v735
      %737 = vdwg.mxu0
      %v738 = vld [vmem:[%s369 + $0x1] sm:$0xff]
      %v739 = vld [vmem:[%s369 + $0x11] sm:$0xff]
      %v740 = vld [vmem:[%s369 + $0x21] sm:$0xff]
      %v741 = vld [vmem:[%s369 + $0x31] sm:$0xff]
      %v742 = vld [vmem:[%s369 + $0x41] sm:$0xff]
      %v743 = vld [vmem:[%s369 + $0x51] sm:$0xff]
      %v744 = vld [vmem:[%s369 + $0x61] sm:$0xff]
      %v745 = vld [vmem:[%s369 + $0x71] sm:$0xff]
      %v746 = vpack.c.bf16 %v739, %v738
      %v747 = vpack.c.bf16 %v741, %v740
      %v748 = vpack.c.bf16 %v743, %v742
      %v749 = vpack.c.bf16 %v745, %v744
      %s750 = scalar_lea.vmem %s4, 10
      %v751 = vld [vmem:[%s750] sm:$0x3]
      %v753 = vsel %vm417, %v746, 0
      %v756 = vsel %vm417, %v747, 0
      %v759 = vsel %vm417, %v748, 0
      %v762 = vsel %vm417, %v749, 0
      %v765 = vsel %vm430, %v751, 0
      %767 = vmatpush.bf16.msra.mxu0 0
      %768 = vmatpush.bf16.msra.mxu0 0
      %769 = vmatpush.bf16.msra.mxu0 0
      %770 = vmatpush.bf16.msra.mxu0 0
      %771 = vmatpush.bf16.msra.mxu0 0
      %772 = vmatpush.bf16.msra.mxu0 0
      %773 = vmatpush.bf16.msra.mxu0 0
      %774 = vmatpush.bf16.msra.mxu0 %v765
      %775 = vmatmul.bf16.gmra.mxu0 %v753
      %v776 = vpop.f32.mrf.mxu0
      %v777 = vadd.f32 0.0, %v776
      %v778 = vpop.f32.mrf.mxu0
      %v779 = vadd.f32 0.0, %v778
      %780 = vmatmul.bf16.gmra.mxu0 %v756
      %v781 = vpop.f32.mrf.mxu0
      %v782 = vadd.f32 0.0, %v781
      %v783 = vpop.f32.mrf.mxu0
      %v784 = vadd.f32 0.0, %v783
      %785 = vmatmul.bf16.gmra.mxu0 %v759
      %v786 = vpop.f32.mrf.mxu0
      %v787 = vadd.f32 0.0, %v786
      %v788 = vpop.f32.mrf.mxu0
      %v789 = vadd.f32 0.0, %v788
      %790 = vmatmul.bf16.gmra.mxu0 %v762
      %v791 = vpop.f32.mrf.mxu0
      %v792 = vadd.f32 0.0, %v791
      %v793 = vpop.f32.mrf.mxu0
      %v794 = vadd.f32 0.0, %v793
      %795 = vdwg.mxu0
      %v796 = vadd.f32 %v697, %v777
      %v797 = vadd.f32 %v698, %v779
      %v798 = vadd.f32 %v699, %v782
      %v799 = vadd.f32 %v700, %v784
      %v800 = vadd.f32 %v701, %v787
      %v801 = vadd.f32 %v702, %v789
      %v802 = vadd.f32 %v703, %v792
      %v803 = vadd.f32 %v704, %v794
      %s804 = scalar_lea.vmem %s359, 16
      %v805 = vld [vmem:[%s804] sm:$0xff]
      %v806 = vld [vmem:[%s804 + $0x10] sm:$0xff]
      %v807 = vld [vmem:[%s804 + $0x20] sm:$0xff]
      %v808 = vld [vmem:[%s804 + $0x30] sm:$0xff]
      %v809 = vld [vmem:[%s804 + $0x40] sm:$0xff]
      %v810 = vld [vmem:[%s804 + $0x50] sm:$0xff]
      %v811 = vld [vmem:[%s804 + $0x60] sm:$0xff]
      %v812 = vld [vmem:[%s804 + $0x70] sm:$0xff]
      %v813 = vpack.c.bf16 %v806, %v805
      %v814 = vpack.c.bf16 %v808, %v807
      %v815 = vpack.c.bf16 %v810, %v809
      %v816 = vpack.c.bf16 %v812, %v811
      %s817 = scalar_lea.vmem %s4, 12
      %v818 = vld [vmem:[%s817] sm:$0x3]
      %v820 = vsel %vm417, %v813, 0
      %v823 = vsel %vm417, %v814, 0
      %v826 = vsel %vm417, %v815, 0
      %v829 = vsel %vm417, %v816, 0
      %v832 = vsel %vm430, %v818, 0
      %834 = vmatpush.bf16.msra.mxu0 0
      %835 = vmatpush.bf16.msra.mxu0 0
      %836 = vmatpush.bf16.msra.mxu0 0
      %837 = vmatpush.bf16.msra.mxu0 0
      %838 = vmatpush.bf16.msra.mxu0 0
      %839 = vmatpush.bf16.msra.mxu0 0
      %840 = vmatpush.bf16.msra.mxu0 0
      %841 = vmatpush.bf16.msra.mxu0 %v832
      %842 = vmatmul.bf16.gmra.mxu0 %v820
      %v843 = vpop.f32.mrf.mxu0
      %v844 = vadd.f32 0.0, %v843
      %v845 = vpop.f32.mrf.mxu0
      %v846 = vadd.f32 0.0, %v845
      %847 = vmatmul.bf16.gmra.mxu0 %v823
      %v848 = vpop.f32.mrf.mxu0
      %v849 = vadd.f32 0.0, %v848
      %v850 = vpop.f32.mrf.mxu0
      %v851 = vadd.f32 0.0, %v850
      %852 = vmatmul.bf16.gmra.mxu0 %v826
      %v853 = vpop.f32.mrf.mxu0
      %v854 = vadd.f32 0.0, %v853
      %v855 = vpop.f32.mrf.mxu0
      %v856 = vadd.f32 0.0, %v855
      %857 = vmatmul.bf16.gmra.mxu0 %v829
      %v858 = vpop.f32.mrf.mxu0
      %v859 = vadd.f32 0.0, %v858
      %v860 = vpop.f32.mrf.mxu0
      %v861 = vadd.f32 0.0, %v860
      %862 = vdwg.mxu0
      %v863 = vadd.f32 %v796, %v844
      %v864 = vadd.f32 %v797, %v846
      %v865 = vadd.f32 %v798, %v849
      %v866 = vadd.f32 %v799, %v851
      %v867 = vadd.f32 %v800, %v854
      %v868 = vadd.f32 %v801, %v856
      %v869 = vadd.f32 %v802, %v859
      %v870 = vadd.f32 %v803, %v861
      %s871 = scalar_lea.vmem %s364, 16
      %v872 = vld [vmem:[%s871] sm:$0xff]
      %v873 = vld [vmem:[%s871 + $0x10] sm:$0xff]
      %v874 = vld [vmem:[%s871 + $0x20] sm:$0xff]
      %v875 = vld [vmem:[%s871 + $0x30] sm:$0xff]
      %v876 = vld [vmem:[%s871 + $0x40] sm:$0xff]
      %v877 = vld [vmem:[%s871 + $0x50] sm:$0xff]
      %v878 = vld [vmem:[%s871 + $0x60] sm:$0xff]
      %v879 = vld [vmem:[%s871 + $0x70] sm:$0xff]
      %v880 = vpack.c.bf16 %v873, %v872
      %v881 = vpack.c.bf16 %v875, %v874
      %v882 = vpack.c.bf16 %v877, %v876
      %v883 = vpack.c.bf16 %v879, %v878
      %s884 = scalar_lea.vmem %s4, 14
      %v885 = vld [vmem:[%s884] sm:$0x3]
      %v887 = vsel %vm417, %v880, 0
      %v890 = vsel %vm417, %v881, 0
      %v893 = vsel %vm417, %v882, 0
      %v896 = vsel %vm417, %v883, 0
      %v899 = vsel %vm430, %v885, 0
      %901 = vmatpush.bf16.msra.mxu0 0
      %902 = vmatpush.bf16.msra.mxu0 0
      %903 = vmatpush.bf16.msra.mxu0 0
      %904 = vmatpush.bf16.msra.mxu0 0
      %905 = vmatpush.bf16.msra.mxu0 0
      %906 = vmatpush.bf16.msra.mxu0 0
      %907 = vmatpush.bf16.msra.mxu0 0
      %908 = vmatpush.bf16.msra.mxu0 %v899
      %909 = vmatmul.bf16.gmra.mxu0 %v887
      %v910 = vpop.f32.mrf.mxu0
      %v911 = vadd.f32 0.0, %v910
      %v912 = vpop.f32.mrf.mxu0
      %v913 = vadd.f32 0.0, %v912
      %914 = vmatmul.bf16.gmra.mxu0 %v890
      %v915 = vpop.f32.mrf.mxu0
      %v916 = vadd.f32 0.0, %v915
      %v917 = vpop.f32.mrf.mxu0
      %v918 = vadd.f32 0.0, %v917
      %919 = vmatmul.bf16.gmra.mxu0 %v893
      %v920 = vpop.f32.mrf.mxu0
      %v921 = vadd.f32 0.0, %v920
      %v922 = vpop.f32.mrf.mxu0
      %v923 = vadd.f32 0.0, %v922
      %924 = vmatmul.bf16.gmra.mxu0 %v896
      %v925 = vpop.f32.mrf.mxu0
      %v926 = vadd.f32 0.0, %v925
      %v927 = vpop.f32.mrf.mxu0
      %v928 = vadd.f32 0.0, %v927
      %929 = vdwg.mxu0
      %v930 = vadd.f32 %v863, %v911
      %v931 = vadd.f32 %v864, %v913
      %v932 = vadd.f32 %v865, %v916
      %v933 = vadd.f32 %v866, %v918
      %v934 = vadd.f32 %v867, %v921
      %v935 = vadd.f32 %v868, %v923
      %v936 = vadd.f32 %v869, %v926
      %v937 = vadd.f32 %v870, %v928
      %v938 = vld [vmem:[%s804 + $0x1] sm:$0xff]
      %v939 = vld [vmem:[%s804 + $0x11] sm:$0xff]
      %v940 = vld [vmem:[%s804 + $0x21] sm:$0xff]
      %v941 = vld [vmem:[%s804 + $0x31] sm:$0xff]
      %v942 = vld [vmem:[%s804 + $0x41] sm:$0xff]
      %v943 = vld [vmem:[%s804 + $0x51] sm:$0xff]
      %v944 = vld [vmem:[%s804 + $0x61] sm:$0xff]
      %v945 = vld [vmem:[%s804 + $0x71] sm:$0xff]
      %v946 = vpack.c.bf16 %v939, %v938
      %v947 = vpack.c.bf16 %v941, %v940
      %v948 = vpack.c.bf16 %v943, %v942
      %v949 = vpack.c.bf16 %v945, %v944
      %s950 = scalar_lea.vmem %s4, 16
      %v951 = vld [vmem:[%s950] sm:$0x3]
      %v953 = vsel %vm417, %v946, 0
      %v956 = vsel %vm417, %v947, 0
      %v959 = vsel %vm417, %v948, 0
      %v962 = vsel %vm417, %v949, 0
      %v965 = vsel %vm430, %v951, 0
      %967 = vmatpush.bf16.msra.mxu0 0
      %968 = vmatpush.bf16.msra.mxu0 0
      %969 = vmatpush.bf16.msra.mxu0 0
      %970 = vmatpush.bf16.msra.mxu0 0
      %971 = vmatpush.bf16.msra.mxu0 0
      %972 = vmatpush.bf16.msra.mxu0 0
      %973 = vmatpush.bf16.msra.mxu0 0
      %974 = vmatpush.bf16.msra.mxu0 %v965
      %975 = vmatmul.bf16.gmra.mxu0 %v953
      %v976 = vpop.f32.mrf.mxu0
      %v977 = vadd.f32 0.0, %v976
      %v978 = vpop.f32.mrf.mxu0
      %v979 = vadd.f32 0.0, %v978
      %980 = vmatmul.bf16.gmra.mxu0 %v956
      %v981 = vpop.f32.mrf.mxu0
      %v982 = vadd.f32 0.0, %v981
      %v983 = vpop.f32.mrf.mxu0
      %v984 = vadd.f32 0.0, %v983
      %985 = vmatmul.bf16.gmra.mxu0 %v959
      %v986 = vpop.f32.mrf.mxu0
      %v987 = vadd.f32 0.0, %v986
      %v988 = vpop.f32.mrf.mxu0
      %v989 = vadd.f32 0.0, %v988
      %990 = vmatmul.bf16.gmra.mxu0 %v962
      %v991 = vpop.f32.mrf.mxu0
      %v992 = vadd.f32 0.0, %v991
      %v993 = vpop.f32.mrf.mxu0
      %v994 = vadd.f32 0.0, %v993
      %995 = vdwg.mxu0
      %v996 = vadd.f32 %v930, %v977
      %v997 = vadd.f32 %v931, %v979
      %v998 = vadd.f32 %v932, %v982
      %v999 = vadd.f32 %v933, %v984
      %v1000 = vadd.f32 %v934, %v987
      %v1001 = vadd.f32 %v935, %v989
      %v1002 = vadd.f32 %v936, %v992
      %v1003 = vadd.f32 %v937, %v994
      %vm1004 = vcmask 64512
      %1005 = vst.msk [vmem:[%s379] sm:$0xff] %vm1004, %v996
      %1006 = vst.msk [vmem:[%s379 + $0x8] sm:$0xff] %vm1004, %v997
      %1007 = vst.msk [vmem:[%s379 + $0x10] sm:$0xff] %vm1004, %v998
      %1008 = vst.msk [vmem:[%s379 + $0x18] sm:$0xff] %vm1004, %v999
      %1009 = vst.msk [vmem:[%s379 + $0x20] sm:$0xff] %vm1004, %v1000
      %1010 = vst.msk [vmem:[%s379 + $0x28] sm:$0xff] %vm1004, %v1001
      %1011 = vst.msk [vmem:[%s379 + $0x30] sm:$0xff] %vm1004, %v1002
      %1012 = vst.msk [vmem:[%s379 + $0x38] sm:$0xff] %vm1004, %v1003
      %1013 = vst.msk [vmem:[%s384] sm:$0xff] %vm1004, %v719
      %1014 = vst.msk [vmem:[%s384 + $0x8] sm:$0xff] %vm1004, %v721
      %1015 = vst.msk [vmem:[%s384 + $0x10] sm:$0xff] %vm1004, %v724
      %1016 = vst.msk [vmem:[%s384 + $0x18] sm:$0xff] %vm1004, %v726
      %1017 = vst.msk [vmem:[%s384 + $0x20] sm:$0xff] %vm1004, %v729
      %1018 = vst.msk [vmem:[%s384 + $0x28] sm:$0xff] %vm1004, %v731
      %1019 = vst.msk [vmem:[%s384 + $0x30] sm:$0xff] %vm1004, %v734
      %1020 = vst.msk [vmem:[%s384 + $0x38] sm:$0xff] %vm1004, %v736
      %v1021 = vsel %vm1004, %v996, 0.0
      %v1022 = vsel %vm1004, %v997, 0.0
      %v1023 = vadd.f32 %v1021, %v1022
      %v1024 = vsel %vm1004, %v998, 0.0
      %v1025 = vadd.f32 %v1023, %v1024
      %v1026 = vsel %vm1004, %v999, 0.0
      %v1027 = vadd.f32 %v1025, %v1026
      %v1028 = vsel %vm1004, %v1000, 0.0
      %v1029 = vadd.f32 %v1027, %v1028
      %v1030 = vsel %vm1004, %v1001, 0.0
      %v1031 = vadd.f32 %v1029, %v1030
      %v1032 = vsel %vm1004, %v1002, 0.0
      %v1033 = vadd.f32 %v1031, %v1032
      %v1034 = vsel %vm1004, %v1003, 0.0
      %v1035 = vadd.f32 %v1033, %v1034
      %v1036 = vrot.slane %v1035, 4
      %v1037 = vadd.f32 %v1035, %v1036
      %v1038 = vrot.slane %v1037, 2
      %v1039 = vadd.f32 %v1037, %v1038
      %v1040 = vrot.slane %v1039, 1
      %v1041 = vadd.f32 %v1039, %v1040
      %vm1042 = vcmask 57344
      %1043 = vst.msk [vmem:[%s388] sm:$0x1] %vm1042, %v1041
      %v1044 = vmul.f32 %v996, %v996
      %v1045 = vmul.f32 %v997, %v997
      %v1046 = vmul.f32 %v998, %v998
      %v1047 = vmul.f32 %v999, %v999
      %v1048 = vmul.f32 %v1000, %v1000
      %v1049 = vmul.f32 %v1001, %v1001
      %v1050 = vmul.f32 %v1002, %v1002
      %v1051 = vmul.f32 %v1003, %v1003
      %v1052 = vsel %vm1004, %v1044, 0.0
      %v1053 = vsel %vm1004, %v1045, 0.0
      %v1054 = vadd.f32 %v1052, %v1053
      %v1055 = vsel %vm1004, %v1046, 0.0
      %v1056 = vadd.f32 %v1054, %v1055
      %v1057 = vsel %vm1004, %v1047, 0.0
      %v1058 = vadd.f32 %v1056, %v1057
      %v1059 = vsel %vm1004, %v1048, 0.0
      %v1060 = vadd.f32 %v1058, %v1059
      %v1061 = vsel %vm1004, %v1049, 0.0
      %v1062 = vadd.f32 %v1060, %v1061
      %v1063 = vsel %vm1004, %v1050, 0.0
      %v1064 = vadd.f32 %v1062, %v1063
      %v1065 = vsel %vm1004, %v1051, 0.0
      %v1066 = vadd.f32 %v1064, %v1065
      %v1067 = vrot.slane %v1066, 4
      %v1068 = vadd.f32 %v1066, %v1067
      %v1069 = vrot.slane %v1068, 2
      %v1070 = vadd.f32 %v1068, %v1069
      %v1071 = vrot.slane %v1070, 1
      %v1072 = vadd.f32 %v1070, %v1071
      %1073 = vst.msk [vmem:[%s388 + $0x1] sm:$0x1] %vm1042, %v1072
      %v1074 = vsel %vm1004, %v719, 0.0
      %v1075 = vsel %vm1004, %v721, 0.0
      %v1076 = vadd.f32 %v1074, %v1075
      %v1077 = vsel %vm1004, %v724, 0.0
      %v1078 = vadd.f32 %v1076, %v1077
      %v1079 = vsel %vm1004, %v726, 0.0
      %v1080 = vadd.f32 %v1078, %v1079
      %v1081 = vsel %vm1004, %v729, 0.0
      %v1082 = vadd.f32 %v1080, %v1081
      %v1083 = vsel %vm1004, %v731, 0.0
      %v1084 = vadd.f32 %v1082, %v1083
      %v1085 = vsel %vm1004, %v734, 0.0
      %v1086 = vadd.f32 %v1084, %v1085
      %v1087 = vsel %vm1004, %v736, 0.0
      %v1088 = vadd.f32 %v1086, %v1087
      %v1089 = vrot.slane %v1088, 4
      %v1090 = vadd.f32 %v1088, %v1089
      %v1091 = vrot.slane %v1090, 2
      %v1092 = vadd.f32 %v1090, %v1091
      %v1093 = vrot.slane %v1092, 1
      %v1094 = vadd.f32 %v1092, %v1093
      %1095 = vst.msk [vmem:[%s388 + $0x2] sm:$0x1] %vm1042, %v1094
      %v1096 = vmul.f32 %v719, %v719
      %v1097 = vmul.f32 %v721, %v721
      %v1098 = vmul.f32 %v724, %v724
      %v1099 = vmul.f32 %v726, %v726
      %v1100 = vmul.f32 %v729, %v729
      %v1101 = vmul.f32 %v731, %v731
      %v1102 = vmul.f32 %v734, %v734
      %v1103 = vmul.f32 %v736, %v736
      %v1104 = vsel %vm1004, %v1096, 0.0
      %v1105 = vsel %vm1004, %v1097, 0.0
      %v1106 = vadd.f32 %v1104, %v1105
      %v1107 = vsel %vm1004, %v1098, 0.0
      %v1108 = vadd.f32 %v1106, %v1107
      %v1109 = vsel %vm1004, %v1099, 0.0
      %v1110 = vadd.f32 %v1108, %v1109
      %v1111 = vsel %vm1004, %v1100, 0.0
      %v1112 = vadd.f32 %v1110, %v1111
      %v1113 = vsel %vm1004, %v1101, 0.0
      %v1114 = vadd.f32 %v1112, %v1113
      %v1115 = vsel %vm1004, %v1102, 0.0
      %v1116 = vadd.f32 %v1114, %v1115
      %v1117 = vsel %vm1004, %v1103, 0.0
      %v1118 = vadd.f32 %v1116, %v1117
      %v1119 = vrot.slane %v1118, 4
      %v1120 = vadd.f32 %v1118, %v1119
      %v1121 = vrot.slane %v1120, 2
      %v1122 = vadd.f32 %v1120, %v1121
      %v1123 = vrot.slane %v1122, 1
      %v1124 = vadd.f32 %v1122, %v1123
      %1125 = vst.msk [vmem:[%s388 + $0x3] sm:$0x1] %vm1042, %v1124
      %vm1126 = vcmask 60416
      %1127 = vst.msk [vmem:[%s388 + $0x4] sm:$0xf] %vm1126, 0.0
      %p1128 = scmp.lt.s32.totalorder %s20, 1
      %s1129 = scalar_select %p1128, %s20, 1
      %s1130 = smul.addr %s1129, 8
      %s1131 = smul.addr %s1130, 8
      %s1132 = scalar_lea.vmem %s6, %s1131
      %p1133 = scmp.lt.s32.totalorder %s20, 1
      %s1134 = scalar_select %p1133, %s20, 1
      %s1135 = smul.addr %s1134, 8
      %s1136 = smul.addr %s1135, 8
      %s1137 = scalar_lea.vmem %s7, %s1136
      %p1138 = scmp.lt.s32.totalorder %s20, 1
      %s1139 = scalar_select %p1138, %s20, 1
      %s1140 = smul.addr %s1139, 8
      %s1141 = scalar_lea.vmem %s8, %s1140
      // Predicated region
      $region45: #{res_block_forward.3} parent=43 // pred_check
        %p1142 = pneg %p184
      $region46: #{res_block_forward.3} parent=43 // pred_check_branch
        %1144 = sbr.rel (%p1142) target = $region48
      $region47: #{res_block_forward.3} parent=43 // pred_region
        _
      $region48: #{res_block_forward.3} parent=43 // pred_fallthru
        _
      // Predicated region
      $region49: #{res_block_forward.3} parent=43 // pred_check
        %p1145 = pneg %p210
      $region50: #{res_block_forward.3} parent=43 // pred_check_branch
        %1147 = sbr.rel (%p1145) target = $region52
      $region51: #{res_block_forward.3} parent=43 // pred_region
        _
      $region52: #{res_block_forward.3} parent=43 // pred_fallthru
        _
      // Predicated region
      $region53: #{res_block_forward.3} parent=43 // pred_check
        %p1148 = pneg %p236
      $region54: #{res_block_forward.3} parent=43 // pred_check_branch
        %1150 = sbr.rel (%p1148) target = $region56
      $region55: #{res_block_forward.3} parent=43 // pred_region
        _
      $region56: #{res_block_forward.3} parent=43 // pred_fallthru
        _
    $region44: #{res_block_forward.3} parent=5 // pred_fallthru
      _
    %p1151 = scmp.le.s32.totalorder 2, %s15
    // Predicated region
    $region57: #{res_block_forward.3} parent=5 // pred_check
      %p1152 = pneg %p1151
    $region58: #{res_block_forward.3} parent=5 // pred_check_branch
      %1154 = sbr.rel (%p1152) target = $region60
    $region59: #{res_block_forward.3} parent=5 // pred_region
      %s1155 = ssub.s32 %s15, 2
      // Predicated region
      $region61: #{res_block_forward.3} parent=59 // pred_check
        %p1156 = pneg %p190
      $region62: #{res_block_forward.3} parent=59 // pred_check_branch
        %1158 = sbr.rel (%p1156) target = $region64
      $region63: #{res_block_forward.3} parent=59 // pred_region
        %p1159 = scmp.lt.s32.totalorder %s21, 1
        %s1160 = scalar_select %p1159, %s21, 1
        %s1161 = smul.addr %s1160, 8
        %s1162 = smul.addr %s1161, 8
        %s1163 = scalar_lea.vmem %s6, %s1162
      $region64: #{res_block_forward.3} parent=59 // pred_fallthru
        _
      // Predicated region
      $region65: #{res_block_forward.3} parent=59 // pred_check
        %p1164 = pneg %p216
      $region66: #{res_block_forward.3} parent=59 // pred_check_branch
        %1166 = sbr.rel (%p1164) target = $region68
      $region67: #{res_block_forward.3} parent=59 // pred_region
        %p1167 = scmp.lt.s32.totalorder %s21, 1
        %s1168 = scalar_select %p1167, %s21, 1
        %s1169 = smul.addr %s1168, 8
        %s1170 = smul.addr %s1169, 8
        %s1171 = scalar_lea.vmem %s7, %s1170
      $region68: #{res_block_forward.3} parent=59 // pred_fallthru
        _
      // Predicated region
      $region69: #{res_block_forward.3} parent=59 // pred_check
        %p1172 = pneg %p242
      $region70: #{res_block_forward.3} parent=59 // pred_check_branch
        %1174 = sbr.rel (%p1172) target = $region72
      $region71: #{res_block_forward.3} parent=59 // pred_region
        %p1175 = scmp.lt.s32.totalorder %s21, 1
        %s1176 = scalar_select %p1175, %s21, 1
        %s1177 = smul.addr %s1176, 8
        %s1178 = scalar_lea.vmem %s8, %s1177
      $region72: #{res_block_forward.3} parent=59 // pred_fallthru
        _
    $region60: #{res_block_forward.3} parent=5 // pred_fallthru
      _
  $region6: #{res_block_forward.3} parent=0 // loop_footer
    %s19 = sadd.s32 1, %s15
  $region7: #{res_block_forward.3} parent=0 // loop_footer_branch
    %14 = sbr.rel target = $region3
  $region8: #{res_block_forward.3} parent=0 // loop_exit
    _

</llo_original>
